<compile_context>
chip_gen: v7x
topology: tpu7x:2x2x1
jax: 0.10.0
libtpu: 0.0.40
codegen_flags: <defaults>
</compile_context>

<pallas_src>
import math

import jax
import jax.numpy as jnp
from jax import lax
from jax.experimental import pallas as pl
from jax.experimental.pallas import tpu as pltpu

# ----------------------------- config (from VIT.__init__) ---------------------
IN_CH = 1
EMB_DIM = 64
PATCH = 14
NUM_LAYERS = 2
HIDE_DIM = 48
N_Q_HEADS = 2
N_KV_HEADS = 1
MAX_LEN = 5
NUM_CLASSES = 10
HEAD_DIM = EMB_DIM // N_Q_HEADS          # 32
KV_DIM = N_KV_HEADS * HEAD_DIM           # 32
QKV_DIM = EMB_DIM + 2 * KV_DIM           # 128 == exactly one lane width
K_RAW = IN_CH * PATCH * PATCH            # 196
K_PAD = 256                              # patch-embed contraction padded to 2*128
OUT_PAD = 128                            # logits padded to full lane width
LN_EPS = 1e-5

LAYER_PARAM_ORDER = ("ln1_g", "ln1_b", "wqkv", "bqkv", "wo", "bo",
                     "ln2_g", "ln2_b", "w1", "b1", "w2", "b2")
N_LAYER_PARAMS = NUM_LAYERS * len(LAYER_PARAM_ORDER)


# ----------------------------- fused Pallas kernel -----------------------------
def _make_vit_kernel(B, S):
    """Build the fully-fused forward kernel for static batch B, seq len S."""
    P = S - 1
    BS = B * S
    scale = 1.0 / math.sqrt(HEAD_DIM)

    def layernorm(z, g_ref, b_ref):
        mu = jnp.mean(z, axis=-1, keepdims=True)
        var = jnp.mean((z - mu) ** 2, axis=-1, keepdims=True)
        return (z - mu) * lax.rsqrt(var + LN_EPS) * g_ref[...] + b_ref[...]

    def kernel(*refs):
        patches_ref, wemb_ref, cls_ref, pos_ref = refs[:4]
        layer_refs = refs[4:4 + N_LAYER_PARAMS]
        outw_ref = refs[4 + N_LAYER_PARAMS]          # (64, 128) padded classifier
        o_ref = refs[5 + N_LAYER_PARAMS]             # (B, 128) padded logits
        x_ref = refs[6 + N_LAYER_PARAMS]             # VMEM scratch (B*S, 64)
        tmp_ref = refs[7 + N_LAYER_PARAMS]           # VMEM scratch (B*S, 128) for qkv

        # ---- patch embedding (Conv2d lowered to MXU matmul) + cls + pos-emb ----
        for b in range(B):                           # static unroll, B is tiny
            x_ref[b * S:b * S + 1, :] = cls_ref[...] + pos_ref[0:1, :]
            emb_b = jnp.dot(patches_ref[b * P:(b + 1) * P, :], wemb_ref[...],
                            preferred_element_type=jnp.float32)           # (P, 64)
            x_ref[b * S + 1:(b + 1) * S, :] = emb_b + pos_ref[1:S, :]

        # ---- transformer encoder layers (pre-LN, GQA, GELU FFN) ----
        for l in range(NUM_LAYERS):
            p = dict(zip(LAYER_PARAM_ORDER,
                         layer_refs[l * len(LAYER_PARAM_ORDER):
                                    (l + 1) * len(LAYER_PARAM_ORDER)]))

            # --- attention block: one batched (B*S,64)@(64,128) QKV projection ---
            x = x_ref[...]                                                # (BS, 64)
            h = layernorm(x, p["ln1_g"], p["ln1_b"])
            tmp_ref[...] = (jnp.dot(h, p["wqkv"][...],
                                    preferred_element_type=jnp.float32)
                            + p["bqkv"][...])                             # (BS, 128)

            for b in range(B):
                r0, r1 = b * S, (b + 1) * S
                kb = tmp_ref[r0:r1, EMB_DIM:EMB_DIM + KV_DIM]             # (S, 32)
                vb = tmp_ref[r0:r1, EMB_DIM + KV_DIM:QKV_DIM]             # (S, 32)
                attn_b = None
                for hd in range(N_Q_HEADS):           # GQA: both q heads share KV
                    qb = tmp_ref[r0:r1, hd * HEAD_DIM:(hd + 1) * HEAD_DIM]
                    s = lax.dot_general(qb, kb, (((1,), (1,)), ((), ())),
                                        preferred_element_type=jnp.float32) * scale
                    s = s - jnp.max(s, axis=-1, keepdims=True)
                    pr = jnp.exp(s)
                    pr = pr / jnp.sum(pr, axis=-1, keepdims=True)
                    oh = jnp.dot(pr, vb, preferred_element_type=jnp.float32)   # (S, 32)
                    # fold output projection into the head loop (no concat)
                    contrib = jnp.dot(
                        oh, p["wo"][hd * HEAD_DIM:(hd + 1) * HEAD_DIM, :],
                        preferred_element_type=jnp.float32)               # (S, 64)
                    attn_b = contrib if attn_b is None else attn_b + contrib
                # residual add, in place on the sequence scratch
                x_ref[r0:r1, :] = x_ref[r0:r1, :] + attn_b + p["bo"][...]

            # --- feed-forward block, batch-flattened (B*S, D) ---
            x = x_ref[...]
            h2 = layernorm(x, p["ln2_g"], p["ln2_b"])
            f = jnp.dot(h2, p["w1"][...],
                        preferred_element_type=jnp.float32) + p["b1"][...]
            f = jax.nn.gelu(f, approximate=True)
            f = jnp.dot(f, p["w2"][...],
                        preferred_element_type=jnp.float32) + p["b2"][...]
            x_ref[...] = x + f

        # ---- cls-token readout + classifier (lane-dense 128-wide output) ----
        for b in range(B):
            o_ref[b:b + 1, :] = jnp.dot(x_ref[b * S:b * S + 1, :], outw_ref[...],
                                        preferred_element_type=jnp.float32)

    return kernel


# ----------------------------- parameters -------------------------------------
def init_params(key):
    ks = iter(jax.random.split(key, 64))
    n = lambda shape, s=0.02: s * jax.random.normal(next(ks), shape, dtype=jnp.float32)

    # Conv2d(1, 64, 14, 14, bias=False): weight (64, 1, 14, 14) -> (196, 64), pad K to 256.
    conv_w = n((EMB_DIM, IN_CH, PATCH, PATCH), 0.05)
    w_emb = conv_w.reshape(EMB_DIM, K_RAW).T
    w_emb_pad = jnp.zeros((K_PAD, EMB_DIM), jnp.float32).at[:K_RAW].set(w_emb)

    # Linear(64, 10, bias=False) stored (in, out), padded to 128 output lanes.
    out_w = n((EMB_DIM, NUM_CLASSES))
    out_w_pad = jnp.zeros((EMB_DIM, OUT_PAD), jnp.float32).at[:, :NUM_CLASSES].set(out_w)

    params = {
        "w_emb_pad": w_emb_pad,
        "cls_token": jax.random.normal(next(ks), (1, EMB_DIM), dtype=jnp.float32),
        "pos_emb": n((MAX_LEN, EMB_DIM)),
        "out_w_pad": out_w_pad,
        "layers": [],
    }
    for _ in range(NUM_LAYERS):
        wq = n((EMB_DIM, N_Q_HEADS * HEAD_DIM))
        wk = n((EMB_DIM, KV_DIM))
        wv = n((EMB_DIM, KV_DIM))
        layer = {
            "ln1_g": jnp.ones((1, EMB_DIM), jnp.float32),
            "ln1_b": jnp.zeros((1, EMB_DIM), jnp.float32),
            "wqkv": jnp.concatenate([wq, wk, wv], axis=1),   # (64, 128) fused projection
            "bqkv": jnp.zeros((1, QKV_DIM), jnp.float32),
            "wo": n((N_Q_HEADS * HEAD_DIM, EMB_DIM)),
            "bo": jnp.zeros((1, EMB_DIM), jnp.float32),
            "ln2_g": jnp.ones((1, EMB_DIM), jnp.float32),
            "ln2_b": jnp.zeros((1, EMB_DIM), jnp.float32),
            "w1": n((EMB_DIM, HIDE_DIM)),
            "b1": jnp.zeros((1, HIDE_DIM), jnp.float32),
            "w2": n((HIDE_DIM, EMB_DIM)),
            "b2": jnp.zeros((1, EMB_DIM), jnp.float32),
        }
        params["layers"].append(layer)
    return params


# ----------------------------- forward -----------------------------------------
def vit_forward(x, params):
    B, C, H, W = x.shape                      # NCHW, C == 1
    nh, nw = H // PATCH, W // PATCH
    P = nh * nw                               # 4 patches for 28x28
    S = P + 1
    assert S == MAX_LEN and C == IN_CH

    # Patch extraction (wrapper glue): flatten each 14x14 patch in (c, kh, kw)
    # order to match nn.Conv2d weight layout, then pad K 196 -> 256 (lane aligned).
    patches = x.reshape(B, C, nh, PATCH, nw, PATCH)
    patches = patches.transpose(0, 2, 4, 1, 3, 5).reshape(B * P, K_RAW)
    patches = jnp.pad(patches, ((0, 0), (0, K_PAD - K_RAW)))

    flat_layer_params = [params["layers"][l][k]
                         for l in range(NUM_LAYERS) for k in LAYER_PARAM_ORDER]

    # Single fused kernel: all weights + activations (<1 MiB) live in VMEM.
    # NOTE(v7x): for large batches a "parallel" batch grid axis would split work
    # across the two TensorCores; at B=2 a single fused launch is optimal.
    logits_pad = pl.pallas_call(
        _make_vit_kernel(B, S),
        out_shape=jax.ShapeDtypeStruct((B, OUT_PAD), jnp.float32),
        scratch_shapes=[pltpu.VMEM((B * S, EMB_DIM), jnp.float32),   # sequence buffer
                        pltpu.VMEM((B * S, QKV_DIM), jnp.float32)],  # fused qkv buffer
    )(patches, params["w_emb_pad"], params["cls_token"], params["pos_emb"],
      *flat_layer_params, params["out_w_pad"])

    return logits_pad[:, :NUM_CLASSES]


# ----------------------------- main --------------------------------------------
if __name__ == "__main__":
    key = jax.random.PRNGKey(0)
    x = jax.random.normal(key, (2, IN_CH, 28, 28), dtype=jnp.float32)  # NCHW

    params = init_params(jax.random.PRNGKey(42))

    fwd = jax.jit(vit_forward)
    logits = fwd(x, params)
    logits = jax.block_until_ready(logits)
    assert logits.shape == (2, NUM_CLASSES), logits.shape
    assert bool(jnp.all(jnp.isfinite(logits)))
    print("KERNEL_OK")
</pallas_src>

<mosaic_0001>
module attributes {stable_mosaic.version = 11 : i64} {
  func.func @kernel(%arg0: memref<8x256xf32, #tpu.memory_space<vmem>>, %arg1: memref<256x64xf32, #tpu.memory_space<vmem>>, %arg2: memref<1x64xf32, #tpu.memory_space<vmem>>, %arg3: memref<5x64xf32, #tpu.memory_space<vmem>>, %arg4: memref<1x64xf32, #tpu.memory_space<vmem>>, %arg5: memref<1x64xf32, #tpu.memory_space<vmem>>, %arg6: memref<64x128xf32, #tpu.memory_space<vmem>>, %arg7: memref<1x128xf32, #tpu.memory_space<vmem>>, %arg8: memref<64x64xf32, #tpu.memory_space<vmem>>, %arg9: memref<1x64xf32, #tpu.memory_space<vmem>>, %arg10: memref<1x64xf32, #tpu.memory_space<vmem>>, %arg11: memref<1x64xf32, #tpu.memory_space<vmem>>, %arg12: memref<64x48xf32, #tpu.memory_space<vmem>>, %arg13: memref<1x48xf32, #tpu.memory_space<vmem>>, %arg14: memref<48x64xf32, #tpu.memory_space<vmem>>, %arg15: memref<1x64xf32, #tpu.memory_space<vmem>>, %arg16: memref<1x64xf32, #tpu.memory_space<vmem>>, %arg17: memref<1x64xf32, #tpu.memory_space<vmem>>, %arg18: memref<64x128xf32, #tpu.memory_space<vmem>>, %arg19: memref<1x128xf32, #tpu.memory_space<vmem>>, %arg20: memref<64x64xf32, #tpu.memory_space<vmem>>, %arg21: memref<1x64xf32, #tpu.memory_space<vmem>>, %arg22: memref<1x64xf32, #tpu.memory_space<vmem>>, %arg23: memref<1x64xf32, #tpu.memory_space<vmem>>, %arg24: memref<64x48xf32, #tpu.memory_space<vmem>>, %arg25: memref<1x48xf32, #tpu.memory_space<vmem>>, %arg26: memref<48x64xf32, #tpu.memory_space<vmem>>, %arg27: memref<1x64xf32, #tpu.memory_space<vmem>>, %arg28: memref<64x128xf32, #tpu.memory_space<vmem>>, %arg29: memref<2x128xf32, #tpu.memory_space<vmem>>, %arg30: memref<10x64xf32, #tpu.memory_space<vmem>>, %arg31: memref<10x128xf32, #tpu.memory_space<vmem>>) attributes {dimension_semantics = [], scalar_prefetch = 0 : i64, scratch_operands = 2 : i64, tpu.core_type = #tpu.core_type<tc>} {
    %c0 = arith.constant 0 : index
    %c0_0 = arith.constant 0 : index
    %0 = vector.load %arg2[%c0, %c0_0] : memref<1x64xf32, #tpu.memory_space<vmem>>, vector<1x64xf32>
    %c0_1 = arith.constant 0 : index
    %c0_2 = arith.constant 0 : index
    %1 = vector.load %arg3[%c0_1, %c0_2] : memref<5x64xf32, #tpu.memory_space<vmem>>, vector<1x64xf32>
    %2 = arith.addf %0, %1 : vector<1x64xf32>
    %c0_3 = arith.constant 0 : index
    %c0_4 = arith.constant 0 : index
    %3 = vector.load %arg30[%c0_3, %c0_4] : memref<10x64xf32, #tpu.memory_space<vmem>>, vector<1x64xf32>
    tpu.vector_store %arg30[%c0_3, %c0_4], %2 {strides = array<i32>} : memref<10x64xf32, #tpu.memory_space<vmem>>, vector<1x64xf32>,
    %c0_5 = arith.constant 0 : index
    %c0_6 = arith.constant 0 : index
    %4 = vector.load %arg0[%c0_5, %c0_6] : memref<8x256xf32, #tpu.memory_space<vmem>>, vector<4x256xf32>
    %c0_7 = arith.constant 0 : index
    %c0_8 = arith.constant 0 : index
    %5 = vector.load %arg1[%c0_7, %c0_8] : memref<256x64xf32, #tpu.memory_space<vmem>>, vector<256x64xf32>
    %cst = arith.constant dense<0.000000e+00> : vector<4x64xf32>
    %6 = tpu.matmul %4, %5, %cst {dimension_numbers = #tpu.dot_dimension_numbers<[1], [0], [0], [1], [0, 0, 1, 1], [], []>} : vector<4x256xf32>, vector<256x64xf32>, vector<4x64xf32> -> vector<4x64xf32>
    %c1 = arith.constant 1 : index
    %c0_9 = arith.constant 0 : index
    %7 = vector.load %arg3[%c1, %c0_9] : memref<5x64xf32, #tpu.memory_space<vmem>>, vector<4x64xf32>
    %8 = arith.addf %6, %7 : vector<4x64xf32>
    %c1_10 = arith.constant 1 : index
    %c0_11 = arith.constant 0 : index
    %9 = vector.load %arg30[%c1_10, %c0_11] : memref<10x64xf32, #tpu.memory_space<vmem>>, vector<4x64xf32>
    tpu.vector_store %arg30[%c1_10, %c0_11], %8 {strides = array<i32>} : memref<10x64xf32, #tpu.memory_space<vmem>>, vector<4x64xf32>,
    %c0_12 = arith.constant 0 : index
    %c0_13 = arith.constant 0 : index
    %10 = vector.load %arg2[%c0_12, %c0_13] : memref<1x64xf32, #tpu.memory_space<vmem>>, vector<1x64xf32>
    %c0_14 = arith.constant 0 : index
    %c0_15 = arith.constant 0 : index
    %11 = vector.load %arg3[%c0_14, %c0_15] : memref<5x64xf32, #tpu.memory_space<vmem>>, vector<1x64xf32>
    %12 = arith.addf %10, %11 : vector<1x64xf32>
    %c5 = arith.constant 5 : index
    %c0_16 = arith.constant 0 : index
    %13 = vector.load %arg30[%c5, %c0_16] : memref<10x64xf32, #tpu.memory_space<vmem>>, vector<1x64xf32>
    tpu.vector_store %arg30[%c5, %c0_16], %12 {strides = array<i32>} : memref<10x64xf32, #tpu.memory_space<vmem>>, vector<1x64xf32>,
    %c4 = arith.constant 4 : index
    %c0_17 = arith.constant 0 : index
    %14 = vector.load %arg0[%c4, %c0_17] : memref<8x256xf32, #tpu.memory_space<vmem>>, vector<4x256xf32>
    %c0_18 = arith.constant 0 : index
    %c0_19 = arith.constant 0 : index
    %15 = vector.load %arg1[%c0_18, %c0_19] : memref<256x64xf32, #tpu.memory_space<vmem>>, vector<256x64xf32>
    %cst_20 = arith.constant dense<0.000000e+00> : vector<4x64xf32>
    %16 = tpu.matmul %14, %15, %cst_20 {dimension_numbers = #tpu.dot_dimension_numbers<[1], [0], [0], [1], [0, 0, 1, 1], [], []>} : vector<4x256xf32>, vector<256x64xf32>, vector<4x64xf32> -> vector<4x64xf32>
    %c1_21 = arith.constant 1 : index
    %c0_22 = arith.constant 0 : index
    %17 = vector.load %arg3[%c1_21, %c0_22] : memref<5x64xf32, #tpu.memory_space<vmem>>, vector<4x64xf32>
    %18 = arith.addf %16, %17 : vector<4x64xf32>
    %c6 = arith.constant 6 : index
    %c0_23 = arith.constant 0 : index
    %19 = vector.load %arg30[%c6, %c0_23] : memref<10x64xf32, #tpu.memory_space<vmem>>, vector<4x64xf32>
    tpu.vector_store %arg30[%c6, %c0_23], %18 {strides = array<i32>} : memref<10x64xf32, #tpu.memory_space<vmem>>, vector<4x64xf32>,
    %c0_24 = arith.constant 0 : index
    %c0_25 = arith.constant 0 : index
    %20 = vector.load %arg30[%c0_24, %c0_25] : memref<10x64xf32, #tpu.memory_space<vmem>>, vector<10x64xf32>
    %cst_26 = arith.constant dense<0.000000e+00> : vector<10xf32>
    %21 = vector.multi_reduction <add>, %20, %cst_26 [1] : vector<10x64xf32> to vector<10xf32>
    %22 = vector.shape_cast %21 : vector<10xf32> to vector<10x1xf32>
    %cst_27 = arith.constant 6.400000e+01 : f32
    %23 = vector.broadcast %cst_27 : f32 to vector<10x1xf32>
    %24 = arith.divf %22, %23 : vector<10x1xf32>
    %25 = vector.broadcast %24 : vector<10x1xf32> to vector<10x64xf32>
    %26 = arith.subf %20, %25 : vector<10x64xf32>
    %27 = arith.mulf %26, %26 : vector<10x64xf32>
    %cst_28 = arith.constant dense<0.000000e+00> : vector<10xf32>
    %28 = vector.multi_reduction <add>, %27, %cst_28 [1] : vector<10x64xf32> to vector<10xf32>
    %29 = vector.shape_cast %28 : vector<10xf32> to vector<10x1xf32>
    %cst_29 = arith.constant 6.400000e+01 : f32
    %30 = vector.broadcast %cst_29 : f32 to vector<10x1xf32>
    %31 = arith.divf %29, %30 : vector<10x1xf32>
    %32 = vector.broadcast %24 : vector<10x1xf32> to vector<10x64xf32>
    %33 = arith.subf %20, %32 : vector<10x64xf32>
    %cst_30 = arith.constant 9.99999974E-6 : f32
    %34 = vector.broadcast %cst_30 : f32 to vector<10x1xf32>
    %35 = arith.addf %31, %34 : vector<10x1xf32>
    %36 = math.rsqrt %35 : vector<10x1xf32>
    %37 = vector.broadcast %36 : vector<10x1xf32> to vector<10x64xf32>
    %38 = arith.mulf %33, %37 : vector<10x64xf32>
    %c0_31 = arith.constant 0 : index
    %c0_32 = arith.constant 0 : index
    %39 = vector.load %arg4[%c0_31, %c0_32] : memref<1x64xf32, #tpu.memory_space<vmem>>, vector<1x64xf32>
    %40 = vector.broadcast %39 : vector<1x64xf32> to vector<10x64xf32>
    %41 = arith.mulf %38, %40 : vector<10x64xf32>
    %c0_33 = arith.constant 0 : index
    %c0_34 = arith.constant 0 : index
    %42 = vector.load %arg5[%c0_33, %c0_34] : memref<1x64xf32, #tpu.memory_space<vmem>>, vector<1x64xf32>
    %43 = vector.broadcast %42 : vector<1x64xf32> to vector<10x64xf32>
    %44 = arith.addf %41, %43 : vector<10x64xf32>
    %c0_35 = arith.constant 0 : index
    %c0_36 = arith.constant 0 : index
    %45 = vector.load %arg6[%c0_35, %c0_36] : memref<64x128xf32, #tpu.memory_space<vmem>>, vector<64x128xf32>
    %cst_37 = arith.constant dense<0.000000e+00> : vector<10x128xf32>
    %46 = tpu.matmul %44, %45, %cst_37 {dimension_numbers = #tpu.dot_dimension_numbers<[1], [0], [0], [1], [0, 0, 1, 1], [], []>} : vector<10x64xf32>, vector<64x128xf32>, vector<10x128xf32> -> vector<10x128xf32>
    %c0_38 = arith.constant 0 : index
    %c0_39 = arith.constant 0 : index
    %47 = vector.load %arg7[%c0_38, %c0_39] : memref<1x128xf32, #tpu.memory_space<vmem>>, vector<1x128xf32>
    %48 = vector.broadcast %47 : vector<1x128xf32> to vector<10x128xf32>
    %49 = arith.addf %46, %48 : vector<10x128xf32>
    %c0_40 = arith.constant 0 : index
    %c0_41 = arith.constant 0 : index
    %50 = vector.load %arg31[%c0_40, %c0_41] : memref<10x128xf32, #tpu.memory_space<vmem>>, vector<10x128xf32>
    tpu.vector_store %arg31[%c0_40, %c0_41], %49 {strides = array<i32>} : memref<10x128xf32, #tpu.memory_space<vmem>>, vector<10x128xf32>,
    %c0_42 = arith.constant 0 : index
    %c64 = arith.constant 64 : index
    %51 = vector.load %arg31[%c0_42, %c64] : memref<10x128xf32, #tpu.memory_space<vmem>>, vector<5x32xf32>
    %c0_43 = arith.constant 0 : index
    %c96 = arith.constant 96 : index
    %52 = vector.load %arg31[%c0_43, %c96] : memref<10x128xf32, #tpu.memory_space<vmem>>, vector<5x32xf32>
    %c0_44 = arith.constant 0 : index
    %c0_45 = arith.constant 0 : index
    %53 = vector.load %arg31[%c0_44, %c0_45] : memref<10x128xf32, #tpu.memory_space<vmem>>, vector<5x32xf32>
    %cst_46 = arith.constant dense<0.000000e+00> : vector<5x5xf32>
    %54 = tpu.matmul %53, %51, %cst_46 {dimension_numbers = #tpu.dot_dimension_numbers<[1], [1], [0], [0], [0, 0, 1, 0], [], []>} : vector<5x32xf32>, vector<5x32xf32>, vector<5x5xf32> -> vector<5x5xf32>
    %cst_47 = arith.constant 0.176776692 : f32
    %55 = vector.broadcast %cst_47 : f32 to vector<5x5xf32>
    %56 = arith.mulf %54, %55 : vector<5x5xf32>
    %cst_48 = arith.constant dense<0xFF800000> : vector<5xf32>
    %57 = vector.multi_reduction <maximumf>, %56, %cst_48 [1] : vector<5x5xf32> to vector<5xf32>
    %58 = vector.shape_cast %57 : vector<5xf32> to vector<5x1xf32>
    %59 = vector.broadcast %58 : vector<5x1xf32> to vector<5x5xf32>
    %60 = arith.subf %56, %59 : vector<5x5xf32>
    %61 = math.exp %60 : vector<5x5xf32>
    %cst_49 = arith.constant dense<0.000000e+00> : vector<5xf32>
    %62 = vector.multi_reduction <add>, %61, %cst_49 [1] : vector<5x5xf32> to vector<5xf32>
    %63 = vector.shape_cast %62 : vector<5xf32> to vector<5x1xf32>
    %64 = vector.broadcast %63 : vector<5x1xf32> to vector<5x5xf32>
    %65 = arith.divf %61, %64 : vector<5x5xf32>
    %cst_50 = arith.constant dense<0.000000e+00> : vector<5x32xf32>
    %66 = tpu.matmul %65, %52, %cst_50 {dimension_numbers = #tpu.dot_dimension_numbers<[1], [0], [0], [1], [0, 0, 1, 1], [], []>} : vector<5x5xf32>, vector<5x32xf32>, vector<5x32xf32> -> vector<5x32xf32>
    %c0_51 = arith.constant 0 : index
    %c0_52 = arith.constant 0 : index
    %67 = vector.load %arg8[%c0_51, %c0_52] : memref<64x64xf32, #tpu.memory_space<vmem>>, vector<32x64xf32>
    %cst_53 = arith.constant dense<0.000000e+00> : vector<5x64xf32>
    %68 = tpu.matmul %66, %67, %cst_53 {dimension_numbers = #tpu.dot_dimension_numbers<[1], [0], [0], [1], [0, 0, 1, 1], [], []>} : vector<5x32xf32>, vector<32x64xf32>, vector<5x64xf32> -> vector<5x64xf32>
    %c0_54 = arith.constant 0 : index
    %c32 = arith.constant 32 : index
    %69 = vector.load %arg31[%c0_54, %c32] : memref<10x128xf32, #tpu.memory_space<vmem>>, vector<5x32xf32>
    %cst_55 = arith.constant dense<0.000000e+00> : vector<5x5xf32>
    %70 = tpu.matmul %69, %51, %cst_55 {dimension_numbers = #tpu.dot_dimension_numbers<[1], [1], [0], [0], [0, 0, 1, 0], [], []>} : vector<5x32xf32>, vector<5x32xf32>, vector<5x5xf32> -> vector<5x5xf32>
    %cst_56 = arith.constant 0.176776692 : f32
    %71 = vector.broadcast %cst_56 : f32 to vector<5x5xf32>
    %72 = arith.mulf %70, %71 : vector<5x5xf32>
    %cst_57 = arith.constant dense<0xFF800000> : vector<5xf32>
    %73 = vector.multi_reduction <maximumf>, %72, %cst_57 [1] : vector<5x5xf32> to vector<5xf32>
    %74 = vector.shape_cast %73 : vector<5xf32> to vector<5x1xf32>
    %75 = vector.broadcast %74 : vector<5x1xf32> to vector<5x5xf32>
    %76 = arith.subf %72, %75 : vector<5x5xf32>
    %77 = math.exp %76 : vector<5x5xf32>
    %cst_58 = arith.constant dense<0.000000e+00> : vector<5xf32>
    %78 = vector.multi_reduction <add>, %77, %cst_58 [1] : vector<5x5xf32> to vector<5xf32>
    %79 = vector.shape_cast %78 : vector<5xf32> to vector<5x1xf32>
    %80 = vector.broadcast %79 : vector<5x1xf32> to vector<5x5xf32>
    %81 = arith.divf %77, %80 : vector<5x5xf32>
    %cst_59 = arith.constant dense<0.000000e+00> : vector<5x32xf32>
    %82 = tpu.matmul %81, %52, %cst_59 {dimension_numbers = #tpu.dot_dimension_numbers<[1], [0], [0], [1], [0, 0, 1, 1], [], []>} : vector<5x5xf32>, vector<5x32xf32>, vector<5x32xf32> -> vector<5x32xf32>
    %c32_60 = arith.constant 32 : index
    %c0_61 = arith.constant 0 : index
    %83 = vector.load %arg8[%c32_60, %c0_61] : memref<64x64xf32, #tpu.memory_space<vmem>>, vector<32x64xf32>
    %cst_62 = arith.constant dense<0.000000e+00> : vector<5x64xf32>
    %84 = tpu.matmul %82, %83, %cst_62 {dimension_numbers = #tpu.dot_dimension_numbers<[1], [0], [0], [1], [0, 0, 1, 1], [], []>} : vector<5x32xf32>, vector<32x64xf32>, vector<5x64xf32> -> vector<5x64xf32>
    %85 = arith.addf %68, %84 : vector<5x64xf32>
    %c0_63 = arith.constant 0 : index
    %c0_64 = arith.constant 0 : index
    %86 = vector.load %arg30[%c0_63, %c0_64] : memref<10x64xf32, #tpu.memory_space<vmem>>, vector<5x64xf32>
    %87 = arith.addf %86, %85 : vector<5x64xf32>
    %c0_65 = arith.constant 0 : index
    %c0_66 = arith.constant 0 : index
    %88 = vector.load %arg9[%c0_65, %c0_66] : memref<1x64xf32, #tpu.memory_space<vmem>>, vector<1x64xf32>
    %89 = vector.broadcast %88 : vector<1x64xf32> to vector<5x64xf32>
    %90 = arith.addf %87, %89 : vector<5x64xf32>
    %c0_67 = arith.constant 0 : index
    %c0_68 = arith.constant 0 : index
    %91 = vector.load %arg30[%c0_67, %c0_68] : memref<10x64xf32, #tpu.memory_space<vmem>>, vector<5x64xf32>
    tpu.vector_store %arg30[%c0_67, %c0_68], %90 {strides = array<i32>} : memref<10x64xf32, #tpu.memory_space<vmem>>, vector<5x64xf32>,
    %c5_69 = arith.constant 5 : index
    %c64_70 = arith.constant 64 : index
    %92 = vector.load %arg31[%c5_69, %c64_70] : memref<10x128xf32, #tpu.memory_space<vmem>>, vector<5x32xf32>
    %c5_71 = arith.constant 5 : index
    %c96_72 = arith.constant 96 : index
    %93 = vector.load %arg31[%c5_71, %c96_72] : memref<10x128xf32, #tpu.memory_space<vmem>>, vector<5x32xf32>
    %c5_73 = arith.constant 5 : index
    %c0_74 = arith.constant 0 : index
    %94 = vector.load %arg31[%c5_73, %c0_74] : memref<10x128xf32, #tpu.memory_space<vmem>>, vector<5x32xf32>
    %cst_75 = arith.constant dense<0.000000e+00> : vector<5x5xf32>
    %95 = tpu.matmul %94, %92, %cst_75 {dimension_numbers = #tpu.dot_dimension_numbers<[1], [1], [0], [0], [0, 0, 1, 0], [], []>} : vector<5x32xf32>, vector<5x32xf32>, vector<5x5xf32> -> vector<5x5xf32>
    %cst_76 = arith.constant 0.176776692 : f32
    %96 = vector.broadcast %cst_76 : f32 to vector<5x5xf32>
    %97 = arith.mulf %95, %96 : vector<5x5xf32>
    %cst_77 = arith.constant dense<0xFF800000> : vector<5xf32>
    %98 = vector.multi_reduction <maximumf>, %97, %cst_77 [1] : vector<5x5xf32> to vector<5xf32>
    %99 = vector.shape_cast %98 : vector<5xf32> to vector<5x1xf32>
    %100 = vector.broadcast %99 : vector<5x1xf32> to vector<5x5xf32>
    %101 = arith.subf %97, %100 : vector<5x5xf32>
    %102 = math.exp %101 : vector<5x5xf32>
    %cst_78 = arith.constant dense<0.000000e+00> : vector<5xf32>
    %103 = vector.multi_reduction <add>, %102, %cst_78 [1] : vector<5x5xf32> to vector<5xf32>
    %104 = vector.shape_cast %103 : vector<5xf32> to vector<5x1xf32>
    %105 = vector.broadcast %104 : vector<5x1xf32> to vector<5x5xf32>
    %106 = arith.divf %102, %105 : vector<5x5xf32>
    %cst_79 = arith.constant dense<0.000000e+00> : vector<5x32xf32>
    %107 = tpu.matmul %106, %93, %cst_79 {dimension_numbers = #tpu.dot_dimension_numbers<[1], [0], [0], [1], [0, 0, 1, 1], [], []>} : vector<5x5xf32>, vector<5x32xf32>, vector<5x32xf32> -> vector<5x32xf32>
    %c0_80 = arith.constant 0 : index
    %c0_81 = arith.constant 0 : index
    %108 = vector.load %arg8[%c0_80, %c0_81] : memref<64x64xf32, #tpu.memory_space<vmem>>, vector<32x64xf32>
    %cst_82 = arith.constant dense<0.000000e+00> : vector<5x64xf32>
    %109 = tpu.matmul %107, %108, %cst_82 {dimension_numbers = #tpu.dot_dimension_numbers<[1], [0], [0], [1], [0, 0, 1, 1], [], []>} : vector<5x32xf32>, vector<32x64xf32>, vector<5x64xf32> -> vector<5x64xf32>
    %c5_83 = arith.constant 5 : index
    %c32_84 = arith.constant 32 : index
    %110 = vector.load %arg31[%c5_83, %c32_84] : memref<10x128xf32, #tpu.memory_space<vmem>>, vector<5x32xf32>
    %cst_85 = arith.constant dense<0.000000e+00> : vector<5x5xf32>
    %111 = tpu.matmul %110, %92, %cst_85 {dimension_numbers = #tpu.dot_dimension_numbers<[1], [1], [0], [0], [0, 0, 1, 0], [], []>} : vector<5x32xf32>, vector<5x32xf32>, vector<5x5xf32> -> vector<5x5xf32>
    %cst_86 = arith.constant 0.176776692 : f32
    %112 = vector.broadcast %cst_86 : f32 to vector<5x5xf32>
    %113 = arith.mulf %111, %112 : vector<5x5xf32>
    %cst_87 = arith.constant dense<0xFF800000> : vector<5xf32>
    %114 = vector.multi_reduction <maximumf>, %113, %cst_87 [1] : vector<5x5xf32> to vector<5xf32>
    %115 = vector.shape_cast %114 : vector<5xf32> to vector<5x1xf32>
    %116 = vector.broadcast %115 : vector<5x1xf32> to vector<5x5xf32>
    %117 = arith.subf %113, %116 : vector<5x5xf32>
    %118 = math.exp %117 : vector<5x5xf32>
    %cst_88 = arith.constant dense<0.000000e+00> : vector<5xf32>
    %119 = vector.multi_reduction <add>, %118, %cst_88 [1] : vector<5x5xf32> to vector<5xf32>
    %120 = vector.shape_cast %119 : vector<5xf32> to vector<5x1xf32>
    %121 = vector.broadcast %120 : vector<5x1xf32> to vector<5x5xf32>
    %122 = arith.divf %118, %121 : vector<5x5xf32>
    %cst_89 = arith.constant dense<0.000000e+00> : vector<5x32xf32>
    %123 = tpu.matmul %122, %93, %cst_89 {dimension_numbers = #tpu.dot_dimension_numbers<[1], [0], [0], [1], [0, 0, 1, 1], [], []>} : vector<5x5xf32>, vector<5x32xf32>, vector<5x32xf32> -> vector<5x32xf32>
    %c32_90 = arith.constant 32 : index
    %c0_91 = arith.constant 0 : index
    %124 = vector.load %arg8[%c32_90, %c0_91] : memref<64x64xf32, #tpu.memory_space<vmem>>, vector<32x64xf32>
    %cst_92 = arith.constant dense<0.000000e+00> : vector<5x64xf32>
    %125 = tpu.matmul %123, %124, %cst_92 {dimension_numbers = #tpu.dot_dimension_numbers<[1], [0], [0], [1], [0, 0, 1, 1], [], []>} : vector<5x32xf32>, vector<32x64xf32>, vector<5x64xf32> -> vector<5x64xf32>
    %126 = arith.addf %109, %125 : vector<5x64xf32>
    %c5_93 = arith.constant 5 : index
    %c0_94 = arith.constant 0 : index
    %127 = vector.load %arg30[%c5_93, %c0_94] : memref<10x64xf32, #tpu.memory_space<vmem>>, vector<5x64xf32>
    %128 = arith.addf %127, %126 : vector<5x64xf32>
    %c0_95 = arith.constant 0 : index
    %c0_96 = arith.constant 0 : index
    %129 = vector.load %arg9[%c0_95, %c0_96] : memref<1x64xf32, #tpu.memory_space<vmem>>, vector<1x64xf32>
    %130 = vector.broadcast %129 : vector<1x64xf32> to vector<5x64xf32>
    %131 = arith.addf %128, %130 : vector<5x64xf32>
    %c5_97 = arith.constant 5 : index
    %c0_98 = arith.constant 0 : index
    %132 = vector.load %arg30[%c5_97, %c0_98] : memref<10x64xf32, #tpu.memory_space<vmem>>, vector<5x64xf32>
    tpu.vector_store %arg30[%c5_97, %c0_98], %131 {strides = array<i32>} : memref<10x64xf32, #tpu.memory_space<vmem>>, vector<5x64xf32>,
    %c0_99 = arith.constant 0 : index
    %c0_100 = arith.constant 0 : index
    %133 = vector.load %arg30[%c0_99, %c0_100] : memref<10x64xf32, #tpu.memory_space<vmem>>, vector<10x64xf32>
    %cst_101 = arith.constant dense<0.000000e+00> : vector<10xf32>
    %134 = vector.multi_reduction <add>, %133, %cst_101 [1] : vector<10x64xf32> to vector<10xf32>
    %135 = vector.shape_cast %134 : vector<10xf32> to vector<10x1xf32>
    %cst_102 = arith.constant 6.400000e+01 : f32
    %136 = vector.broadcast %cst_102 : f32 to vector<10x1xf32>
    %137 = arith.divf %135, %136 : vector<10x1xf32>
    %138 = vector.broadcast %137 : vector<10x1xf32> to vector<10x64xf32>
    %139 = arith.subf %133, %138 : vector<10x64xf32>
    %140 = arith.mulf %139, %139 : vector<10x64xf32>
    %cst_103 = arith.constant dense<0.000000e+00> : vector<10xf32>
    %141 = vector.multi_reduction <add>, %140, %cst_103 [1] : vector<10x64xf32> to vector<10xf32>
    %142 = vector.shape_cast %141 : vector<10xf32> to vector<10x1xf32>
    %cst_104 = arith.constant 6.400000e+01 : f32
    %143 = vector.broadcast %cst_104 : f32 to vector<10x1xf32>
    %144 = arith.divf %142, %143 : vector<10x1xf32>
    %145 = vector.broadcast %137 : vector<10x1xf32> to vector<10x64xf32>
    %146 = arith.subf %133, %145 : vector<10x64xf32>
    %cst_105 = arith.constant 9.99999974E-6 : f32
    %147 = vector.broadcast %cst_105 : f32 to vector<10x1xf32>
    %148 = arith.addf %144, %147 : vector<10x1xf32>
    %149 = math.rsqrt %148 : vector<10x1xf32>
    %150 = vector.broadcast %149 : vector<10x1xf32> to vector<10x64xf32>
    %151 = arith.mulf %146, %150 : vector<10x64xf32>
    %c0_106 = arith.constant 0 : index
    %c0_107 = arith.constant 0 : index
    %152 = vector.load %arg10[%c0_106, %c0_107] : memref<1x64xf32, #tpu.memory_space<vmem>>, vector<1x64xf32>
    %153 = vector.broadcast %152 : vector<1x64xf32> to vector<10x64xf32>
    %154 = arith.mulf %151, %153 : vector<10x64xf32>
    %c0_108 = arith.constant 0 : index
    %c0_109 = arith.constant 0 : index
    %155 = vector.load %arg11[%c0_108, %c0_109] : memref<1x64xf32, #tpu.memory_space<vmem>>, vector<1x64xf32>
    %156 = vector.broadcast %155 : vector<1x64xf32> to vector<10x64xf32>
    %157 = arith.addf %154, %156 : vector<10x64xf32>
    %c0_110 = arith.constant 0 : index
    %c0_111 = arith.constant 0 : index
    %158 = vector.load %arg12[%c0_110, %c0_111] : memref<64x48xf32, #tpu.memory_space<vmem>>, vector<64x48xf32>
    %cst_112 = arith.constant dense<0.000000e+00> : vector<10x48xf32>
    %159 = tpu.matmul %157, %158, %cst_112 {dimension_numbers = #tpu.dot_dimension_numbers<[1], [0], [0], [1], [0, 0, 1, 1], [], []>} : vector<10x64xf32>, vector<64x48xf32>, vector<10x48xf32> -> vector<10x48xf32>
    %c0_113 = arith.constant 0 : index
    %c0_114 = arith.constant 0 : index
    %160 = vector.load %arg13[%c0_113, %c0_114] : memref<1x48xf32, #tpu.memory_space<vmem>>, vector<1x48xf32>
    %161 = vector.broadcast %160 : vector<1x48xf32> to vector<10x48xf32>
    %162 = arith.addf %159, %161 : vector<10x48xf32>
    %163 = arith.mulf %162, %162 : vector<10x48xf32>
    %164 = arith.mulf %162, %163 : vector<10x48xf32>
    %cst_115 = arith.constant 4.471500e-02 : f32
    %165 = vector.broadcast %cst_115 : f32 to vector<10x48xf32>
    %166 = arith.mulf %165, %164 : vector<10x48xf32>
    %167 = arith.addf %162, %166 : vector<10x48xf32>
    %cst_116 = arith.constant 0.797884583 : f32
    %168 = vector.broadcast %cst_116 : f32 to vector<10x48xf32>
    %169 = arith.mulf %168, %167 : vector<10x48xf32>
    %170 = math.tanh %169 : vector<10x48xf32>
    %cst_117 = arith.constant 1.000000e+00 : f32
    %171 = vector.broadcast %cst_117 : f32 to vector<10x48xf32>
    %172 = arith.addf %171, %170 : vector<10x48xf32>
    %cst_118 = arith.constant 5.000000e-01 : f32
    %173 = vector.broadcast %cst_118 : f32 to vector<10x48xf32>
    %174 = arith.mulf %173, %172 : vector<10x48xf32>
    %175 = arith.mulf %162, %174 : vector<10x48xf32>
    %c0_119 = arith.constant 0 : index
    %c0_120 = arith.constant 0 : index
    %176 = vector.load %arg14[%c0_119, %c0_120] : memref<48x64xf32, #tpu.memory_space<vmem>>, vector<48x64xf32>
    %cst_121 = arith.constant dense<0.000000e+00> : vector<10x64xf32>
    %177 = tpu.matmul %175, %176, %cst_121 {dimension_numbers = #tpu.dot_dimension_numbers<[1], [0], [0], [1], [0, 0, 1, 1], [], []>} : vector<10x48xf32>, vector<48x64xf32>, vector<10x64xf32> -> vector<10x64xf32>
    %c0_122 = arith.constant 0 : index
    %c0_123 = arith.constant 0 : index
    %178 = vector.load %arg15[%c0_122, %c0_123] : memref<1x64xf32, #tpu.memory_space<vmem>>, vector<1x64xf32>
    %179 = vector.broadcast %178 : vector<1x64xf32> to vector<10x64xf32>
    %180 = arith.addf %177, %179 : vector<10x64xf32>
    %181 = arith.addf %133, %180 : vector<10x64xf32>
    %c0_124 = arith.constant 0 : index
    %c0_125 = arith.constant 0 : index
    %182 = vector.load %arg30[%c0_124, %c0_125] : memref<10x64xf32, #tpu.memory_space<vmem>>, vector<10x64xf32>
    tpu.vector_store %arg30[%c0_124, %c0_125], %181 {strides = array<i32>} : memref<10x64xf32, #tpu.memory_space<vmem>>, vector<10x64xf32>,
    %c0_126 = arith.constant 0 : index
    %c0_127 = arith.constant 0 : index
    %183 = vector.load %arg30[%c0_126, %c0_127] : memref<10x64xf32, #tpu.memory_space<vmem>>, vector<10x64xf32>
    %cst_128 = arith.constant dense<0.000000e+00> : vector<10xf32>
    %184 = vector.multi_reduction <add>, %183, %cst_128 [1] : vector<10x64xf32> to vector<10xf32>
    %185 = vector.shape_cast %184 : vector<10xf32> to vector<10x1xf32>
    %cst_129 = arith.constant 6.400000e+01 : f32
    %186 = vector.broadcast %cst_129 : f32 to vector<10x1xf32>
    %187 = arith.divf %185, %186 : vector<10x1xf32>
    %188 = vector.broadcast %187 : vector<10x1xf32> to vector<10x64xf32>
    %189 = arith.subf %183, %188 : vector<10x64xf32>
    %190 = arith.mulf %189, %189 : vector<10x64xf32>
    %cst_130 = arith.constant dense<0.000000e+00> : vector<10xf32>
    %191 = vector.multi_reduction <add>, %190, %cst_130 [1] : vector<10x64xf32> to vector<10xf32>
    %192 = vector.shape_cast %191 : vector<10xf32> to vector<10x1xf32>
    %cst_131 = arith.constant 6.400000e+01 : f32
    %193 = vector.broadcast %cst_131 : f32 to vector<10x1xf32>
    %194 = arith.divf %192, %193 : vector<10x1xf32>
    %195 = vector.broadcast %187 : vector<10x1xf32> to vector<10x64xf32>
    %196 = arith.subf %183, %195 : vector<10x64xf32>
    %cst_132 = arith.constant 9.99999974E-6 : f32
    %197 = vector.broadcast %cst_132 : f32 to vector<10x1xf32>
    %198 = arith.addf %194, %197 : vector<10x1xf32>
    %199 = math.rsqrt %198 : vector<10x1xf32>
    %200 = vector.broadcast %199 : vector<10x1xf32> to vector<10x64xf32>
    %201 = arith.mulf %196, %200 : vector<10x64xf32>
    %c0_133 = arith.constant 0 : index
    %c0_134 = arith.constant 0 : index
    %202 = vector.load %arg16[%c0_133, %c0_134] : memref<1x64xf32, #tpu.memory_space<vmem>>, vector<1x64xf32>
    %203 = vector.broadcast %202 : vector<1x64xf32> to vector<10x64xf32>
    %204 = arith.mulf %201, %203 : vector<10x64xf32>
    %c0_135 = arith.constant 0 : index
    %c0_136 = arith.constant 0 : index
    %205 = vector.load %arg17[%c0_135, %c0_136] : memref<1x64xf32, #tpu.memory_space<vmem>>, vector<1x64xf32>
    %206 = vector.broadcast %205 : vector<1x64xf32> to vector<10x64xf32>
    %207 = arith.addf %204, %206 : vector<10x64xf32>
    %c0_137 = arith.constant 0 : index
    %c0_138 = arith.constant 0 : index
    %208 = vector.load %arg18[%c0_137, %c0_138] : memref<64x128xf32, #tpu.memory_space<vmem>>, vector<64x128xf32>
    %cst_139 = arith.constant dense<0.000000e+00> : vector<10x128xf32>
    %209 = tpu.matmul %207, %208, %cst_139 {dimension_numbers = #tpu.dot_dimension_numbers<[1], [0], [0], [1], [0, 0, 1, 1], [], []>} : vector<10x64xf32>, vector<64x128xf32>, vector<10x128xf32> -> vector<10x128xf32>
    %c0_140 = arith.constant 0 : index
    %c0_141 = arith.constant 0 : index
    %210 = vector.load %arg19[%c0_140, %c0_141] : memref<1x128xf32, #tpu.memory_space<vmem>>, vector<1x128xf32>
    %211 = vector.broadcast %210 : vector<1x128xf32> to vector<10x128xf32>
    %212 = arith.addf %209, %211 : vector<10x128xf32>
    %c0_142 = arith.constant 0 : index
    %c0_143 = arith.constant 0 : index
    %213 = vector.load %arg31[%c0_142, %c0_143] : memref<10x128xf32, #tpu.memory_space<vmem>>, vector<10x128xf32>
    tpu.vector_store %arg31[%c0_142, %c0_143], %212 {strides = array<i32>} : memref<10x128xf32, #tpu.memory_space<vmem>>, vector<10x128xf32>,
    %c0_144 = arith.constant 0 : index
    %c64_145 = arith.constant 64 : index
    %214 = vector.load %arg31[%c0_144, %c64_145] : memref<10x128xf32, #tpu.memory_space<vmem>>, vector<5x32xf32>
    %c0_146 = arith.constant 0 : index
    %c96_147 = arith.constant 96 : index
    %215 = vector.load %arg31[%c0_146, %c96_147] : memref<10x128xf32, #tpu.memory_space<vmem>>, vector<5x32xf32>
    %c0_148 = arith.constant 0 : index
    %c0_149 = arith.constant 0 : index
    %216 = vector.load %arg31[%c0_148, %c0_149] : memref<10x128xf32, #tpu.memory_space<vmem>>, vector<5x32xf32>
    %cst_150 = arith.constant dense<0.000000e+00> : vector<5x5xf32>
    %217 = tpu.matmul %216, %214, %cst_150 {dimension_numbers = #tpu.dot_dimension_numbers<[1], [1], [0], [0], [0, 0, 1, 0], [], []>} : vector<5x32xf32>, vector<5x32xf32>, vector<5x5xf32> -> vector<5x5xf32>
    %cst_151 = arith.constant 0.176776692 : f32
    %218 = vector.broadcast %cst_151 : f32 to vector<5x5xf32>
    %219 = arith.mulf %217, %218 : vector<5x5xf32>
    %cst_152 = arith.constant dense<0xFF800000> : vector<5xf32>
    %220 = vector.multi_reduction <maximumf>, %219, %cst_152 [1] : vector<5x5xf32> to vector<5xf32>
    %221 = vector.shape_cast %220 : vector<5xf32> to vector<5x1xf32>
    %222 = vector.broadcast %221 : vector<5x1xf32> to vector<5x5xf32>
    %223 = arith.subf %219, %222 : vector<5x5xf32>
    %224 = math.exp %223 : vector<5x5xf32>
    %cst_153 = arith.constant dense<0.000000e+00> : vector<5xf32>
    %225 = vector.multi_reduction <add>, %224, %cst_153 [1] : vector<5x5xf32> to vector<5xf32>
    %226 = vector.shape_cast %225 : vector<5xf32> to vector<5x1xf32>
    %227 = vector.broadcast %226 : vector<5x1xf32> to vector<5x5xf32>
    %228 = arith.divf %224, %227 : vector<5x5xf32>
    %cst_154 = arith.constant dense<0.000000e+00> : vector<5x32xf32>
    %229 = tpu.matmul %228, %215, %cst_154 {dimension_numbers = #tpu.dot_dimension_numbers<[1], [0], [0], [1], [0, 0, 1, 1], [], []>} : vector<5x5xf32>, vector<5x32xf32>, vector<5x32xf32> -> vector<5x32xf32>
    %c0_155 = arith.constant 0 : index
    %c0_156 = arith.constant 0 : index
    %230 = vector.load %arg20[%c0_155, %c0_156] : memref<64x64xf32, #tpu.memory_space<vmem>>, vector<32x64xf32>
    %cst_157 = arith.constant dense<0.000000e+00> : vector<5x64xf32>
    %231 = tpu.matmul %229, %230, %cst_157 {dimension_numbers = #tpu.dot_dimension_numbers<[1], [0], [0], [1], [0, 0, 1, 1], [], []>} : vector<5x32xf32>, vector<32x64xf32>, vector<5x64xf32> -> vector<5x64xf32>
    %c0_158 = arith.constant 0 : index
    %c32_159 = arith.constant 32 : index
    %232 = vector.load %arg31[%c0_158, %c32_159] : memref<10x128xf32, #tpu.memory_space<vmem>>, vector<5x32xf32>
    %cst_160 = arith.constant dense<0.000000e+00> : vector<5x5xf32>
    %233 = tpu.matmul %232, %214, %cst_160 {dimension_numbers = #tpu.dot_dimension_numbers<[1], [1], [0], [0], [0, 0, 1, 0], [], []>} : vector<5x32xf32>, vector<5x32xf32>, vector<5x5xf32> -> vector<5x5xf32>
    %cst_161 = arith.constant 0.176776692 : f32
    %234 = vector.broadcast %cst_161 : f32 to vector<5x5xf32>
    %235 = arith.mulf %233, %234 : vector<5x5xf32>
    %cst_162 = arith.constant dense<0xFF800000> : vector<5xf32>
    %236 = vector.multi_reduction <maximumf>, %235, %cst_162 [1] : vector<5x5xf32> to vector<5xf32>
    %237 = vector.shape_cast %236 : vector<5xf32> to vector<5x1xf32>
    %238 = vector.broadcast %237 : vector<5x1xf32> to vector<5x5xf32>
    %239 = arith.subf %235, %238 : vector<5x5xf32>
    %240 = math.exp %239 : vector<5x5xf32>
    %cst_163 = arith.constant dense<0.000000e+00> : vector<5xf32>
    %241 = vector.multi_reduction <add>, %240, %cst_163 [1] : vector<5x5xf32> to vector<5xf32>
    %242 = vector.shape_cast %241 : vector<5xf32> to vector<5x1xf32>
    %243 = vector.broadcast %242 : vector<5x1xf32> to vector<5x5xf32>
    %244 = arith.divf %240, %243 : vector<5x5xf32>
    %cst_164 = arith.constant dense<0.000000e+00> : vector<5x32xf32>
    %245 = tpu.matmul %244, %215, %cst_164 {dimension_numbers = #tpu.dot_dimension_numbers<[1], [0], [0], [1], [0, 0, 1, 1], [], []>} : vector<5x5xf32>, vector<5x32xf32>, vector<5x32xf32> -> vector<5x32xf32>
    %c32_165 = arith.constant 32 : index
    %c0_166 = arith.constant 0 : index
    %246 = vector.load %arg20[%c32_165, %c0_166] : memref<64x64xf32, #tpu.memory_space<vmem>>, vector<32x64xf32>
    %cst_167 = arith.constant dense<0.000000e+00> : vector<5x64xf32>
    %247 = tpu.matmul %245, %246, %cst_167 {dimension_numbers = #tpu.dot_dimension_numbers<[1], [0], [0], [1], [0, 0, 1, 1], [], []>} : vector<5x32xf32>, vector<32x64xf32>, vector<5x64xf32> -> vector<5x64xf32>
    %248 = arith.addf %231, %247 : vector<5x64xf32>
    %c0_168 = arith.constant 0 : index
    %c0_169 = arith.constant 0 : index
    %249 = vector.load %arg30[%c0_168, %c0_169] : memref<10x64xf32, #tpu.memory_space<vmem>>, vector<5x64xf32>
    %250 = arith.addf %249, %248 : vector<5x64xf32>
    %c0_170 = arith.constant 0 : index
    %c0_171 = arith.constant 0 : index
    %251 = vector.load %arg21[%c0_170, %c0_171] : memref<1x64xf32, #tpu.memory_space<vmem>>, vector<1x64xf32>
    %252 = vector.broadcast %251 : vector<1x64xf32> to vector<5x64xf32>
    %253 = arith.addf %250, %252 : vector<5x64xf32>
    %c0_172 = arith.constant 0 : index
    %c0_173 = arith.constant 0 : index
    %254 = vector.load %arg30[%c0_172, %c0_173] : memref<10x64xf32, #tpu.memory_space<vmem>>, vector<5x64xf32>
    tpu.vector_store %arg30[%c0_172, %c0_173], %253 {strides = array<i32>} : memref<10x64xf32, #tpu.memory_space<vmem>>, vector<5x64xf32>,
    %c5_174 = arith.constant 5 : index
    %c64_175 = arith.constant 64 : index
    %255 = vector.load %arg31[%c5_174, %c64_175] : memref<10x128xf32, #tpu.memory_space<vmem>>, vector<5x32xf32>
    %c5_176 = arith.constant 5 : index
    %c96_177 = arith.constant 96 : index
    %256 = vector.load %arg31[%c5_176, %c96_177] : memref<10x128xf32, #tpu.memory_space<vmem>>, vector<5x32xf32>
    %c5_178 = arith.constant 5 : index
    %c0_179 = arith.constant 0 : index
    %257 = vector.load %arg31[%c5_178, %c0_179] : memref<10x128xf32, #tpu.memory_space<vmem>>, vector<5x32xf32>
    %cst_180 = arith.constant dense<0.000000e+00> : vector<5x5xf32>
    %258 = tpu.matmul %257, %255, %cst_180 {dimension_numbers = #tpu.dot_dimension_numbers<[1], [1], [0], [0], [0, 0, 1, 0], [], []>} : vector<5x32xf32>, vector<5x32xf32>, vector<5x5xf32> -> vector<5x5xf32>
    %cst_181 = arith.constant 0.176776692 : f32
    %259 = vector.broadcast %cst_181 : f32 to vector<5x5xf32>
    %260 = arith.mulf %258, %259 : vector<5x5xf32>
    %cst_182 = arith.constant dense<0xFF800000> : vector<5xf32>
    %261 = vector.multi_reduction <maximumf>, %260, %cst_182 [1] : vector<5x5xf32> to vector<5xf32>
    %262 = vector.shape_cast %261 : vector<5xf32> to vector<5x1xf32>
    %263 = vector.broadcast %262 : vector<5x1xf32> to vector<5x5xf32>
    %264 = arith.subf %260, %263 : vector<5x5xf32>
    %265 = math.exp %264 : vector<5x5xf32>
    %cst_183 = arith.constant dense<0.000000e+00> : vector<5xf32>
    %266 = vector.multi_reduction <add>, %265, %cst_183 [1] : vector<5x5xf32> to vector<5xf32>
    %267 = vector.shape_cast %266 : vector<5xf32> to vector<5x1xf32>
    %268 = vector.broadcast %267 : vector<5x1xf32> to vector<5x5xf32>
    %269 = arith.divf %265, %268 : vector<5x5xf32>
    %cst_184 = arith.constant dense<0.000000e+00> : vector<5x32xf32>
    %270 = tpu.matmul %269, %256, %cst_184 {dimension_numbers = #tpu.dot_dimension_numbers<[1], [0], [0], [1], [0, 0, 1, 1], [], []>} : vector<5x5xf32>, vector<5x32xf32>, vector<5x32xf32> -> vector<5x32xf32>
    %c0_185 = arith.constant 0 : index
    %c0_186 = arith.constant 0 : index
    %271 = vector.load %arg20[%c0_185, %c0_186] : memref<64x64xf32, #tpu.memory_space<vmem>>, vector<32x64xf32>
    %cst_187 = arith.constant dense<0.000000e+00> : vector<5x64xf32>
    %272 = tpu.matmul %270, %271, %cst_187 {dimension_numbers = #tpu.dot_dimension_numbers<[1], [0], [0], [1], [0, 0, 1, 1], [], []>} : vector<5x32xf32>, vector<32x64xf32>, vector<5x64xf32> -> vector<5x64xf32>
    %c5_188 = arith.constant 5 : index
    %c32_189 = arith.constant 32 : index
    %273 = vector.load %arg31[%c5_188, %c32_189] : memref<10x128xf32, #tpu.memory_space<vmem>>, vector<5x32xf32>
    %cst_190 = arith.constant dense<0.000000e+00> : vector<5x5xf32>
    %274 = tpu.matmul %273, %255, %cst_190 {dimension_numbers = #tpu.dot_dimension_numbers<[1], [1], [0], [0], [0, 0, 1, 0], [], []>} : vector<5x32xf32>, vector<5x32xf32>, vector<5x5xf32> -> vector<5x5xf32>
    %cst_191 = arith.constant 0.176776692 : f32
    %275 = vector.broadcast %cst_191 : f32 to vector<5x5xf32>
    %276 = arith.mulf %274, %275 : vector<5x5xf32>
    %cst_192 = arith.constant dense<0xFF800000> : vector<5xf32>
    %277 = vector.multi_reduction <maximumf>, %276, %cst_192 [1] : vector<5x5xf32> to vector<5xf32>
    %278 = vector.shape_cast %277 : vector<5xf32> to vector<5x1xf32>
    %279 = vector.broadcast %278 : vector<5x1xf32> to vector<5x5xf32>
    %280 = arith.subf %276, %279 : vector<5x5xf32>
    %281 = math.exp %280 : vector<5x5xf32>
    %cst_193 = arith.constant dense<0.000000e+00> : vector<5xf32>
    %282 = vector.multi_reduction <add>, %281, %cst_193 [1] : vector<5x5xf32> to vector<5xf32>
    %283 = vector.shape_cast %282 : vector<5xf32> to vector<5x1xf32>
    %284 = vector.broadcast %283 : vector<5x1xf32> to vector<5x5xf32>
    %285 = arith.divf %281, %284 : vector<5x5xf32>
    %cst_194 = arith.constant dense<0.000000e+00> : vector<5x32xf32>
    %286 = tpu.matmul %285, %256, %cst_194 {dimension_numbers = #tpu.dot_dimension_numbers<[1], [0], [0], [1], [0, 0, 1, 1], [], []>} : vector<5x5xf32>, vector<5x32xf32>, vector<5x32xf32> -> vector<5x32xf32>
    %c32_195 = arith.constant 32 : index
    %c0_196 = arith.constant 0 : index
    %287 = vector.load %arg20[%c32_195, %c0_196] : memref<64x64xf32, #tpu.memory_space<vmem>>, vector<32x64xf32>
    %cst_197 = arith.constant dense<0.000000e+00> : vector<5x64xf32>
    %288 = tpu.matmul %286, %287, %cst_197 {dimension_numbers = #tpu.dot_dimension_numbers<[1], [0], [0], [1], [0, 0, 1, 1], [], []>} : vector<5x32xf32>, vector<32x64xf32>, vector<5x64xf32> -> vector<5x64xf32>
    %289 = arith.addf %272, %288 : vector<5x64xf32>
    %c5_198 = arith.constant 5 : index
    %c0_199 = arith.constant 0 : index
    %290 = vector.load %arg30[%c5_198, %c0_199] : memref<10x64xf32, #tpu.memory_space<vmem>>, vector<5x64xf32>
    %291 = arith.addf %290, %289 : vector<5x64xf32>
    %c0_200 = arith.constant 0 : index
    %c0_201 = arith.constant 0 : index
    %292 = vector.load %arg21[%c0_200, %c0_201] : memref<1x64xf32, #tpu.memory_space<vmem>>, vector<1x64xf32>
    %293 = vector.broadcast %292 : vector<1x64xf32> to vector<5x64xf32>
    %294 = arith.addf %291, %293 : vector<5x64xf32>
    %c5_202 = arith.constant 5 : index
    %c0_203 = arith.constant 0 : index
    %295 = vector.load %arg30[%c5_202, %c0_203] : memref<10x64xf32, #tpu.memory_space<vmem>>, vector<5x64xf32>
    tpu.vector_store %arg30[%c5_202, %c0_203], %294 {strides = array<i32>} : memref<10x64xf32, #tpu.memory_space<vmem>>, vector<5x64xf32>,
    %c0_204 = arith.constant 0 : index
    %c0_205 = arith.constant 0 : index
    %296 = vector.load %arg30[%c0_204, %c0_205] : memref<10x64xf32, #tpu.memory_space<vmem>>, vector<10x64xf32>
    %cst_206 = arith.constant dense<0.000000e+00> : vector<10xf32>
    %297 = vector.multi_reduction <add>, %296, %cst_206 [1] : vector<10x64xf32> to vector<10xf32>
    %298 = vector.shape_cast %297 : vector<10xf32> to vector<10x1xf32>
    %cst_207 = arith.constant 6.400000e+01 : f32
    %299 = vector.broadcast %cst_207 : f32 to vector<10x1xf32>
    %300 = arith.divf %298, %299 : vector<10x1xf32>
    %301 = vector.broadcast %300 : vector<10x1xf32> to vector<10x64xf32>
    %302 = arith.subf %296, %301 : vector<10x64xf32>
    %303 = arith.mulf %302, %302 : vector<10x64xf32>
    %cst_208 = arith.constant dense<0.000000e+00> : vector<10xf32>
    %304 = vector.multi_reduction <add>, %303, %cst_208 [1] : vector<10x64xf32> to vector<10xf32>
    %305 = vector.shape_cast %304 : vector<10xf32> to vector<10x1xf32>
    %cst_209 = arith.constant 6.400000e+01 : f32
    %306 = vector.broadcast %cst_209 : f32 to vector<10x1xf32>
    %307 = arith.divf %305, %306 : vector<10x1xf32>
    %308 = vector.broadcast %300 : vector<10x1xf32> to vector<10x64xf32>
    %309 = arith.subf %296, %308 : vector<10x64xf32>
    %cst_210 = arith.constant 9.99999974E-6 : f32
    %310 = vector.broadcast %cst_210 : f32 to vector<10x1xf32>
    %311 = arith.addf %307, %310 : vector<10x1xf32>
    %312 = math.rsqrt %311 : vector<10x1xf32>
    %313 = vector.broadcast %312 : vector<10x1xf32> to vector<10x64xf32>
    %314 = arith.mulf %309, %313 : vector<10x64xf32>
    %c0_211 = arith.constant 0 : index
    %c0_212 = arith.constant 0 : index
    %315 = vector.load %arg22[%c0_211, %c0_212] : memref<1x64xf32, #tpu.memory_space<vmem>>, vector<1x64xf32>
    %316 = vector.broadcast %315 : vector<1x64xf32> to vector<10x64xf32>
    %317 = arith.mulf %314, %316 : vector<10x64xf32>
    %c0_213 = arith.constant 0 : index
    %c0_214 = arith.constant 0 : index
    %318 = vector.load %arg23[%c0_213, %c0_214] : memref<1x64xf32, #tpu.memory_space<vmem>>, vector<1x64xf32>
    %319 = vector.broadcast %318 : vector<1x64xf32> to vector<10x64xf32>
    %320 = arith.addf %317, %319 : vector<10x64xf32>
    %c0_215 = arith.constant 0 : index
    %c0_216 = arith.constant 0 : index
    %321 = vector.load %arg24[%c0_215, %c0_216] : memref<64x48xf32, #tpu.memory_space<vmem>>, vector<64x48xf32>
    %cst_217 = arith.constant dense<0.000000e+00> : vector<10x48xf32>
    %322 = tpu.matmul %320, %321, %cst_217 {dimension_numbers = #tpu.dot_dimension_numbers<[1], [0], [0], [1], [0, 0, 1, 1], [], []>} : vector<10x64xf32>, vector<64x48xf32>, vector<10x48xf32> -> vector<10x48xf32>
    %c0_218 = arith.constant 0 : index
    %c0_219 = arith.constant 0 : index
    %323 = vector.load %arg25[%c0_218, %c0_219] : memref<1x48xf32, #tpu.memory_space<vmem>>, vector<1x48xf32>
    %324 = vector.broadcast %323 : vector<1x48xf32> to vector<10x48xf32>
    %325 = arith.addf %322, %324 : vector<10x48xf32>
    %326 = arith.mulf %325, %325 : vector<10x48xf32>
    %327 = arith.mulf %325, %326 : vector<10x48xf32>
    %cst_220 = arith.constant 4.471500e-02 : f32
    %328 = vector.broadcast %cst_220 : f32 to vector<10x48xf32>
    %329 = arith.mulf %328, %327 : vector<10x48xf32>
    %330 = arith.addf %325, %329 : vector<10x48xf32>
    %cst_221 = arith.constant 0.797884583 : f32
    %331 = vector.broadcast %cst_221 : f32 to vector<10x48xf32>
    %332 = arith.mulf %331, %330 : vector<10x48xf32>
    %333 = math.tanh %332 : vector<10x48xf32>
    %cst_222 = arith.constant 1.000000e+00 : f32
    %334 = vector.broadcast %cst_222 : f32 to vector<10x48xf32>
    %335 = arith.addf %334, %333 : vector<10x48xf32>
    %cst_223 = arith.constant 5.000000e-01 : f32
    %336 = vector.broadcast %cst_223 : f32 to vector<10x48xf32>
    %337 = arith.mulf %336, %335 : vector<10x48xf32>
    %338 = arith.mulf %325, %337 : vector<10x48xf32>
    %c0_224 = arith.constant 0 : index
    %c0_225 = arith.constant 0 : index
    %339 = vector.load %arg26[%c0_224, %c0_225] : memref<48x64xf32, #tpu.memory_space<vmem>>, vector<48x64xf32>
    %cst_226 = arith.constant dense<0.000000e+00> : vector<10x64xf32>
    %340 = tpu.matmul %338, %339, %cst_226 {dimension_numbers = #tpu.dot_dimension_numbers<[1], [0], [0], [1], [0, 0, 1, 1], [], []>} : vector<10x48xf32>, vector<48x64xf32>, vector<10x64xf32> -> vector<10x64xf32>
    %c0_227 = arith.constant 0 : index
    %c0_228 = arith.constant 0 : index
    %341 = vector.load %arg27[%c0_227, %c0_228] : memref<1x64xf32, #tpu.memory_space<vmem>>, vector<1x64xf32>
    %342 = vector.broadcast %341 : vector<1x64xf32> to vector<10x64xf32>
    %343 = arith.addf %340, %342 : vector<10x64xf32>
    %344 = arith.addf %296, %343 : vector<10x64xf32>
    %c0_229 = arith.constant 0 : index
    %c0_230 = arith.constant 0 : index
    %345 = vector.load %arg30[%c0_229, %c0_230] : memref<10x64xf32, #tpu.memory_space<vmem>>, vector<10x64xf32>
    tpu.vector_store %arg30[%c0_229, %c0_230], %344 {strides = array<i32>} : memref<10x64xf32, #tpu.memory_space<vmem>>, vector<10x64xf32>,
    %c0_231 = arith.constant 0 : index
    %c0_232 = arith.constant 0 : index
    %346 = vector.load %arg30[%c0_231, %c0_232] : memref<10x64xf32, #tpu.memory_space<vmem>>, vector<1x64xf32>
    %c0_233 = arith.constant 0 : index
    %c0_234 = arith.constant 0 : index
    %347 = vector.load %arg28[%c0_233, %c0_234] : memref<64x128xf32, #tpu.memory_space<vmem>>, vector<64x128xf32>
    %cst_235 = arith.constant dense<0.000000e+00> : vector<1x128xf32>
    %348 = tpu.matmul %346, %347, %cst_235 {dimension_numbers = #tpu.dot_dimension_numbers<[1], [0], [0], [1], [0, 0, 1, 1], [], []>} : vector<1x64xf32>, vector<64x128xf32>, vector<1x128xf32> -> vector<1x128xf32>
    %c0_236 = arith.constant 0 : index
    %c0_237 = arith.constant 0 : index
    %349 = vector.load %arg29[%c0_236, %c0_237] : memref<2x128xf32, #tpu.memory_space<vmem>>, vector<1x128xf32>
    tpu.vector_store %arg29[%c0_236, %c0_237], %348 {strides = array<i32>} : memref<2x128xf32, #tpu.memory_space<vmem>>, vector<1x128xf32>,
    %c5_238 = arith.constant 5 : index
    %c0_239 = arith.constant 0 : index
    %350 = vector.load %arg30[%c5_238, %c0_239] : memref<10x64xf32, #tpu.memory_space<vmem>>, vector<1x64xf32>
    %c0_240 = arith.constant 0 : index
    %c0_241 = arith.constant 0 : index
    %351 = vector.load %arg28[%c0_240, %c0_241] : memref<64x128xf32, #tpu.memory_space<vmem>>, vector<64x128xf32>
    %cst_242 = arith.constant dense<0.000000e+00> : vector<1x128xf32>
    %352 = tpu.matmul %350, %351, %cst_242 {dimension_numbers = #tpu.dot_dimension_numbers<[1], [0], [0], [1], [0, 0, 1, 1], [], []>} : vector<1x64xf32>, vector<64x128xf32>, vector<1x128xf32> -> vector<1x128xf32>
    %c1_243 = arith.constant 1 : index
    %c0_244 = arith.constant 0 : index
    %353 = vector.load %arg29[%c1_243, %c0_244] : memref<2x128xf32, #tpu.memory_space<vmem>>, vector<1x128xf32>
    tpu.vector_store %arg29[%c1_243, %c0_244], %352 {strides = array<i32>} : memref<2x128xf32, #tpu.memory_space<vmem>>, vector<1x128xf32>,
    return
  }
}

</mosaic_0001>

<llo_original>
// kernel: vit_forward.1
$region0: #{vit_forward.1}
  #allocation0 [shape = 'u32[]', space=smem, size = 0x4, offset = 0x4, fixed_abs, tag = 'smem constant byte address 0x4 - core index']
  #allocation1 [shape = 'u32[144,128]{1,0:T(1,128)}', space=vmem, size = 0x12000, scoped, tag = 'internal scratch']
  #allocation2 [shape = 'f32[10,64]{1,0:T(8,128)}', space=vmem, size = 0x2000, scoped, tag = 'scratch operand']
  #allocation3 [shape = 'f32[10,128]{1,0:T(8,128)}', space=vmem, size = 0x2000, scoped, tag = 'scratch operand']
  %s0 = inlined_call_operand.smem [shape: u32[30], index: -1, kind: input, shape index: {}]
  %s1 = sld [smem:[%s0]]
  %s2 = scalar_lea.smem %s0, 1
  %s3 = sld [smem:[%s2]]
  %s4 = scalar_lea.smem %s0, 2
  %s5 = sld [smem:[%s4]]
  %s6 = scalar_lea.smem %s0, 3
  %s7 = sld [smem:[%s6]]
  %s8 = scalar_lea.smem %s0, 4
  %s9 = sld [smem:[%s8]]
  %s10 = scalar_lea.smem %s0, 5
  %s11 = sld [smem:[%s10]]
  %s12 = scalar_lea.smem %s0, 6
  %s13 = sld [smem:[%s12]]
  %s14 = scalar_lea.smem %s0, 7
  %s15 = sld [smem:[%s14]]
  %s16 = scalar_lea.smem %s0, 8
  %s17 = sld [smem:[%s16]]
  %s18 = scalar_lea.smem %s0, 9
  %s19 = sld [smem:[%s18]]
  %s20 = scalar_lea.smem %s0, 10
  %s21 = sld [smem:[%s20]]
  %s22 = scalar_lea.smem %s0, 11
  %s23 = sld [smem:[%s22]]
  %s24 = scalar_lea.smem %s0, 12
  %s25 = sld [smem:[%s24]]
  %s26 = scalar_lea.smem %s0, 13
  %s27 = sld [smem:[%s26]]
  %s28 = scalar_lea.smem %s0, 14
  %s29 = sld [smem:[%s28]]
  %s30 = scalar_lea.smem %s0, 15
  %s31 = sld [smem:[%s30]]
  %s32 = scalar_lea.smem %s0, 16
  %s33 = sld [smem:[%s32]]
  %s34 = scalar_lea.smem %s0, 17
  %s35 = sld [smem:[%s34]]
  %s36 = scalar_lea.smem %s0, 18
  %s37 = sld [smem:[%s36]]
  %s38 = scalar_lea.smem %s0, 19
  %s39 = sld [smem:[%s38]]
  %s40 = scalar_lea.smem %s0, 20
  %s41 = sld [smem:[%s40]]
  %s42 = scalar_lea.smem %s0, 21
  %s43 = sld [smem:[%s42]]
  %s44 = scalar_lea.smem %s0, 22
  %s45 = sld [smem:[%s44]]
  %s46 = scalar_lea.smem %s0, 23
  %s47 = sld [smem:[%s46]]
  %s48 = scalar_lea.smem %s0, 24
  %s49 = sld [smem:[%s48]]
  %s50 = scalar_lea.smem %s0, 25
  %s51 = sld [smem:[%s50]]
  %s52 = scalar_lea.smem %s0, 26
  %s53 = sld [smem:[%s52]]
  %s54 = scalar_lea.smem %s0, 27
  %s55 = sld [smem:[%s54]]
  %s56 = scalar_lea.smem %s0, 28
  %s57 = sld [smem:[%s56]]
  %s58 = scalar_lea.smem %s0, 29
  %s59 = sld [smem:[%s58]]
  %s60 = sld [smem:[#allocation0]]
  $region126: #{vit_forward.1} parent=0
    _
  %s62 = ssub.s32 1, %s60
  %s63 = scalar_select 0, %s62, %s60
  $region1: #{vit_forward.1} parent=0
    #allocation4 [shape = 'u8[1024]{0}', space=vmem, size = 0x400, scoped, tag = 'output window, operand 0, single buffered']
    #allocation5 [shape = 's32[1]{0}', space=sflag, size = 0x4, scoped, tag = 'scoped memory for vit_forward.1']
    %64 = vsyncpa [#allocation5], 0
    // Predicated region
    $region2: #{vit_forward.1} parent=1 // pred_check
      _
    $region3: #{vit_forward.1} parent=1 // pred_check_branch
      %66 = sbr.rel (0) target = $region5
    $region4: #{vit_forward.1} parent=1 // pred_region
      _
    $region5: #{vit_forward.1} parent=1 // pred_fallthru
      _
    // Predicated region
    $region6: #{vit_forward.1} parent=1 // pred_check
      _
    $region7: #{vit_forward.1} parent=1 // pred_check_branch
      %68 = sbr.rel (0) target = $region9
    $region8: #{vit_forward.1} parent=1 // pred_region
      _
    $region9: #{vit_forward.1} parent=1 // pred_fallthru
      _
    // Predicated region
    $region10: #{vit_forward.1} parent=1 // pred_check
      _
    $region11: #{vit_forward.1} parent=1 // pred_check_branch
      %70 = sbr.rel (0) target = $region13
    $region12: #{vit_forward.1} parent=1 // pred_region
      _
    $region13: #{vit_forward.1} parent=1 // pred_fallthru
      _
    // Predicated region
    $region14: #{vit_forward.1} parent=1 // pred_check
      _
    $region15: #{vit_forward.1} parent=1 // pred_check_branch
      %72 = sbr.rel (0) target = $region17
    $region16: #{vit_forward.1} parent=1 // pred_region
      _
    $region17: #{vit_forward.1} parent=1 // pred_fallthru
      _
    // Predicated region
    $region18: #{vit_forward.1} parent=1 // pred_check
      _
    $region19: #{vit_forward.1} parent=1 // pred_check_branch
      %74 = sbr.rel (0) target = $region21
    $region20: #{vit_forward.1} parent=1 // pred_region
      _
    $region21: #{vit_forward.1} parent=1 // pred_fallthru
      _
    // Predicated region
    $region22: #{vit_forward.1} parent=1 // pred_check
      _
    $region23: #{vit_forward.1} parent=1 // pred_check_branch
      %76 = sbr.rel (0) target = $region25
    $region24: #{vit_forward.1} parent=1 // pred_region
      _
    $region25: #{vit_forward.1} parent=1 // pred_fallthru
      _
    // Predicated region
    $region26: #{vit_forward.1} parent=1 // pred_check
      _
    $region27: #{vit_forward.1} parent=1 // pred_check_branch
      %78 = sbr.rel (0) target = $region29
    $region28: #{vit_forward.1} parent=1 // pred_region
      _
    $region29: #{vit_forward.1} parent=1 // pred_fallthru
      _
    // Predicated region
    $region30: #{vit_forward.1} parent=1 // pred_check
      _
    $region31: #{vit_forward.1} parent=1 // pred_check_branch
      %80 = sbr.rel (0) target = $region33
    $region32: #{vit_forward.1} parent=1 // pred_region
      _
    $region33: #{vit_forward.1} parent=1 // pred_fallthru
      _
    // Predicated region
    $region34: #{vit_forward.1} parent=1 // pred_check
      _
    $region35: #{vit_forward.1} parent=1 // pred_check_branch
      %82 = sbr.rel (0) target = $region37
    $region36: #{vit_forward.1} parent=1 // pred_region
      _
    $region37: #{vit_forward.1} parent=1 // pred_fallthru
      _
    // Predicated region
    $region38: #{vit_forward.1} parent=1 // pred_check
      _
    $region39: #{vit_forward.1} parent=1 // pred_check_branch
      %84 = sbr.rel (0) target = $region41
    $region40: #{vit_forward.1} parent=1 // pred_region
      _
    $region41: #{vit_forward.1} parent=1 // pred_fallthru
      _
    // Predicated region
    $region42: #{vit_forward.1} parent=1 // pred_check
      _
    $region43: #{vit_forward.1} parent=1 // pred_check_branch
      %86 = sbr.rel (0) target = $region45
    $region44: #{vit_forward.1} parent=1 // pred_region
      _
    $region45: #{vit_forward.1} parent=1 // pred_fallthru
      _
    // Predicated region
    $region46: #{vit_forward.1} parent=1 // pred_check
      _
    $region47: #{vit_forward.1} parent=1 // pred_check_branch
      %88 = sbr.rel (0) target = $region49
    $region48: #{vit_forward.1} parent=1 // pred_region
      _
    $region49: #{vit_forward.1} parent=1 // pred_fallthru
      _
    // Predicated region
    $region50: #{vit_forward.1} parent=1 // pred_check
      _
    $region51: #{vit_forward.1} parent=1 // pred_check_branch
      %90 = sbr.rel (0) target = $region53
    $region52: #{vit_forward.1} parent=1 // pred_region
      _
    $region53: #{vit_forward.1} parent=1 // pred_fallthru
      _
    // Predicated region
    $region54: #{vit_forward.1} parent=1 // pred_check
      _
    $region55: #{vit_forward.1} parent=1 // pred_check_branch
      %92 = sbr.rel (0) target = $region57
    $region56: #{vit_forward.1} parent=1 // pred_region
      _
    $region57: #{vit_forward.1} parent=1 // pred_fallthru
      _
    // Predicated region
    $region58: #{vit_forward.1} parent=1 // pred_check
      _
    $region59: #{vit_forward.1} parent=1 // pred_check_branch
      %94 = sbr.rel (0) target = $region61
    $region60: #{vit_forward.1} parent=1 // pred_region
      _
    $region61: #{vit_forward.1} parent=1 // pred_fallthru
      _
    // Predicated region
    $region62: #{vit_forward.1} parent=1 // pred_check
      _
    $region63: #{vit_forward.1} parent=1 // pred_check_branch
      %96 = sbr.rel (0) target = $region65
    $region64: #{vit_forward.1} parent=1 // pred_region
      _
    $region65: #{vit_forward.1} parent=1 // pred_fallthru
      _
    // Predicated region
    $region66: #{vit_forward.1} parent=1 // pred_check
      _
    $region67: #{vit_forward.1} parent=1 // pred_check_branch
      %98 = sbr.rel (0) target = $region69
    $region68: #{vit_forward.1} parent=1 // pred_region
      _
    $region69: #{vit_forward.1} parent=1 // pred_fallthru
      _
    // Predicated region
    $region70: #{vit_forward.1} parent=1 // pred_check
      _
    $region71: #{vit_forward.1} parent=1 // pred_check_branch
      %100 = sbr.rel (0) target = $region73
    $region72: #{vit_forward.1} parent=1 // pred_region
      _
    $region73: #{vit_forward.1} parent=1 // pred_fallthru
      _
    // Predicated region
    $region74: #{vit_forward.1} parent=1 // pred_check
      _
    $region75: #{vit_forward.1} parent=1 // pred_check_branch
      %102 = sbr.rel (0) target = $region77
    $region76: #{vit_forward.1} parent=1 // pred_region
      _
    $region77: #{vit_forward.1} parent=1 // pred_fallthru
      _
    // Predicated region
    $region78: #{vit_forward.1} parent=1 // pred_check
      _
    $region79: #{vit_forward.1} parent=1 // pred_check_branch
      %104 = sbr.rel (0) target = $region81
    $region80: #{vit_forward.1} parent=1 // pred_region
      _
    $region81: #{vit_forward.1} parent=1 // pred_fallthru
      _
    // Predicated region
    $region82: #{vit_forward.1} parent=1 // pred_check
      _
    $region83: #{vit_forward.1} parent=1 // pred_check_branch
      %106 = sbr.rel (0) target = $region85
    $region84: #{vit_forward.1} parent=1 // pred_region
      _
    $region85: #{vit_forward.1} parent=1 // pred_fallthru
      _
    // Predicated region
    $region86: #{vit_forward.1} parent=1 // pred_check
      _
    $region87: #{vit_forward.1} parent=1 // pred_check_branch
      %108 = sbr.rel (0) target = $region89
    $region88: #{vit_forward.1} parent=1 // pred_region
      _
    $region89: #{vit_forward.1} parent=1 // pred_fallthru
      _
    // Predicated region
    $region90: #{vit_forward.1} parent=1 // pred_check
      _
    $region91: #{vit_forward.1} parent=1 // pred_check_branch
      %110 = sbr.rel (0) target = $region93
    $region92: #{vit_forward.1} parent=1 // pred_region
      _
    $region93: #{vit_forward.1} parent=1 // pred_fallthru
      _
    // Predicated region
    $region94: #{vit_forward.1} parent=1 // pred_check
      _
    $region95: #{vit_forward.1} parent=1 // pred_check_branch
      %112 = sbr.rel (0) target = $region97
    $region96: #{vit_forward.1} parent=1 // pred_region
      _
    $region97: #{vit_forward.1} parent=1 // pred_fallthru
      _
    // Predicated region
    $region98: #{vit_forward.1} parent=1 // pred_check
      _
    $region99: #{vit_forward.1} parent=1 // pred_check_branch
      %114 = sbr.rel (0) target = $region101
    $region100: #{vit_forward.1} parent=1 // pred_region
      _
    $region101: #{vit_forward.1} parent=1 // pred_fallthru
      _
    // Predicated region
    $region102: #{vit_forward.1} parent=1 // pred_check
      _
    $region103: #{vit_forward.1} parent=1 // pred_check_branch
      %116 = sbr.rel (0) target = $region105
    $region104: #{vit_forward.1} parent=1 // pred_region
      _
    $region105: #{vit_forward.1} parent=1 // pred_fallthru
      _
    // Predicated region
    $region106: #{vit_forward.1} parent=1 // pred_check
      _
    $region107: #{vit_forward.1} parent=1 // pred_check_branch
      %118 = sbr.rel (0) target = $region109
    $region108: #{vit_forward.1} parent=1 // pred_region
      _
    $region109: #{vit_forward.1} parent=1 // pred_fallthru
      _
    // Predicated region
    $region110: #{vit_forward.1} parent=1 // pred_check
      _
    $region111: #{vit_forward.1} parent=1 // pred_check_branch
      %120 = sbr.rel (0) target = $region113
    $region112: #{vit_forward.1} parent=1 // pred_region
      _
    $region113: #{vit_forward.1} parent=1 // pred_fallthru
      _
    // Predicated region
    $region114: #{vit_forward.1} parent=1 // pred_check
      _
    $region115: #{vit_forward.1} parent=1 // pred_check_branch
      %122 = sbr.rel (0) target = $region117
    $region116: #{vit_forward.1} parent=1 // pred_region
      _
    $region117: #{vit_forward.1} parent=1 // pred_fallthru
      _
    %v123 = vld [vmem:[%s5] sm:$0x1]
    %v124 = vld [vmem:[%s7] sm:$0x1]
    %v125 = vadd.f32 %v123, %v124
    %vm126 = vcmask 516096
    %127 = vst.msk [vmem:[#allocation2] sm:$0x1] %vm126, %v125
    %v128 = vld [vmem:[%s1] sm:$0xf]
    %v129 = vld [vmem:[%s1 + $0x8] sm:$0xf]
    %v130 = vld [vmem:[%s3] sm:$0xff]
    %v131 = vld [vmem:[%s3 + $0x8] sm:$0xff]
    %v132 = vld [vmem:[%s3 + $0x10] sm:$0xff]
    %v133 = vld [vmem:[%s3 + $0x18] sm:$0xff]
    %v134 = vld [vmem:[%s3 + $0x20] sm:$0xff]
    %v135 = vld [vmem:[%s3 + $0x28] sm:$0xff]
    %v136 = vld [vmem:[%s3 + $0x30] sm:$0xff]
    %v137 = vld [vmem:[%s3 + $0x38] sm:$0xff]
    %v138 = vld [vmem:[%s3 + $0x40] sm:$0xff]
    %v139 = vld [vmem:[%s3 + $0x48] sm:$0xff]
    %v140 = vld [vmem:[%s3 + $0x50] sm:$0xff]
    %v141 = vld [vmem:[%s3 + $0x58] sm:$0xff]
    %v142 = vld [vmem:[%s3 + $0x60] sm:$0xff]
    %v143 = vld [vmem:[%s3 + $0x68] sm:$0xff]
    %v144 = vld [vmem:[%s3 + $0x70] sm:$0xff]
    %v145 = vld [vmem:[%s3 + $0x78] sm:$0xff]
    %v146 = vld [vmem:[%s3 + $0x80] sm:$0xff]
    %v147 = vld [vmem:[%s3 + $0x88] sm:$0xff]
    %v148 = vld [vmem:[%s3 + $0x90] sm:$0xff]
    %v149 = vld [vmem:[%s3 + $0x98] sm:$0xff]
    %v150 = vld [vmem:[%s3 + $0xa0] sm:$0xff]
    %v151 = vld [vmem:[%s3 + $0xa8] sm:$0xff]
    %v152 = vld [vmem:[%s3 + $0xb0] sm:$0xff]
    %v153 = vld [vmem:[%s3 + $0xb8] sm:$0xff]
    %v154 = vld [vmem:[%s3 + $0xc0] sm:$0xff]
    %v155 = vld [vmem:[%s3 + $0xc8] sm:$0xff]
    %v156 = vld [vmem:[%s3 + $0xd0] sm:$0xff]
    %v157 = vld [vmem:[%s3 + $0xd8] sm:$0xff]
    %v158 = vld [vmem:[%s3 + $0xe0] sm:$0xff]
    %v159 = vld [vmem:[%s3 + $0xe8] sm:$0xff]
    %v160 = vld [vmem:[%s3 + $0xf0] sm:$0xff]
    %v161 = vld [vmem:[%s3 + $0xf8] sm:$0xff]
    %v162 = vld [vmem:[%s7 + $0x1] sm:$0xf]
    %163 = vmatprep.subr.mxu0 0.0
    %164 = vmatpush1.msra.mxu0 %v130
    %165 = vmatprep.subr.mxu0 0.0
    %166 = vmatpush1.msra.mxu0 %v131
    %167 = vmatprep.subr.mxu0 0.0
    %168 = vmatpush1.msra.mxu0 %v132
    %169 = vmatprep.subr.mxu0 0.0
    %170 = vmatpush1.msra.mxu0 %v133
    %171 = vmatprep.subr.mxu0 0.0
    %172 = vmatpush1.msra.mxu0 %v134
    %173 = vmatprep.subr.mxu0 0.0
    %174 = vmatpush1.msra.mxu0 %v135
    %175 = vmatprep.subr.mxu0 0.0
    %176 = vmatpush1.msra.mxu0 %v136
    %177 = vmatprep.subr.mxu0 0.0
    %178 = vmatpush1.msra.mxu0 %v137
    %179 = vmatprep.subr.mxu0 0.0
    %180 = vmatpush1.msra.mxu0 %v138
    %181 = vmatprep.subr.mxu0 0.0
    %182 = vmatpush1.msra.mxu0 %v139
    %183 = vmatprep.subr.mxu0 0.0
    %184 = vmatpush1.msra.mxu0 %v140
    %185 = vmatprep.subr.mxu0 0.0
    %186 = vmatpush1.msra.mxu0 %v141
    %187 = vmatprep.subr.mxu0 0.0
    %188 = vmatpush1.msra.mxu0 %v142
    %189 = vmatprep.subr.mxu0 0.0
    %190 = vmatpush1.msra.mxu0 %v143
    %191 = vmatprep.subr.mxu0 0.0
    %192 = vmatpush1.msra.mxu0 %v144
    %193 = vmatprep.subr.mxu0 0.0
    %194 = vmatpush1.msra.mxu0 %v145
    %195 = vmatprep.subr.mxu0 0.0
    %196 = vmatpush1.msra.mxu0 %v146
    %197 = vmatprep.subr.mxu0 0.0
    %198 = vmatpush1.msra.mxu0 %v147
    %199 = vmatprep.subr.mxu0 0.0
    %200 = vmatpush1.msra.mxu0 %v148
    %201 = vmatprep.subr.mxu0 0.0
    %202 = vmatpush1.msra.mxu0 %v149
    %203 = vmatprep.subr.mxu0 0.0
    %204 = vmatpush1.msra.mxu0 %v150
    %205 = vmatprep.subr.mxu0 0.0
    %206 = vmatpush1.msra.mxu0 %v151
    %207 = vmatprep.subr.mxu0 0.0
    %208 = vmatpush1.msra.mxu0 %v152
    %209 = vmatprep.subr.mxu0 0.0
    %210 = vmatpush1.msra.mxu0 %v153
    %211 = vmatprep.subr.mxu0 0.0
    %212 = vmatpush1.msra.mxu0 %v154
    %213 = vmatprep.subr.mxu0 0.0
    %214 = vmatpush1.msra.mxu0 %v155
    %215 = vmatprep.subr.mxu0 0.0
    %216 = vmatpush1.msra.mxu0 %v156
    %217 = vmatprep.subr.mxu0 0.0
    %218 = vmatpush1.msra.mxu0 %v157
    %219 = vmatprep.subr.mxu0 0.0
    %220 = vmatpush1.msra.mxu0 %v158
    %221 = vmatprep.subr.mxu0 0.0
    %222 = vmatpush1.msra.mxu0 %v159
    %223 = vmatprep.subr.mxu0 0.0
    %224 = vmatpush1.msra.mxu0 %v160
    %225 = vmatprep.subr.mxu0 0.0
    %226 = vmatpush1.msra.mxu0 %v161
    %227 = vmatprep.mubr.f32.mxu0 %v129
    %228 = vmatmul.mubr.f32.gmra.mrb[0].mxu0 %v128
    %v229 = vpop.f32.mrb[0].mxu0
    %v230 = vadd.f32 %v162, %v229
    %v231 = vpop.f32.mrb[0].mxu0
    %232 = vdwg.mxu0
    %vm233 = vcmask 519168
    %234 = vst.msk [vmem:[#allocation2 + $0x1] sm:$0xf] %vm233, %v230
    %v235 = vld [vmem:[%s5] sm:$0x1]
    %v236 = vld [vmem:[%s7] sm:$0x1]
    %v237 = vadd.f32 %v235, %v236
    %238 = vst.msk [vmem:[#allocation2 + $0x5] sm:$0x1] %vm126, %v237
    %v239 = vld [vmem:[%s1] sm:$0xf0]
    %v240 = vld [vmem:[%s1 + $0x8] sm:$0xf0]
    %v241 = vld [vmem:[%s3] sm:$0xff]
    %v242 = vld [vmem:[%s3 + $0x8] sm:$0xff]
    %v243 = vld [vmem:[%s3 + $0x10] sm:$0xff]
    %v244 = vld [vmem:[%s3 + $0x18] sm:$0xff]
    %v245 = vld [vmem:[%s3 + $0x20] sm:$0xff]
    %v246 = vld [vmem:[%s3 + $0x28] sm:$0xff]
    %v247 = vld [vmem:[%s3 + $0x30] sm:$0xff]
    %v248 = vld [vmem:[%s3 + $0x38] sm:$0xff]
    %v249 = vld [vmem:[%s3 + $0x40] sm:$0xff]
    %v250 = vld [vmem:[%s3 + $0x48] sm:$0xff]
    %v251 = vld [vmem:[%s3 + $0x50] sm:$0xff]
    %v252 = vld [vmem:[%s3 + $0x58] sm:$0xff]
    %v253 = vld [vmem:[%s3 + $0x60] sm:$0xff]
    %v254 = vld [vmem:[%s3 + $0x68] sm:$0xff]
    %v255 = vld [vmem:[%s3 + $0x70] sm:$0xff]
    %v256 = vld [vmem:[%s3 + $0x78] sm:$0xff]
    %v257 = vld [vmem:[%s3 + $0x80] sm:$0xff]
    %v258 = vld [vmem:[%s3 + $0x88] sm:$0xff]
    %v259 = vld [vmem:[%s3 + $0x90] sm:$0xff]
    %v260 = vld [vmem:[%s3 + $0x98] sm:$0xff]
    %v261 = vld [vmem:[%s3 + $0xa0] sm:$0xff]
    %v262 = vld [vmem:[%s3 + $0xa8] sm:$0xff]
    %v263 = vld [vmem:[%s3 + $0xb0] sm:$0xff]
    %v264 = vld [vmem:[%s3 + $0xb8] sm:$0xff]
    %v265 = vld [vmem:[%s3 + $0xc0] sm:$0xff]
    %v266 = vld [vmem:[%s3 + $0xc8] sm:$0xff]
    %v267 = vld [vmem:[%s3 + $0xd0] sm:$0xff]
    %v268 = vld [vmem:[%s3 + $0xd8] sm:$0xff]
    %v269 = vld [vmem:[%s3 + $0xe0] sm:$0xff]
    %v270 = vld [vmem:[%s3 + $0xe8] sm:$0xff]
    %v271 = vld [vmem:[%s3 + $0xf0] sm:$0xff]
    %v272 = vld [vmem:[%s3 + $0xf8] sm:$0xff]
    %v273 = vld [vmem:[%s7 + $0x1] sm:$0xf]
    %v276 = vrot.slane %v239, 4
    %v277 = vrot.slane %v240, 4
    %280 = vmatprep.subr.mxu0 0.0
    %281 = vmatpush1.msra.mxu0 %v241
    %282 = vmatprep.subr.mxu0 0.0
    %283 = vmatpush1.msra.mxu0 %v242
    %284 = vmatprep.subr.mxu0 0.0
    %285 = vmatpush1.msra.mxu0 %v243
    %286 = vmatprep.subr.mxu0 0.0
    %287 = vmatpush1.msra.mxu0 %v244
    %288 = vmatprep.subr.mxu0 0.0
    %289 = vmatpush1.msra.mxu0 %v245
    %290 = vmatprep.subr.mxu0 0.0
    %291 = vmatpush1.msra.mxu0 %v246
    %292 = vmatprep.subr.mxu0 0.0
    %293 = vmatpush1.msra.mxu0 %v247
    %294 = vmatprep.subr.mxu0 0.0
    %295 = vmatpush1.msra.mxu0 %v248
    %296 = vmatprep.subr.mxu0 0.0
    %297 = vmatpush1.msra.mxu0 %v249
    %298 = vmatprep.subr.mxu0 0.0
    %299 = vmatpush1.msra.mxu0 %v250
    %300 = vmatprep.subr.mxu0 0.0
    %301 = vmatpush1.msra.mxu0 %v251
    %302 = vmatprep.subr.mxu0 0.0
    %303 = vmatpush1.msra.mxu0 %v252
    %304 = vmatprep.subr.mxu0 0.0
    %305 = vmatpush1.msra.mxu0 %v253
    %306 = vmatprep.subr.mxu0 0.0
    %307 = vmatpush1.msra.mxu0 %v254
    %308 = vmatprep.subr.mxu0 0.0
    %309 = vmatpush1.msra.mxu0 %v255
    %310 = vmatprep.subr.mxu0 0.0
    %311 = vmatpush1.msra.mxu0 %v256
    %312 = vmatprep.subr.mxu0 0.0
    %313 = vmatpush1.msra.mxu0 %v257
    %314 = vmatprep.subr.mxu0 0.0
    %315 = vmatpush1.msra.mxu0 %v258
    %316 = vmatprep.subr.mxu0 0.0
    %317 = vmatpush1.msra.mxu0 %v259
    %318 = vmatprep.subr.mxu0 0.0
    %319 = vmatpush1.msra.mxu0 %v260
    %320 = vmatprep.subr.mxu0 0.0
    %321 = vmatpush1.msra.mxu0 %v261
    %322 = vmatprep.subr.mxu0 0.0
    %323 = vmatpush1.msra.mxu0 %v262
    %324 = vmatprep.subr.mxu0 0.0
    %325 = vmatpush1.msra.mxu0 %v263
    %326 = vmatprep.subr.mxu0 0.0
    %327 = vmatpush1.msra.mxu0 %v264
    %328 = vmatprep.subr.mxu0 0.0
    %329 = vmatpush1.msra.mxu0 %v265
    %330 = vmatprep.subr.mxu0 0.0
    %331 = vmatpush1.msra.mxu0 %v266
    %332 = vmatprep.subr.mxu0 0.0
    %333 = vmatpush1.msra.mxu0 %v267
    %334 = vmatprep.subr.mxu0 0.0
    %335 = vmatpush1.msra.mxu0 %v268
    %336 = vmatprep.subr.mxu0 0.0
    %337 = vmatpush1.msra.mxu0 %v269
    %338 = vmatprep.subr.mxu0 0.0
    %339 = vmatpush1.msra.mxu0 %v270
    %340 = vmatprep.subr.mxu0 0.0
    %341 = vmatpush1.msra.mxu0 %v271
    %342 = vmatprep.subr.mxu0 0.0
    %343 = vmatpush1.msra.mxu0 %v272
    %344 = vmatprep.mubr.f32.mxu0 %v277
    %345 = vmatmul.mubr.f32.gmra.mrb[0].mxu0 %v276
    %v346 = vpop.f32.mrb[0].mxu0
    %v347 = vadd.f32 %v273, %v346
    %v348 = vpop.f32.mrb[0].mxu0
    %349 = vdwg.mxu0
    %350 = vst.msk [vmem:[#allocation2 + $0x6] sm:$0xf] %vm233, %v347
    %v351 = vld [vmem:[#allocation2] sm:$0xff]
    %v352 = vld [vmem:[#allocation2 + $0x8] sm:$0x3]
    %vm353 = vcmask 523264
    %v354 = vsel %vm353, %v351, 0.0
    %355 = vadd.xlane.f32.xlu0 %v354
    %v356 = vpop.xlane.xlu0 %355
    %vm357 = vcmask 517120
    %v358 = vsel %vm357, %v352, 0.0
    %359 = vadd.xlane.f32.xlu0 %v358
    %v360 = vpop.xlane.xlu0 %359
    %v361 = vrcp.pop 64.0
    %v362 = vmul.f32 %v356, %v361
    %v363 = vmul.f32 %v360, %v361
    %v364 = vsub.f32 %v351, %v362
    %v365 = vsub.f32 %v352, %v363
    %v366 = vmul.f32 %v364, %v364
    %v367 = vmul.f32 %v365, %v365
    %v368 = vsel %vm353, %v366, 0.0
    %369 = vadd.xlane.f32.xlu0 %v368
    %v370 = vpop.xlane.xlu0 %369
    %v371 = vsel %vm357, %v367, 0.0
    %372 = vadd.xlane.f32.xlu0 %v371
    %v373 = vpop.xlane.xlu0 %372
    %v374 = vmul.f32 %v370, %v361
    %v375 = vmul.f32 %v373, %v361
    %v376 = vadd.f32 %v374, 1e-05
    %v377 = vadd.f32 %v375, 1e-05
    %v378 = vrsqrt.pop %v376
    %v379 = vrsqrt.pop %v377
    %v380 = vmul.f32 %v364, %v378
    %v381 = vmul.f32 %v365, %v379
    %v382 = vld [vmem:[%s9] sm:$0x1]
    %v384 = vlaneseq
    %v385 = vshrl.u32 %v384, 7
    %v386 = vsub.s32 0, %v385
    %v387 = vrot.slane %v382, %v386
    %v389 = vmul.f32 %v380, %v387
    %v390 = vmul.f32 %v381, %v387
    %v391 = vld [vmem:[%s11] sm:$0x1]
    %v393 = vlaneseq
    %v394 = vshrl.u32 %v393, 7
    %v395 = vsub.s32 0, %v394
    %v396 = vrot.slane %v391, %v395
    %v398 = vadd.f32 %v389, %v396
    %v399 = vadd.f32 %v390, %v396
    %v400 = vld [vmem:[%s13] sm:$0xff]
    %v401 = vld [vmem:[%s13 + $0x8] sm:$0xff]
    %v402 = vld [vmem:[%s13 + $0x10] sm:$0xff]
    %v403 = vld [vmem:[%s13 + $0x18] sm:$0xff]
    %v404 = vld [vmem:[%s13 + $0x20] sm:$0xff]
    %v405 = vld [vmem:[%s13 + $0x28] sm:$0xff]
    %v406 = vld [vmem:[%s13 + $0x30] sm:$0xff]
    %v407 = vld [vmem:[%s13 + $0x38] sm:$0xff]
    %v408 = vld [vmem:[%s15] sm:$0x1]
    %v410 = vlaneseq
    %v411 = vshrl.u32 %v410, 7
    %v412 = vsub.s32 0, %v411
    %v413 = vrot.slane %v408, %v412
    %v416 = vsel %vm353, %v398, 0
    %v419 = vsel %vm353, %v399, 0
    %421 = vmatprep.subr.mxu0 0.0
    %422 = vmatpush1.msra.mxu0 %v400
    %423 = vmatprep.subr.mxu0 0.0
    %424 = vmatpush1.msra.mxu0 %v401
    %425 = vmatprep.subr.mxu0 0.0
    %426 = vmatpush1.msra.mxu0 %v402
    %427 = vmatprep.subr.mxu0 0.0
    %428 = vmatpush1.msra.mxu0 %v403
    %429 = vmatprep.subr.mxu0 0.0
    %430 = vmatpush1.msra.mxu0 %v404
    %431 = vmatprep.subr.mxu0 0.0
    %432 = vmatpush1.msra.mxu0 %v405
    %433 = vmatprep.subr.mxu0 0.0
    %434 = vmatpush1.msra.mxu0 %v406
    %435 = vmatprep.subr.mxu0 0.0
    %436 = vmatpush1.msra.mxu0 %v407
    %437 = vmatprep.subr.mxu0 0.0
    %438 = vmatpush1.msra.mxu0 0.0
    %439 = vmatprep.subr.mxu0 0.0
    %440 = vmatpush1.msra.mxu0 0.0
    %441 = vmatprep.subr.mxu0 0.0
    %442 = vmatpush1.msra.mxu0 0.0
    %443 = vmatprep.subr.mxu0 0.0
    %444 = vmatpush1.msra.mxu0 0.0
    %445 = vmatprep.subr.mxu0 0.0
    %446 = vmatpush1.msra.mxu0 0.0
    %447 = vmatprep.subr.mxu0 0.0
    %448 = vmatpush1.msra.mxu0 0.0
    %449 = vmatprep.subr.mxu0 0.0
    %450 = vmatpush1.msra.mxu0 0.0
    %451 = vmatprep.subr.mxu0 0.0
    %452 = vmatpush1.msra.mxu0 0.0
    %453 = vmatprep.subr.mxu0 0.0
    %454 = vmatpush1.msra.mxu0 0.0
    %455 = vmatprep.subr.mxu0 0.0
    %456 = vmatpush1.msra.mxu0 0.0
    %457 = vmatprep.subr.mxu0 0.0
    %458 = vmatpush1.msra.mxu0 0.0
    %459 = vmatprep.subr.mxu0 0.0
    %460 = vmatpush1.msra.mxu0 0.0
    %461 = vmatprep.subr.mxu0 0.0
    %462 = vmatpush1.msra.mxu0 0.0
    %463 = vmatprep.subr.mxu0 0.0
    %464 = vmatpush1.msra.mxu0 0.0
    %465 = vmatprep.subr.mxu0 0.0
    %466 = vmatpush1.msra.mxu0 0.0
    %467 = vmatprep.subr.mxu0 0.0
    %468 = vmatpush1.msra.mxu0 0.0
    %469 = vmatprep.subr.mxu0 0.0
    %470 = vmatpush1.msra.mxu0 0.0
    %471 = vmatprep.subr.mxu0 0.0
    %472 = vmatpush1.msra.mxu0 0.0
    %473 = vmatprep.subr.mxu0 0.0
    %474 = vmatpush1.msra.mxu0 0.0
    %475 = vmatprep.subr.mxu0 0.0
    %476 = vmatpush1.msra.mxu0 0.0
    %477 = vmatprep.subr.mxu0 0.0
    %478 = vmatpush1.msra.mxu0 0.0
    %479 = vmatprep.subr.mxu0 0.0
    %480 = vmatpush1.msra.mxu0 0.0
    %481 = vmatprep.subr.mxu0 0.0
    %482 = vmatpush1.msra.mxu0 0.0
    %483 = vmatprep.subr.mxu0 0.0
    %484 = vmatpush1.msra.mxu0 0.0
    %485 = vmatprep.mubr.f32.mxu0 0.0
    %486 = vmatmul.mubr.f32.gmra.mrb[0].mxu0 %v416
    %v487 = vpop.f32.mrb[0].mxu0
    %v488 = vadd.f32 %v413, %v487
    %v489 = vpop.f32.mrb[0].mxu0
    %490 = vmatprep.mubr.f32.mxu0 0.0
    %491 = vmatmul.mubr.f32.gmra.mrb[0].mxu0 %v419
    %v492 = vpop.f32.mrb[0].mxu0
    %v493 = vadd.f32 %v413, %v492
    %v494 = vpop.f32.mrb[0].mxu0
    %495 = vdwg.mxu0
    %496 = vst [vmem:[#allocation3] sm:$0xff] %v488
    %497 = vst [vmem:[#allocation3 + $0x8] sm:$0x3] %v493
    %v498 = vld [vmem:[#allocation3] sm:$0x1f]
    %500 = vrot.lane.b32.xlu0 %v498, 64
    %v501 = vpop.permute.xlu0 %500
    %vm502 = vcmask 261120
    %v503 = vsel %vm502, %v498, 0
    %v505 = vsel %vm502, %v501, 0
    %507 = vmatprep.subr.mxu0 0.0
    %508 = vmatpush1.xpose.msra.mxu0 %v505
    %509 = vmatprep.subr.mxu0 0.0
    %510 = vmatpush1.xpose.msra.mxu0 0.0
    %511 = vmatprep.subr.mxu0 0.0
    %512 = vmatpush1.xpose.msra.mxu0 0.0
    %513 = vmatprep.subr.mxu0 0.0
    %514 = vmatpush1.xpose.msra.mxu0 0.0
    %515 = vmatprep.subr.mxu0 0.0
    %516 = vmatpush1.xpose.msra.mxu0 0.0
    %517 = vmatprep.subr.mxu0 0.0
    %518 = vmatpush1.xpose.msra.mxu0 0.0
    %519 = vmatprep.subr.mxu0 0.0
    %520 = vmatpush1.xpose.msra.mxu0 0.0
    %521 = vmatprep.subr.mxu0 0.0
    %522 = vmatpush1.xpose.msra.mxu0 0.0
    %523 = vmatprep.subr.mxu0 0.0
    %524 = vmatpush1.xpose.msra.mxu0 0.0
    %525 = vmatprep.subr.mxu0 0.0
    %526 = vmatpush1.xpose.msra.mxu0 0.0
    %527 = vmatprep.subr.mxu0 0.0
    %528 = vmatpush1.xpose.msra.mxu0 0.0
    %529 = vmatprep.subr.mxu0 0.0
    %530 = vmatpush1.xpose.msra.mxu0 0.0
    %531 = vmatprep.subr.mxu0 0.0
    %532 = vmatpush1.xpose.msra.mxu0 0.0
    %533 = vmatprep.subr.mxu0 0.0
    %534 = vmatpush1.xpose.msra.mxu0 0.0
    %535 = vmatprep.subr.mxu0 0.0
    %536 = vmatpush1.xpose.msra.mxu0 0.0
    %537 = vmatprep.subr.mxu0 0.0
    %538 = vmatpush1.xpose.msra.mxu0 0.0
    %539 = vmatprep.subr.mxu0 0.0
    %540 = vmatpush1.xpose.msra.mxu0 0.0
    %541 = vmatprep.subr.mxu0 0.0
    %542 = vmatpush1.xpose.msra.mxu0 0.0
    %543 = vmatprep.subr.mxu0 0.0
    %544 = vmatpush1.xpose.msra.mxu0 0.0
    %545 = vmatprep.subr.mxu0 0.0
    %546 = vmatpush1.xpose.msra.mxu0 0.0
    %547 = vmatprep.subr.mxu0 0.0
    %548 = vmatpush1.xpose.msra.mxu0 0.0
    %549 = vmatprep.subr.mxu0 0.0
    %550 = vmatpush1.xpose.msra.mxu0 0.0
    %551 = vmatprep.subr.mxu0 0.0
    %552 = vmatpush1.xpose.msra.mxu0 0.0
    %553 = vmatprep.subr.mxu0 0.0
    %554 = vmatpush1.xpose.msra.mxu0 0.0
    %555 = vmatprep.subr.mxu0 0.0
    %556 = vmatpush1.xpose.msra.mxu0 0.0
    %557 = vmatprep.subr.mxu0 0.0
    %558 = vmatpush1.xpose.msra.mxu0 0.0
    %559 = vmatprep.subr.mxu0 0.0
    %560 = vmatpush1.xpose.msra.mxu0 0.0
    %561 = vmatprep.subr.mxu0 0.0
    %562 = vmatpush1.xpose.msra.mxu0 0.0
    %563 = vmatprep.subr.mxu0 0.0
    %564 = vmatpush1.xpose.msra.mxu0 0.0
    %565 = vmatprep.subr.mxu0 0.0
    %566 = vmatpush1.xpose.msra.mxu0 0.0
    %567 = vmatprep.subr.mxu0 0.0
    %568 = vmatpush1.xpose.msra.mxu0 0.0
    %569 = vmatprep.subr.mxu0 0.0
    %570 = vmatpush1.xpose.msra.mxu0 0.0
    %571 = vmatprep.mubr.f32.mxu0 0.0
    %572 = vmatmul.mubr.f32.gmra.mrb[0].mxu0 %v503
    %v573 = vpop.f32.mrb[0].mxu0
    %v574 = vadd.f32 0.0, %v573
    %v575 = vpop.f32.mrb[0].mxu0
    %576 = vdwg.mxu0
    %v577 = vmul.f32 %v574, 0.17677669
    %vm578 = vcmask 36864
    %v579 = vsel %vm578, %v577, -inf
    %580 = vmax.xlane.f32.xlu0 %v579
    %v581 = vpop.xlane.xlu0 %580
    %v582 = vsub.f32 %v577, %v581
    %v583 = vmul.f32 %v582, 1.442695
    %v584 = vpow.pop %v583
    %v585 = vsel %vm578, %v584, 0.0
    %586 = vadd.xlane.f32.xlu0 %v585
    %v587 = vpop.xlane.xlu0 %586
    %v588 = vrcp.pop %v587
    %v589 = vmul.f32 %v584, %v588
    %590 = vrot.lane.b32.xlu0 %v498, 32
    %v591 = vpop.permute.xlu0 %590
    %vm592 = vcmask 39936
    %v594 = vsel %vm592, %v589, 0
    %vm596 = vcmask 1044480
    %v597 = vsel %vm596, %v591, 0
    %599 = vmatprep.subr.mxu0 0.0
    %600 = vmatpush1.msra.mxu0 %v597
    %601 = vmatprep.subr.mxu0 0.0
    %602 = vmatpush1.msra.mxu0 0.0
    %603 = vmatprep.subr.mxu0 0.0
    %604 = vmatpush1.msra.mxu0 0.0
    %605 = vmatprep.subr.mxu0 0.0
    %606 = vmatpush1.msra.mxu0 0.0
    %607 = vmatprep.subr.mxu0 0.0
    %608 = vmatpush1.msra.mxu0 0.0
    %609 = vmatprep.subr.mxu0 0.0
    %610 = vmatpush1.msra.mxu0 0.0
    %611 = vmatprep.subr.mxu0 0.0
    %612 = vmatpush1.msra.mxu0 0.0
    %613 = vmatprep.subr.mxu0 0.0
    %614 = vmatpush1.msra.mxu0 0.0
    %615 = vmatprep.subr.mxu0 0.0
    %616 = vmatpush1.msra.mxu0 0.0
    %617 = vmatprep.subr.mxu0 0.0
    %618 = vmatpush1.msra.mxu0 0.0
    %619 = vmatprep.subr.mxu0 0.0
    %620 = vmatpush1.msra.mxu0 0.0
    %621 = vmatprep.subr.mxu0 0.0
    %622 = vmatpush1.msra.mxu0 0.0
    %623 = vmatprep.subr.mxu0 0.0
    %624 = vmatpush1.msra.mxu0 0.0
    %625 = vmatprep.subr.mxu0 0.0
    %626 = vmatpush1.msra.mxu0 0.0
    %627 = vmatprep.subr.mxu0 0.0
    %628 = vmatpush1.msra.mxu0 0.0
    %629 = vmatprep.subr.mxu0 0.0
    %630 = vmatpush1.msra.mxu0 0.0
    %631 = vmatprep.subr.mxu0 0.0
    %632 = vmatpush1.msra.mxu0 0.0
    %633 = vmatprep.subr.mxu0 0.0
    %634 = vmatpush1.msra.mxu0 0.0
    %635 = vmatprep.subr.mxu0 0.0
    %636 = vmatpush1.msra.mxu0 0.0
    %637 = vmatprep.subr.mxu0 0.0
    %638 = vmatpush1.msra.mxu0 0.0
    %639 = vmatprep.subr.mxu0 0.0
    %640 = vmatpush1.msra.mxu0 0.0
    %641 = vmatprep.subr.mxu0 0.0
    %642 = vmatpush1.msra.mxu0 0.0
    %643 = vmatprep.subr.mxu0 0.0
    %644 = vmatpush1.msra.mxu0 0.0
    %645 = vmatprep.subr.mxu0 0.0
    %646 = vmatpush1.msra.mxu0 0.0
    %647 = vmatprep.subr.mxu0 0.0
    %648 = vmatpush1.msra.mxu0 0.0
    %649 = vmatprep.subr.mxu0 0.0
    %650 = vmatpush1.msra.mxu0 0.0
    %651 = vmatprep.subr.mxu0 0.0
    %652 = vmatpush1.msra.mxu0 0.0
    %653 = vmatprep.subr.mxu0 0.0
    %654 = vmatpush1.msra.mxu0 0.0
    %655 = vmatprep.subr.mxu0 0.0
    %656 = vmatpush1.msra.mxu0 0.0
    %657 = vmatprep.subr.mxu0 0.0
    %658 = vmatpush1.msra.mxu0 0.0
    %659 = vmatprep.subr.mxu0 0.0
    %660 = vmatpush1.msra.mxu0 0.0
    %661 = vmatprep.subr.mxu0 0.0
    %662 = vmatpush1.msra.mxu0 0.0
    %663 = vmatprep.mubr.f32.mxu0 0.0
    %664 = vmatmul.mubr.f32.gmra.mrb[0].mxu0 %v594
    %v665 = vpop.f32.mrb[0].mxu0
    %v666 = vadd.f32 0.0, %v665
    %v667 = vpop.f32.mrb[0].mxu0
    %668 = vdwg.mxu0
    %v669 = vld [vmem:[%s17] sm:$0xff]
    %v670 = vld [vmem:[%s17 + $0x8] sm:$0xff]
    %v671 = vld [vmem:[%s17 + $0x10] sm:$0xff]
    %v672 = vld [vmem:[%s17 + $0x18] sm:$0xff]
    %673 = vrot.lane.b32.xlu0 %v498, 96
    %v674 = vpop.permute.xlu0 %673
    %v675 = vsel %vm502, %v674, 0
    %677 = vmatprep.subr.mxu0 0.0
    %678 = vmatpush1.xpose.msra.mxu0 %v505
    %679 = vmatprep.subr.mxu0 0.0
    %680 = vmatpush1.xpose.msra.mxu0 0.0
    %681 = vmatprep.subr.mxu0 0.0
    %682 = vmatpush1.xpose.msra.mxu0 0.0
    %683 = vmatprep.subr.mxu0 0.0
    %684 = vmatpush1.xpose.msra.mxu0 0.0
    %685 = vmatprep.subr.mxu0 0.0
    %686 = vmatpush1.xpose.msra.mxu0 0.0
    %687 = vmatprep.subr.mxu0 0.0
    %688 = vmatpush1.xpose.msra.mxu0 0.0
    %689 = vmatprep.subr.mxu0 0.0
    %690 = vmatpush1.xpose.msra.mxu0 0.0
    %691 = vmatprep.subr.mxu0 0.0
    %692 = vmatpush1.xpose.msra.mxu0 0.0
    %693 = vmatprep.subr.mxu0 0.0
    %694 = vmatpush1.xpose.msra.mxu0 0.0
    %695 = vmatprep.subr.mxu0 0.0
    %696 = vmatpush1.xpose.msra.mxu0 0.0
    %697 = vmatprep.subr.mxu0 0.0
    %698 = vmatpush1.xpose.msra.mxu0 0.0
    %699 = vmatprep.subr.mxu0 0.0
    %700 = vmatpush1.xpose.msra.mxu0 0.0
    %701 = vmatprep.subr.mxu0 0.0
    %702 = vmatpush1.xpose.msra.mxu0 0.0
    %703 = vmatprep.subr.mxu0 0.0
    %704 = vmatpush1.xpose.msra.mxu0 0.0
    %705 = vmatprep.subr.mxu0 0.0
    %706 = vmatpush1.xpose.msra.mxu0 0.0
    %707 = vmatprep.subr.mxu0 0.0
    %708 = vmatpush1.xpose.msra.mxu0 0.0
    %709 = vmatprep.subr.mxu0 0.0
    %710 = vmatpush1.xpose.msra.mxu0 0.0
    %711 = vmatprep.subr.mxu0 0.0
    %712 = vmatpush1.xpose.msra.mxu0 0.0
    %713 = vmatprep.subr.mxu0 0.0
    %714 = vmatpush1.xpose.msra.mxu0 0.0
    %715 = vmatprep.subr.mxu0 0.0
    %716 = vmatpush1.xpose.msra.mxu0 0.0
    %717 = vmatprep.subr.mxu0 0.0
    %718 = vmatpush1.xpose.msra.mxu0 0.0
    %719 = vmatprep.subr.mxu0 0.0
    %720 = vmatpush1.xpose.msra.mxu0 0.0
    %721 = vmatprep.subr.mxu0 0.0
    %722 = vmatpush1.xpose.msra.mxu0 0.0
    %723 = vmatprep.subr.mxu0 0.0
    %724 = vmatpush1.xpose.msra.mxu0 0.0
    %725 = vmatprep.subr.mxu0 0.0
    %726 = vmatpush1.xpose.msra.mxu0 0.0
    %727 = vmatprep.subr.mxu0 0.0
    %728 = vmatpush1.xpose.msra.mxu0 0.0
    %729 = vmatprep.subr.mxu0 0.0
    %730 = vmatpush1.xpose.msra.mxu0 0.0
    %731 = vmatprep.subr.mxu0 0.0
    %732 = vmatpush1.xpose.msra.mxu0 0.0
    %733 = vmatprep.subr.mxu0 0.0
    %734 = vmatpush1.xpose.msra.mxu0 0.0
    %735 = vmatprep.subr.mxu0 0.0
    %736 = vmatpush1.xpose.msra.mxu0 0.0
    %737 = vmatprep.subr.mxu0 0.0
    %738 = vmatpush1.xpose.msra.mxu0 0.0
    %739 = vmatprep.subr.mxu0 0.0
    %740 = vmatpush1.xpose.msra.mxu0 0.0
    %741 = vmatprep.mubr.f32.mxu0 0.0
    %742 = vmatmul.mubr.f32.gmra.mrb[0].mxu0 %v675
    %v743 = vpop.f32.mrb[0].mxu0
    %v744 = vadd.f32 0.0, %v743
    %v745 = vpop.f32.mrb[0].mxu0
    %746 = vdwg.mxu0
    %v747 = vmul.f32 %v744, 0.17677669
    %v748 = vsel %vm578, %v747, -inf
    %749 = vmax.xlane.f32.xlu0 %v748
    %v750 = vpop.xlane.xlu0 %749
    %v751 = vsub.f32 %v747, %v750
    %v752 = vmul.f32 %v751, 1.442695
    %v753 = vpow.pop %v752
    %v754 = vsel %vm578, %v753, 0.0
    %755 = vadd.xlane.f32.xlu0 %v754
    %v756 = vpop.xlane.xlu0 %755
    %v757 = vrcp.pop %v756
    %v758 = vmul.f32 %v753, %v757
    %v760 = vsel %vm592, %v758, 0
    %762 = vmatprep.subr.mxu0 0.0
    %763 = vmatpush1.msra.mxu0 %v597
    %764 = vmatprep.subr.mxu0 0.0
    %765 = vmatpush1.msra.mxu0 0.0
    %766 = vmatprep.subr.mxu0 0.0
    %767 = vmatpush1.msra.mxu0 0.0
    %768 = vmatprep.subr.mxu0 0.0
    %769 = vmatpush1.msra.mxu0 0.0
    %770 = vmatprep.subr.mxu0 0.0
    %771 = vmatpush1.msra.mxu0 0.0
    %772 = vmatprep.subr.mxu0 0.0
    %773 = vmatpush1.msra.mxu0 0.0
    %774 = vmatprep.subr.mxu0 0.0
    %775 = vmatpush1.msra.mxu0 0.0
    %776 = vmatprep.subr.mxu0 0.0
    %777 = vmatpush1.msra.mxu0 0.0
    %778 = vmatprep.subr.mxu0 0.0
    %779 = vmatpush1.msra.mxu0 0.0
    %780 = vmatprep.subr.mxu0 0.0
    %781 = vmatpush1.msra.mxu0 0.0
    %782 = vmatprep.subr.mxu0 0.0
    %783 = vmatpush1.msra.mxu0 0.0
    %784 = vmatprep.subr.mxu0 0.0
    %785 = vmatpush1.msra.mxu0 0.0
    %786 = vmatprep.subr.mxu0 0.0
    %787 = vmatpush1.msra.mxu0 0.0
    %788 = vmatprep.subr.mxu0 0.0
    %789 = vmatpush1.msra.mxu0 0.0
    %790 = vmatprep.subr.mxu0 0.0
    %791 = vmatpush1.msra.mxu0 0.0
    %792 = vmatprep.subr.mxu0 0.0
    %793 = vmatpush1.msra.mxu0 0.0
    %794 = vmatprep.subr.mxu0 0.0
    %795 = vmatpush1.msra.mxu0 0.0
    %796 = vmatprep.subr.mxu0 0.0
    %797 = vmatpush1.msra.mxu0 0.0
    %798 = vmatprep.subr.mxu0 0.0
    %799 = vmatpush1.msra.mxu0 0.0
    %800 = vmatprep.subr.mxu0 0.0
    %801 = vmatpush1.msra.mxu0 0.0
    %802 = vmatprep.subr.mxu0 0.0
    %803 = vmatpush1.msra.mxu0 0.0
    %804 = vmatprep.subr.mxu0 0.0
    %805 = vmatpush1.msra.mxu0 0.0
    %806 = vmatprep.subr.mxu0 0.0
    %807 = vmatpush1.msra.mxu0 0.0
    %808 = vmatprep.subr.mxu0 0.0
    %809 = vmatpush1.msra.mxu0 0.0
    %810 = vmatprep.subr.mxu0 0.0
    %811 = vmatpush1.msra.mxu0 0.0
    %812 = vmatprep.subr.mxu0 0.0
    %813 = vmatpush1.msra.mxu0 0.0
    %814 = vmatprep.subr.mxu0 0.0
    %815 = vmatpush1.msra.mxu0 0.0
    %816 = vmatprep.subr.mxu0 0.0
    %817 = vmatpush1.msra.mxu0 0.0
    %818 = vmatprep.subr.mxu0 0.0
    %819 = vmatpush1.msra.mxu0 0.0
    %820 = vmatprep.subr.mxu0 0.0
    %821 = vmatpush1.msra.mxu0 0.0
    %822 = vmatprep.subr.mxu0 0.0
    %823 = vmatpush1.msra.mxu0 0.0
    %824 = vmatprep.subr.mxu0 0.0
    %825 = vmatpush1.msra.mxu0 0.0
    %826 = vmatprep.mubr.f32.mxu0 0.0
    %827 = vmatmul.mubr.f32.gmra.mrb[0].mxu0 %v760
    %v828 = vpop.f32.mrb[0].mxu0
    %v829 = vadd.f32 0.0, %v828
    %v830 = vpop.f32.mrb[0].mxu0
    %831 = vdwg.mxu0
    %v832 = vld [vmem:[%s17 + $0x20] sm:$0xff]
    %v833 = vld [vmem:[%s17 + $0x28] sm:$0xff]
    %v834 = vld [vmem:[%s17 + $0x30] sm:$0xff]
    %v835 = vld [vmem:[%s17 + $0x38] sm:$0xff]
    %v837 = vsel %vm502, %v829, 0
    %839 = vmatprep.subr.mxu0 0.0
    %840 = vmatpush1.msra.mxu0 %v832
    %841 = vmatprep.subr.mxu0 0.0
    %842 = vmatpush1.msra.mxu0 %v833
    %843 = vmatprep.subr.mxu0 0.0
    %844 = vmatpush1.msra.mxu0 %v834
    %845 = vmatprep.subr.mxu0 0.0
    %846 = vmatpush1.msra.mxu0 %v835
    %847 = vmatprep.subr.mxu0 0.0
    %848 = vmatpush1.msra.mxu0 0.0
    %849 = vmatprep.subr.mxu0 0.0
    %850 = vmatpush1.msra.mxu0 0.0
    %851 = vmatprep.subr.mxu0 0.0
    %852 = vmatpush1.msra.mxu0 0.0
    %853 = vmatprep.subr.mxu0 0.0
    %854 = vmatpush1.msra.mxu0 0.0
    %855 = vmatprep.subr.mxu0 0.0
    %856 = vmatpush1.msra.mxu0 0.0
    %857 = vmatprep.subr.mxu0 0.0
    %858 = vmatpush1.msra.mxu0 0.0
    %859 = vmatprep.subr.mxu0 0.0
    %860 = vmatpush1.msra.mxu0 0.0
    %861 = vmatprep.subr.mxu0 0.0
    %862 = vmatpush1.msra.mxu0 0.0
    %863 = vmatprep.subr.mxu0 0.0
    %864 = vmatpush1.msra.mxu0 0.0
    %865 = vmatprep.subr.mxu0 0.0
    %866 = vmatpush1.msra.mxu0 0.0
    %867 = vmatprep.subr.mxu0 0.0
    %868 = vmatpush1.msra.mxu0 0.0
    %869 = vmatprep.subr.mxu0 0.0
    %870 = vmatpush1.msra.mxu0 0.0
    %871 = vmatprep.subr.mxu0 0.0
    %872 = vmatpush1.msra.mxu0 0.0
    %873 = vmatprep.subr.mxu0 0.0
    %874 = vmatpush1.msra.mxu0 0.0
    %875 = vmatprep.subr.mxu0 0.0
    %876 = vmatpush1.msra.mxu0 0.0
    %877 = vmatprep.subr.mxu0 0.0
    %878 = vmatpush1.msra.mxu0 0.0
    %879 = vmatprep.subr.mxu0 0.0
    %880 = vmatpush1.msra.mxu0 0.0
    %881 = vmatprep.subr.mxu0 0.0
    %882 = vmatpush1.msra.mxu0 0.0
    %883 = vmatprep.subr.mxu0 0.0
    %884 = vmatpush1.msra.mxu0 0.0
    %885 = vmatprep.subr.mxu0 0.0
    %886 = vmatpush1.msra.mxu0 0.0
    %887 = vmatprep.subr.mxu0 0.0
    %888 = vmatpush1.msra.mxu0 0.0
    %889 = vmatprep.subr.mxu0 0.0
    %890 = vmatpush1.msra.mxu0 0.0
    %891 = vmatprep.subr.mxu0 0.0
    %892 = vmatpush1.msra.mxu0 0.0
    %893 = vmatprep.subr.mxu0 0.0
    %894 = vmatpush1.msra.mxu0 0.0
    %895 = vmatprep.subr.mxu0 0.0
    %896 = vmatpush1.msra.mxu0 0.0
    %897 = vmatprep.subr.mxu0 0.0
    %898 = vmatpush1.msra.mxu0 0.0
    %899 = vmatprep.subr.mxu0 0.0
    %900 = vmatpush1.msra.mxu0 0.0
    %901 = vmatprep.subr.mxu0 0.0
    %902 = vmatpush1.msra.mxu0 0.0
    %903 = vmatprep.mubr.f32.mxu0 0.0
    %904 = vmatmul.mubr.f32.gmra.mrb[0].mxu0 %v837
    %v905 = vpop.f32.mrb[0].mxu0
    %v906 = vadd.f32 0.0, %v905
    %v907 = vpop.f32.mrb[0].mxu0
    %908 = vdwg.mxu0
    %v910 = vsel %vm502, %v666, 0
    %912 = vmatprep.subr.mxu0 0.0
    %913 = vmatpush1.msra.mxu0 %v669
    %914 = vmatprep.subr.mxu0 0.0
    %915 = vmatpush1.msra.mxu0 %v670
    %916 = vmatprep.subr.mxu0 0.0
    %917 = vmatpush1.msra.mxu0 %v671
    %918 = vmatprep.subr.mxu0 0.0
    %919 = vmatpush1.msra.mxu0 %v672
    %920 = vmatprep.subr.mxu0 0.0
    %921 = vmatpush1.msra.mxu0 0.0
    %922 = vmatprep.subr.mxu0 0.0
    %923 = vmatpush1.msra.mxu0 0.0
    %924 = vmatprep.subr.mxu0 0.0
    %925 = vmatpush1.msra.mxu0 0.0
    %926 = vmatprep.subr.mxu0 0.0
    %927 = vmatpush1.msra.mxu0 0.0
    %928 = vmatprep.subr.mxu0 0.0
    %929 = vmatpush1.msra.mxu0 0.0
    %930 = vmatprep.subr.mxu0 0.0
    %931 = vmatpush1.msra.mxu0 0.0
    %932 = vmatprep.subr.mxu0 0.0
    %933 = vmatpush1.msra.mxu0 0.0
    %934 = vmatprep.subr.mxu0 0.0
    %935 = vmatpush1.msra.mxu0 0.0
    %936 = vmatprep.subr.mxu0 0.0
    %937 = vmatpush1.msra.mxu0 0.0
    %938 = vmatprep.subr.mxu0 0.0
    %939 = vmatpush1.msra.mxu0 0.0
    %940 = vmatprep.subr.mxu0 0.0
    %941 = vmatpush1.msra.mxu0 0.0
    %942 = vmatprep.subr.mxu0 0.0
    %943 = vmatpush1.msra.mxu0 0.0
    %944 = vmatprep.subr.mxu0 0.0
    %945 = vmatpush1.msra.mxu0 0.0
    %946 = vmatprep.subr.mxu0 0.0
    %947 = vmatpush1.msra.mxu0 0.0
    %948 = vmatprep.subr.mxu0 0.0
    %949 = vmatpush1.msra.mxu0 0.0
    %950 = vmatprep.subr.mxu0 0.0
    %951 = vmatpush1.msra.mxu0 0.0
    %952 = vmatprep.subr.mxu0 0.0
    %953 = vmatpush1.msra.mxu0 0.0
    %954 = vmatprep.subr.mxu0 0.0
    %955 = vmatpush1.msra.mxu0 0.0
    %956 = vmatprep.subr.mxu0 0.0
    %957 = vmatpush1.msra.mxu0 0.0
    %958 = vmatprep.subr.mxu0 0.0
    %959 = vmatpush1.msra.mxu0 0.0
    %960 = vmatprep.subr.mxu0 0.0
    %961 = vmatpush1.msra.mxu0 0.0
    %962 = vmatprep.subr.mxu0 0.0
    %963 = vmatpush1.msra.mxu0 0.0
    %964 = vmatprep.subr.mxu0 0.0
    %965 = vmatpush1.msra.mxu0 0.0
    %966 = vmatprep.subr.mxu0 0.0
    %967 = vmatpush1.msra.mxu0 0.0
    %968 = vmatprep.subr.mxu0 0.0
    %969 = vmatpush1.msra.mxu0 0.0
    %970 = vmatprep.subr.mxu0 0.0
    %971 = vmatpush1.msra.mxu0 0.0
    %972 = vmatprep.subr.mxu0 0.0
    %973 = vmatpush1.msra.mxu0 0.0
    %974 = vmatprep.subr.mxu0 0.0
    %975 = vmatpush1.msra.mxu0 0.0
    %976 = vmatprep.mubr.f32.mxu0 0.0
    %977 = vmatmul.mubr.f32.gmra.mrb[0].mxu0 %v910
    %v978 = vpop.f32.mrb[0].mxu0
    %v979 = vadd.f32 %v906, %v978
    %v980 = vpop.f32.mrb[0].mxu0
    %981 = vdwg.mxu0
    %v982 = vld [vmem:[#allocation2] sm:$0x1f]
    %v983 = vadd.f32 %v982, %v979
    %v984 = vld [vmem:[%s19] sm:$0x1]
    %v986 = vlaneseq
    %v987 = vshrl.u32 %v986, 7
    %v988 = vsub.s32 0, %v987
    %v989 = vrot.slane %v984, %v988
    %v991 = vadd.f32 %v983, %v989
    %vm992 = vcmask 520192
    %993 = vst.msk [vmem:[#allocation2] sm:$0x1f] %vm992, %v991
    %v994 = vld [vmem:[#allocation3 + $0x5] sm:$0x1f]
    %996 = vrot.lane.b32.xlu0 %v994, 64
    %v997 = vpop.permute.xlu0 %996
    %v998 = vsel %vm502, %v994, 0
    %v1000 = vsel %vm502, %v997, 0
    %1002 = vmatprep.subr.mxu0 0.0
    %1003 = vmatpush1.xpose.msra.mxu0 %v1000
    %1004 = vmatprep.subr.mxu0 0.0
    %1005 = vmatpush1.xpose.msra.mxu0 0.0
    %1006 = vmatprep.subr.mxu0 0.0
    %1007 = vmatpush1.xpose.msra.mxu0 0.0
    %1008 = vmatprep.subr.mxu0 0.0
    %1009 = vmatpush1.xpose.msra.mxu0 0.0
    %1010 = vmatprep.subr.mxu0 0.0
    %1011 = vmatpush1.xpose.msra.mxu0 0.0
    %1012 = vmatprep.subr.mxu0 0.0
    %1013 = vmatpush1.xpose.msra.mxu0 0.0
    %1014 = vmatprep.subr.mxu0 0.0
    %1015 = vmatpush1.xpose.msra.mxu0 0.0
    %1016 = vmatprep.subr.mxu0 0.0
    %1017 = vmatpush1.xpose.msra.mxu0 0.0
    %1018 = vmatprep.subr.mxu0 0.0
    %1019 = vmatpush1.xpose.msra.mxu0 0.0
    %1020 = vmatprep.subr.mxu0 0.0
    %1021 = vmatpush1.xpose.msra.mxu0 0.0
    %1022 = vmatprep.subr.mxu0 0.0
    %1023 = vmatpush1.xpose.msra.mxu0 0.0
    %1024 = vmatprep.subr.mxu0 0.0
    %1025 = vmatpush1.xpose.msra.mxu0 0.0
    %1026 = vmatprep.subr.mxu0 0.0
    %1027 = vmatpush1.xpose.msra.mxu0 0.0
    %1028 = vmatprep.subr.mxu0 0.0
    %1029 = vmatpush1.xpose.msra.mxu0 0.0
    %1030 = vmatprep.subr.mxu0 0.0
    %1031 = vmatpush1.xpose.msra.mxu0 0.0
    %1032 = vmatprep.subr.mxu0 0.0
    %1033 = vmatpush1.xpose.msra.mxu0 0.0
    %1034 = vmatprep.subr.mxu0 0.0
    %1035 = vmatpush1.xpose.msra.mxu0 0.0
    %1036 = vmatprep.subr.mxu0 0.0
    %1037 = vmatpush1.xpose.msra.mxu0 0.0
    %1038 = vmatprep.subr.mxu0 0.0
    %1039 = vmatpush1.xpose.msra.mxu0 0.0
    %1040 = vmatprep.subr.mxu0 0.0
    %1041 = vmatpush1.xpose.msra.mxu0 0.0
    %1042 = vmatprep.subr.mxu0 0.0
    %1043 = vmatpush1.xpose.msra.mxu0 0.0
    %1044 = vmatprep.subr.mxu0 0.0
    %1045 = vmatpush1.xpose.msra.mxu0 0.0
    %1046 = vmatprep.subr.mxu0 0.0
    %1047 = vmatpush1.xpose.msra.mxu0 0.0
    %1048 = vmatprep.subr.mxu0 0.0
    %1049 = vmatpush1.xpose.msra.mxu0 0.0
    %1050 = vmatprep.subr.mxu0 0.0
    %1051 = vmatpush1.xpose.msra.mxu0 0.0
    %1052 = vmatprep.subr.mxu0 0.0
    %1053 = vmatpush1.xpose.msra.mxu0 0.0
    %1054 = vmatprep.subr.mxu0 0.0
    %1055 = vmatpush1.xpose.msra.mxu0 0.0
    %1056 = vmatprep.subr.mxu0 0.0
    %1057 = vmatpush1.xpose.msra.mxu0 0.0
    %1058 = vmatprep.subr.mxu0 0.0
    %1059 = vmatpush1.xpose.msra.mxu0 0.0
    %1060 = vmatprep.subr.mxu0 0.0
    %1061 = vmatpush1.xpose.msra.mxu0 0.0
    %1062 = vmatprep.subr.mxu0 0.0
    %1063 = vmatpush1.xpose.msra.mxu0 0.0
    %1064 = vmatprep.subr.mxu0 0.0
    %1065 = vmatpush1.xpose.msra.mxu0 0.0
    %1066 = vmatprep.mubr.f32.mxu0 0.0
    %1067 = vmatmul.mubr.f32.gmra.mrb[0].mxu0 %v998
    %v1068 = vpop.f32.mrb[0].mxu0
    %v1069 = vadd.f32 0.0, %v1068
    %v1070 = vpop.f32.mrb[0].mxu0
    %1071 = vdwg.mxu0
    %v1072 = vmul.f32 %v1069, 0.17677669
    %v1073 = vsel %vm578, %v1072, -inf
    %1074 = vmax.xlane.f32.xlu0 %v1073
    %v1075 = vpop.xlane.xlu0 %1074
    %v1076 = vsub.f32 %v1072, %v1075
    %v1077 = vmul.f32 %v1076, 1.442695
    %v1078 = vpow.pop %v1077
    %v1079 = vsel %vm578, %v1078, 0.0
    %1080 = vadd.xlane.f32.xlu0 %v1079
    %v1081 = vpop.xlane.xlu0 %1080
    %v1082 = vrcp.pop %v1081
    %v1083 = vmul.f32 %v1078, %v1082
    %1084 = vrot.lane.b32.xlu0 %v994, 32
    %v1085 = vpop.permute.xlu0 %1084
    %v1087 = vsel %vm592, %v1083, 0
    %v1089 = vsel %vm596, %v1085, 0
    %1091 = vmatprep.subr.mxu0 0.0
    %1092 = vmatpush1.msra.mxu0 %v1089
    %1093 = vmatprep.subr.mxu0 0.0
    %1094 = vmatpush1.msra.mxu0 0.0
    %1095 = vmatprep.subr.mxu0 0.0
    %1096 = vmatpush1.msra.mxu0 0.0
    %1097 = vmatprep.subr.mxu0 0.0
    %1098 = vmatpush1.msra.mxu0 0.0
    %1099 = vmatprep.subr.mxu0 0.0
    %1100 = vmatpush1.msra.mxu0 0.0
    %1101 = vmatprep.subr.mxu0 0.0
    %1102 = vmatpush1.msra.mxu0 0.0
    %1103 = vmatprep.subr.mxu0 0.0
    %1104 = vmatpush1.msra.mxu0 0.0
    %1105 = vmatprep.subr.mxu0 0.0
    %1106 = vmatpush1.msra.mxu0 0.0
    %1107 = vmatprep.subr.mxu0 0.0
    %1108 = vmatpush1.msra.mxu0 0.0
    %1109 = vmatprep.subr.mxu0 0.0
    %1110 = vmatpush1.msra.mxu0 0.0
    %1111 = vmatprep.subr.mxu0 0.0
    %1112 = vmatpush1.msra.mxu0 0.0
    %1113 = vmatprep.subr.mxu0 0.0
    %1114 = vmatpush1.msra.mxu0 0.0
    %1115 = vmatprep.subr.mxu0 0.0
    %1116 = vmatpush1.msra.mxu0 0.0
    %1117 = vmatprep.subr.mxu0 0.0
    %1118 = vmatpush1.msra.mxu0 0.0
    %1119 = vmatprep.subr.mxu0 0.0
    %1120 = vmatpush1.msra.mxu0 0.0
    %1121 = vmatprep.subr.mxu0 0.0
    %1122 = vmatpush1.msra.mxu0 0.0
    %1123 = vmatprep.subr.mxu0 0.0
    %1124 = vmatpush1.msra.mxu0 0.0
    %1125 = vmatprep.subr.mxu0 0.0
    %1126 = vmatpush1.msra.mxu0 0.0
    %1127 = vmatprep.subr.mxu0 0.0
    %1128 = vmatpush1.msra.mxu0 0.0
    %1129 = vmatprep.subr.mxu0 0.0
    %1130 = vmatpush1.msra.mxu0 0.0
    %1131 = vmatprep.subr.mxu0 0.0
    %1132 = vmatpush1.msra.mxu0 0.0
    %1133 = vmatprep.subr.mxu0 0.0
    %1134 = vmatpush1.msra.mxu0 0.0
    %1135 = vmatprep.subr.mxu0 0.0
    %1136 = vmatpush1.msra.mxu0 0.0
    %1137 = vmatprep.subr.mxu0 0.0
    %1138 = vmatpush1.msra.mxu0 0.0
    %1139 = vmatprep.subr.mxu0 0.0
    %1140 = vmatpush1.msra.mxu0 0.0
    %1141 = vmatprep.subr.mxu0 0.0
    %1142 = vmatpush1.msra.mxu0 0.0
    %1143 = vmatprep.subr.mxu0 0.0
    %1144 = vmatpush1.msra.mxu0 0.0
    %1145 = vmatprep.subr.mxu0 0.0
    %1146 = vmatpush1.msra.mxu0 0.0
    %1147 = vmatprep.subr.mxu0 0.0
    %1148 = vmatpush1.msra.mxu0 0.0
    %1149 = vmatprep.subr.mxu0 0.0
    %1150 = vmatpush1.msra.mxu0 0.0
    %1151 = vmatprep.subr.mxu0 0.0
    %1152 = vmatpush1.msra.mxu0 0.0
    %1153 = vmatprep.subr.mxu0 0.0
    %1154 = vmatpush1.msra.mxu0 0.0
    %1155 = vmatprep.mubr.f32.mxu0 0.0
    %1156 = vmatmul.mubr.f32.gmra.mrb[0].mxu0 %v1087
    %v1157 = vpop.f32.mrb[0].mxu0
    %v1158 = vadd.f32 0.0, %v1157
    %v1159 = vpop.f32.mrb[0].mxu0
    %1160 = vdwg.mxu0
    %v1161 = vld [vmem:[%s17] sm:$0xff]
    %v1162 = vld [vmem:[%s17 + $0x8] sm:$0xff]
    %v1163 = vld [vmem:[%s17 + $0x10] sm:$0xff]
    %v1164 = vld [vmem:[%s17 + $0x18] sm:$0xff]
    %1165 = vrot.lane.b32.xlu0 %v994, 96
    %v1166 = vpop.permute.xlu0 %1165
    %v1167 = vsel %vm502, %v1166, 0
    %1169 = vmatprep.subr.mxu0 0.0
    %1170 = vmatpush1.xpose.msra.mxu0 %v1000
    %1171 = vmatprep.subr.mxu0 0.0
    %1172 = vmatpush1.xpose.msra.mxu0 0.0
    %1173 = vmatprep.subr.mxu0 0.0
    %1174 = vmatpush1.xpose.msra.mxu0 0.0
    %1175 = vmatprep.subr.mxu0 0.0
    %1176 = vmatpush1.xpose.msra.mxu0 0.0
    %1177 = vmatprep.subr.mxu0 0.0
    %1178 = vmatpush1.xpose.msra.mxu0 0.0
    %1179 = vmatprep.subr.mxu0 0.0
    %1180 = vmatpush1.xpose.msra.mxu0 0.0
    %1181 = vmatprep.subr.mxu0 0.0
    %1182 = vmatpush1.xpose.msra.mxu0 0.0
    %1183 = vmatprep.subr.mxu0 0.0
    %1184 = vmatpush1.xpose.msra.mxu0 0.0
    %1185 = vmatprep.subr.mxu0 0.0
    %1186 = vmatpush1.xpose.msra.mxu0 0.0
    %1187 = vmatprep.subr.mxu0 0.0
    %1188 = vmatpush1.xpose.msra.mxu0 0.0
    %1189 = vmatprep.subr.mxu0 0.0
    %1190 = vmatpush1.xpose.msra.mxu0 0.0
    %1191 = vmatprep.subr.mxu0 0.0
    %1192 = vmatpush1.xpose.msra.mxu0 0.0
    %1193 = vmatprep.subr.mxu0 0.0
    %1194 = vmatpush1.xpose.msra.mxu0 0.0
    %1195 = vmatprep.subr.mxu0 0.0
    %1196 = vmatpush1.xpose.msra.mxu0 0.0
    %1197 = vmatprep.subr.mxu0 0.0
    %1198 = vmatpush1.xpose.msra.mxu0 0.0
    %1199 = vmatprep.subr.mxu0 0.0
    %1200 = vmatpush1.xpose.msra.mxu0 0.0
    %1201 = vmatprep.subr.mxu0 0.0
    %1202 = vmatpush1.xpose.msra.mxu0 0.0
    %1203 = vmatprep.subr.mxu0 0.0
    %1204 = vmatpush1.xpose.msra.mxu0 0.0
    %1205 = vmatprep.subr.mxu0 0.0
    %1206 = vmatpush1.xpose.msra.mxu0 0.0
    %1207 = vmatprep.subr.mxu0 0.0
    %1208 = vmatpush1.xpose.msra.mxu0 0.0
    %1209 = vmatprep.subr.mxu0 0.0
    %1210 = vmatpush1.xpose.msra.mxu0 0.0
    %1211 = vmatprep.subr.mxu0 0.0
    %1212 = vmatpush1.xpose.msra.mxu0 0.0
    %1213 = vmatprep.subr.mxu0 0.0
    %1214 = vmatpush1.xpose.msra.mxu0 0.0
    %1215 = vmatprep.subr.mxu0 0.0
    %1216 = vmatpush1.xpose.msra.mxu0 0.0
    %1217 = vmatprep.subr.mxu0 0.0
    %1218 = vmatpush1.xpose.msra.mxu0 0.0
    %1219 = vmatprep.subr.mxu0 0.0
    %1220 = vmatpush1.xpose.msra.mxu0 0.0
    %1221 = vmatprep.subr.mxu0 0.0
    %1222 = vmatpush1.xpose.msra.mxu0 0.0
    %1223 = vmatprep.subr.mxu0 0.0
    %1224 = vmatpush1.xpose.msra.mxu0 0.0
    %1225 = vmatprep.subr.mxu0 0.0
    %1226 = vmatpush1.xpose.msra.mxu0 0.0
    %1227 = vmatprep.subr.mxu0 0.0
    %1228 = vmatpush1.xpose.msra.mxu0 0.0
    %1229 = vmatprep.subr.mxu0 0.0
    %1230 = vmatpush1.xpose.msra.mxu0 0.0
    %1231 = vmatprep.subr.mxu0 0.0
    %1232 = vmatpush1.xpose.msra.mxu0 0.0
    %1233 = vmatprep.mubr.f32.mxu0 0.0
    %1234 = vmatmul.mubr.f32.gmra.mrb[0].mxu0 %v1167
    %v1235 = vpop.f32.mrb[0].mxu0
    %v1236 = vadd.f32 0.0, %v1235
    %v1237 = vpop.f32.mrb[0].mxu0
    %1238 = vdwg.mxu0
    %v1239 = vmul.f32 %v1236, 0.17677669
    %v1240 = vsel %vm578, %v1239, -inf
    %1241 = vmax.xlane.f32.xlu0 %v1240
    %v1242 = vpop.xlane.xlu0 %1241
    %v1243 = vsub.f32 %v1239, %v1242
    %v1244 = vmul.f32 %v1243, 1.442695
    %v1245 = vpow.pop %v1244
    %v1246 = vsel %vm578, %v1245, 0.0
    %1247 = vadd.xlane.f32.xlu0 %v1246
    %v1248 = vpop.xlane.xlu0 %1247
    %v1249 = vrcp.pop %v1248
    %v1250 = vmul.f32 %v1245, %v1249
    %v1252 = vsel %vm592, %v1250, 0
    %1254 = vmatprep.subr.mxu0 0.0
    %1255 = vmatpush1.msra.mxu0 %v1089
    %1256 = vmatprep.subr.mxu0 0.0
    %1257 = vmatpush1.msra.mxu0 0.0
    %1258 = vmatprep.subr.mxu0 0.0
    %1259 = vmatpush1.msra.mxu0 0.0
    %1260 = vmatprep.subr.mxu0 0.0
    %1261 = vmatpush1.msra.mxu0 0.0
    %1262 = vmatprep.subr.mxu0 0.0
    %1263 = vmatpush1.msra.mxu0 0.0
    %1264 = vmatprep.subr.mxu0 0.0
    %1265 = vmatpush1.msra.mxu0 0.0
    %1266 = vmatprep.subr.mxu0 0.0
    %1267 = vmatpush1.msra.mxu0 0.0
    %1268 = vmatprep.subr.mxu0 0.0
    %1269 = vmatpush1.msra.mxu0 0.0
    %1270 = vmatprep.subr.mxu0 0.0
    %1271 = vmatpush1.msra.mxu0 0.0
    %1272 = vmatprep.subr.mxu0 0.0
    %1273 = vmatpush1.msra.mxu0 0.0
    %1274 = vmatprep.subr.mxu0 0.0
    %1275 = vmatpush1.msra.mxu0 0.0
    %1276 = vmatprep.subr.mxu0 0.0
    %1277 = vmatpush1.msra.mxu0 0.0
    %1278 = vmatprep.subr.mxu0 0.0
    %1279 = vmatpush1.msra.mxu0 0.0
    %1280 = vmatprep.subr.mxu0 0.0
    %1281 = vmatpush1.msra.mxu0 0.0
    %1282 = vmatprep.subr.mxu0 0.0
    %1283 = vmatpush1.msra.mxu0 0.0
    %1284 = vmatprep.subr.mxu0 0.0
    %1285 = vmatpush1.msra.mxu0 0.0
    %1286 = vmatprep.subr.mxu0 0.0
    %1287 = vmatpush1.msra.mxu0 0.0
    %1288 = vmatprep.subr.mxu0 0.0
    %1289 = vmatpush1.msra.mxu0 0.0
    %1290 = vmatprep.subr.mxu0 0.0
    %1291 = vmatpush1.msra.mxu0 0.0
    %1292 = vmatprep.subr.mxu0 0.0
    %1293 = vmatpush1.msra.mxu0 0.0
    %1294 = vmatprep.subr.mxu0 0.0
    %1295 = vmatpush1.msra.mxu0 0.0
    %1296 = vmatprep.subr.mxu0 0.0
    %1297 = vmatpush1.msra.mxu0 0.0
    %1298 = vmatprep.subr.mxu0 0.0
    %1299 = vmatpush1.msra.mxu0 0.0
    %1300 = vmatprep.subr.mxu0 0.0
    %1301 = vmatpush1.msra.mxu0 0.0
    %1302 = vmatprep.subr.mxu0 0.0
    %1303 = vmatpush1.msra.mxu0 0.0
    %1304 = vmatprep.subr.mxu0 0.0
    %1305 = vmatpush1.msra.mxu0 0.0
    %1306 = vmatprep.subr.mxu0 0.0
    %1307 = vmatpush1.msra.mxu0 0.0
    %1308 = vmatprep.subr.mxu0 0.0
    %1309 = vmatpush1.msra.mxu0 0.0
    %1310 = vmatprep.subr.mxu0 0.0
    %1311 = vmatpush1.msra.mxu0 0.0
    %1312 = vmatprep.subr.mxu0 0.0
    %1313 = vmatpush1.msra.mxu0 0.0
    %1314 = vmatprep.subr.mxu0 0.0
    %1315 = vmatpush1.msra.mxu0 0.0
    %1316 = vmatprep.subr.mxu0 0.0
    %1317 = vmatpush1.msra.mxu0 0.0
    %1318 = vmatprep.mubr.f32.mxu0 0.0
    %1319 = vmatmul.mubr.f32.gmra.mrb[0].mxu0 %v1252
    %v1320 = vpop.f32.mrb[0].mxu0
    %v1321 = vadd.f32 0.0, %v1320
    %v1322 = vpop.f32.mrb[0].mxu0
    %1323 = vdwg.mxu0
    %v1324 = vld [vmem:[%s17 + $0x20] sm:$0xff]
    %v1325 = vld [vmem:[%s17 + $0x28] sm:$0xff]
    %v1326 = vld [vmem:[%s17 + $0x30] sm:$0xff]
    %v1327 = vld [vmem:[%s17 + $0x38] sm:$0xff]
    %v1329 = vsel %vm502, %v1321, 0
    %1331 = vmatprep.subr.mxu0 0.0
    %1332 = vmatpush1.msra.mxu0 %v1324
    %1333 = vmatprep.subr.mxu0 0.0
    %1334 = vmatpush1.msra.mxu0 %v1325
    %1335 = vmatprep.subr.mxu0 0.0
    %1336 = vmatpush1.msra.mxu0 %v1326
    %1337 = vmatprep.subr.mxu0 0.0
    %1338 = vmatpush1.msra.mxu0 %v1327
    %1339 = vmatprep.subr.mxu0 0.0
    %1340 = vmatpush1.msra.mxu0 0.0
    %1341 = vmatprep.subr.mxu0 0.0
    %1342 = vmatpush1.msra.mxu0 0.0
    %1343 = vmatprep.subr.mxu0 0.0
    %1344 = vmatpush1.msra.mxu0 0.0
    %1345 = vmatprep.subr.mxu0 0.0
    %1346 = vmatpush1.msra.mxu0 0.0
    %1347 = vmatprep.subr.mxu0 0.0
    %1348 = vmatpush1.msra.mxu0 0.0
    %1349 = vmatprep.subr.mxu0 0.0
    %1350 = vmatpush1.msra.mxu0 0.0
    %1351 = vmatprep.subr.mxu0 0.0
    %1352 = vmatpush1.msra.mxu0 0.0
    %1353 = vmatprep.subr.mxu0 0.0
    %1354 = vmatpush1.msra.mxu0 0.0
    %1355 = vmatprep.subr.mxu0 0.0
    %1356 = vmatpush1.msra.mxu0 0.0
    %1357 = vmatprep.subr.mxu0 0.0
    %1358 = vmatpush1.msra.mxu0 0.0
    %1359 = vmatprep.subr.mxu0 0.0
    %1360 = vmatpush1.msra.mxu0 0.0
    %1361 = vmatprep.subr.mxu0 0.0
    %1362 = vmatpush1.msra.mxu0 0.0
    %1363 = vmatprep.subr.mxu0 0.0
    %1364 = vmatpush1.msra.mxu0 0.0
    %1365 = vmatprep.subr.mxu0 0.0
    %1366 = vmatpush1.msra.mxu0 0.0
    %1367 = vmatprep.subr.mxu0 0.0
    %1368 = vmatpush1.msra.mxu0 0.0
    %1369 = vmatprep.subr.mxu0 0.0
    %1370 = vmatpush1.msra.mxu0 0.0
    %1371 = vmatprep.subr.mxu0 0.0
    %1372 = vmatpush1.msra.mxu0 0.0
    %1373 = vmatprep.subr.mxu0 0.0
    %1374 = vmatpush1.msra.mxu0 0.0
    %1375 = vmatprep.subr.mxu0 0.0
    %1376 = vmatpush1.msra.mxu0 0.0
    %1377 = vmatprep.subr.mxu0 0.0
    %1378 = vmatpush1.msra.mxu0 0.0
    %1379 = vmatprep.subr.mxu0 0.0
    %1380 = vmatpush1.msra.mxu0 0.0
    %1381 = vmatprep.subr.mxu0 0.0
    %1382 = vmatpush1.msra.mxu0 0.0
    %1383 = vmatprep.subr.mxu0 0.0
    %1384 = vmatpush1.msra.mxu0 0.0
    %1385 = vmatprep.subr.mxu0 0.0
    %1386 = vmatpush1.msra.mxu0 0.0
    %1387 = vmatprep.subr.mxu0 0.0
    %1388 = vmatpush1.msra.mxu0 0.0
    %1389 = vmatprep.subr.mxu0 0.0
    %1390 = vmatpush1.msra.mxu0 0.0
    %1391 = vmatprep.subr.mxu0 0.0
    %1392 = vmatpush1.msra.mxu0 0.0
    %1393 = vmatprep.subr.mxu0 0.0
    %1394 = vmatpush1.msra.mxu0 0.0
    %1395 = vmatprep.mubr.f32.mxu0 0.0
    %1396 = vmatmul.mubr.f32.gmra.mrb[0].mxu0 %v1329
    %v1397 = vpop.f32.mrb[0].mxu0
    %v1398 = vadd.f32 0.0, %v1397
    %v1399 = vpop.f32.mrb[0].mxu0
    %1400 = vdwg.mxu0
    %v1402 = vsel %vm502, %v1158, 0
    %1404 = vmatprep.subr.mxu0 0.0
    %1405 = vmatpush1.msra.mxu0 %v1161
    %1406 = vmatprep.subr.mxu0 0.0
    %1407 = vmatpush1.msra.mxu0 %v1162
    %1408 = vmatprep.subr.mxu0 0.0
    %1409 = vmatpush1.msra.mxu0 %v1163
    %1410 = vmatprep.subr.mxu0 0.0
    %1411 = vmatpush1.msra.mxu0 %v1164
    %1412 = vmatprep.subr.mxu0 0.0
    %1413 = vmatpush1.msra.mxu0 0.0
    %1414 = vmatprep.subr.mxu0 0.0
    %1415 = vmatpush1.msra.mxu0 0.0
    %1416 = vmatprep.subr.mxu0 0.0
    %1417 = vmatpush1.msra.mxu0 0.0
    %1418 = vmatprep.subr.mxu0 0.0
    %1419 = vmatpush1.msra.mxu0 0.0
    %1420 = vmatprep.subr.mxu0 0.0
    %1421 = vmatpush1.msra.mxu0 0.0
    %1422 = vmatprep.subr.mxu0 0.0
    %1423 = vmatpush1.msra.mxu0 0.0
    %1424 = vmatprep.subr.mxu0 0.0
    %1425 = vmatpush1.msra.mxu0 0.0
    %1426 = vmatprep.subr.mxu0 0.0
    %1427 = vmatpush1.msra.mxu0 0.0
    %1428 = vmatprep.subr.mxu0 0.0
    %1429 = vmatpush1.msra.mxu0 0.0
    %1430 = vmatprep.subr.mxu0 0.0
    %1431 = vmatpush1.msra.mxu0 0.0
    %1432 = vmatprep.subr.mxu0 0.0
    %1433 = vmatpush1.msra.mxu0 0.0
    %1434 = vmatprep.subr.mxu0 0.0
    %1435 = vmatpush1.msra.mxu0 0.0
    %1436 = vmatprep.subr.mxu0 0.0
    %1437 = vmatpush1.msra.mxu0 0.0
    %1438 = vmatprep.subr.mxu0 0.0
    %1439 = vmatpush1.msra.mxu0 0.0
    %1440 = vmatprep.subr.mxu0 0.0
    %1441 = vmatpush1.msra.mxu0 0.0
    %1442 = vmatprep.subr.mxu0 0.0
    %1443 = vmatpush1.msra.mxu0 0.0
    %1444 = vmatprep.subr.mxu0 0.0
    %1445 = vmatpush1.msra.mxu0 0.0
    %1446 = vmatprep.subr.mxu0 0.0
    %1447 = vmatpush1.msra.mxu0 0.0
    %1448 = vmatprep.subr.mxu0 0.0
    %1449 = vmatpush1.msra.mxu0 0.0
    %1450 = vmatprep.subr.mxu0 0.0
    %1451 = vmatpush1.msra.mxu0 0.0
    %1452 = vmatprep.subr.mxu0 0.0
    %1453 = vmatpush1.msra.mxu0 0.0
    %1454 = vmatprep.subr.mxu0 0.0
    %1455 = vmatpush1.msra.mxu0 0.0
    %1456 = vmatprep.subr.mxu0 0.0
    %1457 = vmatpush1.msra.mxu0 0.0
    %1458 = vmatprep.subr.mxu0 0.0
    %1459 = vmatpush1.msra.mxu0 0.0
    %1460 = vmatprep.subr.mxu0 0.0
    %1461 = vmatpush1.msra.mxu0 0.0
    %1462 = vmatprep.subr.mxu0 0.0
    %1463 = vmatpush1.msra.mxu0 0.0
    %1464 = vmatprep.subr.mxu0 0.0
    %1465 = vmatpush1.msra.mxu0 0.0
    %1466 = vmatprep.subr.mxu0 0.0
    %1467 = vmatpush1.msra.mxu0 0.0
    %1468 = vmatprep.mubr.f32.mxu0 0.0
    %1469 = vmatmul.mubr.f32.gmra.mrb[0].mxu0 %v1402
    %v1470 = vpop.f32.mrb[0].mxu0
    %v1471 = vadd.f32 %v1398, %v1470
    %v1472 = vpop.f32.mrb[0].mxu0
    %1473 = vdwg.mxu0
    %v1474 = vld [vmem:[#allocation2 + $0x5] sm:$0x1f]
    %v1475 = vadd.f32 %v1474, %v1471
    %v1476 = vld [vmem:[%s19] sm:$0x1]
    %v1478 = vlaneseq
    %v1479 = vshrl.u32 %v1478, 7
    %v1480 = vsub.s32 0, %v1479
    %v1481 = vrot.slane %v1476, %v1480
    %v1483 = vadd.f32 %v1475, %v1481
    %1484 = vst.msk [vmem:[#allocation2 + $0x5] sm:$0x1f] %vm992, %v1483
    %v1485 = vld [vmem:[#allocation2] sm:$0xff]
    %v1486 = vld [vmem:[#allocation2 + $0x8] sm:$0x3]
    %v1487 = vsel %vm353, %v1485, 0.0
    %1488 = vadd.xlane.f32.xlu0 %v1487
    %v1489 = vpop.xlane.xlu0 %1488
    %v1490 = vsel %vm357, %v1486, 0.0
    %1491 = vadd.xlane.f32.xlu0 %v1490
    %v1492 = vpop.xlane.xlu0 %1491
    %v1493 = vmul.f32 %v1489, %v361
    %v1494 = vmul.f32 %v1492, %v361
    %v1495 = vsub.f32 %v1485, %v1493
    %v1496 = vsub.f32 %v1486, %v1494
    %v1497 = vmul.f32 %v1495, %v1495
    %v1498 = vmul.f32 %v1496, %v1496
    %v1499 = vsel %vm353, %v1497, 0.0
    %1500 = vadd.xlane.f32.xlu0 %v1499
    %v1501 = vpop.xlane.xlu0 %1500
    %v1502 = vsel %vm357, %v1498, 0.0
    %1503 = vadd.xlane.f32.xlu0 %v1502
    %v1504 = vpop.xlane.xlu0 %1503
    %v1505 = vmul.f32 %v1501, %v361
    %v1506 = vmul.f32 %v1504, %v361
    %v1507 = vadd.f32 %v1505, 1e-05
    %v1508 = vadd.f32 %v1506, 1e-05
    %v1509 = vrsqrt.pop %v1507
    %v1510 = vrsqrt.pop %v1508
    %v1511 = vmul.f32 %v1495, %v1509
    %v1512 = vmul.f32 %v1496, %v1510
    %v1513 = vld [vmem:[%s21] sm:$0x1]
    %v1515 = vlaneseq
    %v1516 = vshrl.u32 %v1515, 7
    %v1517 = vsub.s32 0, %v1516
    %v1518 = vrot.slane %v1513, %v1517
    %v1520 = vmul.f32 %v1511, %v1518
    %v1521 = vmul.f32 %v1512, %v1518
    %v1522 = vld [vmem:[%s23] sm:$0x1]
    %v1524 = vlaneseq
    %v1525 = vshrl.u32 %v1524, 7
    %v1526 = vsub.s32 0, %v1525
    %v1527 = vrot.slane %v1522, %v1526
    %v1529 = vadd.f32 %v1520, %v1527
    %v1530 = vadd.f32 %v1521, %v1527
    %v1531 = vld [vmem:[%s25] sm:$0xff]
    %v1532 = vld [vmem:[%s25 + $0x8] sm:$0xff]
    %v1533 = vld [vmem:[%s25 + $0x10] sm:$0xff]
    %v1534 = vld [vmem:[%s25 + $0x18] sm:$0xff]
    %v1535 = vld [vmem:[%s25 + $0x20] sm:$0xff]
    %v1536 = vld [vmem:[%s25 + $0x28] sm:$0xff]
    %v1537 = vld [vmem:[%s25 + $0x30] sm:$0xff]
    %v1538 = vld [vmem:[%s25 + $0x38] sm:$0xff]
    %v1539 = vld [vmem:[%s27] sm:$0x1]
    %v1541 = vlaneseq
    %v1542 = vshrl.u32 %v1541, 7
    %v1543 = vsub.s32 0, %v1542
    %v1544 = vrot.slane %v1539, %v1543
    %v1547 = vsel %vm353, %v1529, 0
    %v1550 = vsel %vm353, %v1530, 0
    %1552 = vmatprep.subr.mxu0 0.0
    %1553 = vmatpush1.msra.mxu0 %v1531
    %1554 = vmatprep.subr.mxu0 0.0
    %1555 = vmatpush1.msra.mxu0 %v1532
    %1556 = vmatprep.subr.mxu0 0.0
    %1557 = vmatpush1.msra.mxu0 %v1533
    %1558 = vmatprep.subr.mxu0 0.0
    %1559 = vmatpush1.msra.mxu0 %v1534
    %1560 = vmatprep.subr.mxu0 0.0
    %1561 = vmatpush1.msra.mxu0 %v1535
    %1562 = vmatprep.subr.mxu0 0.0
    %1563 = vmatpush1.msra.mxu0 %v1536
    %1564 = vmatprep.subr.mxu0 0.0
    %1565 = vmatpush1.msra.mxu0 %v1537
    %1566 = vmatprep.subr.mxu0 0.0
    %1567 = vmatpush1.msra.mxu0 %v1538
    %1568 = vmatprep.subr.mxu0 0.0
    %1569 = vmatpush1.msra.mxu0 0.0
    %1570 = vmatprep.subr.mxu0 0.0
    %1571 = vmatpush1.msra.mxu0 0.0
    %1572 = vmatprep.subr.mxu0 0.0
    %1573 = vmatpush1.msra.mxu0 0.0
    %1574 = vmatprep.subr.mxu0 0.0
    %1575 = vmatpush1.msra.mxu0 0.0
    %1576 = vmatprep.subr.mxu0 0.0
    %1577 = vmatpush1.msra.mxu0 0.0
    %1578 = vmatprep.subr.mxu0 0.0
    %1579 = vmatpush1.msra.mxu0 0.0
    %1580 = vmatprep.subr.mxu0 0.0
    %1581 = vmatpush1.msra.mxu0 0.0
    %1582 = vmatprep.subr.mxu0 0.0
    %1583 = vmatpush1.msra.mxu0 0.0
    %1584 = vmatprep.subr.mxu0 0.0
    %1585 = vmatpush1.msra.mxu0 0.0
    %1586 = vmatprep.subr.mxu0 0.0
    %1587 = vmatpush1.msra.mxu0 0.0
    %1588 = vmatprep.subr.mxu0 0.0
    %1589 = vmatpush1.msra.mxu0 0.0
    %1590 = vmatprep.subr.mxu0 0.0
    %1591 = vmatpush1.msra.mxu0 0.0
    %1592 = vmatprep.subr.mxu0 0.0
    %1593 = vmatpush1.msra.mxu0 0.0
    %1594 = vmatprep.subr.mxu0 0.0
    %1595 = vmatpush1.msra.mxu0 0.0
    %1596 = vmatprep.subr.mxu0 0.0
    %1597 = vmatpush1.msra.mxu0 0.0
    %1598 = vmatprep.subr.mxu0 0.0
    %1599 = vmatpush1.msra.mxu0 0.0
    %1600 = vmatprep.subr.mxu0 0.0
    %1601 = vmatpush1.msra.mxu0 0.0
    %1602 = vmatprep.subr.mxu0 0.0
    %1603 = vmatpush1.msra.mxu0 0.0
    %1604 = vmatprep.subr.mxu0 0.0
    %1605 = vmatpush1.msra.mxu0 0.0
    %1606 = vmatprep.subr.mxu0 0.0
    %1607 = vmatpush1.msra.mxu0 0.0
    %1608 = vmatprep.subr.mxu0 0.0
    %1609 = vmatpush1.msra.mxu0 0.0
    %1610 = vmatprep.subr.mxu0 0.0
    %1611 = vmatpush1.msra.mxu0 0.0
    %1612 = vmatprep.subr.mxu0 0.0
    %1613 = vmatpush1.msra.mxu0 0.0
    %1614 = vmatprep.subr.mxu0 0.0
    %1615 = vmatpush1.msra.mxu0 0.0
    %1616 = vmatprep.mubr.f32.mxu0 0.0
    %1617 = vmatmul.mubr.f32.gmra.mrb[0].mxu0 %v1547
    %v1618 = vpop.f32.mrb[0].mxu0
    %v1619 = vadd.f32 %v1544, %v1618
    %v1620 = vpop.f32.mrb[0].mxu0
    %1621 = vmatprep.mubr.f32.mxu0 0.0
    %1622 = vmatmul.mubr.f32.gmra.mrb[0].mxu0 %v1550
    %v1623 = vpop.f32.mrb[0].mxu0
    %v1624 = vadd.f32 %v1544, %v1623
    %v1625 = vpop.f32.mrb[0].mxu0
    %1626 = vdwg.mxu0
    %v1627 = vmul.f32 %v1619, %v1619
    %v1628 = vmul.f32 %v1624, %v1624
    %v1629 = vmul.f32 %v1619, %v1627
    %v1630 = vmul.f32 %v1624, %v1628
    %v1631 = vmul.f32 %v1629, 0.044715
    %v1632 = vmul.f32 %v1630, 0.044715
    %v1633 = vadd.f32 %v1619, %v1631
    %v1634 = vadd.f32 %v1624, %v1632
    %v1635 = vmul.f32 %v1633, 0.7978846
    %v1636 = vmul.f32 %v1634, 0.7978846
    %v1637 = vtanh.pop %v1635
    %v1638 = vtanh.pop %v1636
    %v1639 = vadd.f32 %v1637, 1.0
    %v1640 = vadd.f32 %v1638, 1.0
    %v1641 = vmul.f32 %v1639, 0.5
    %v1642 = vmul.f32 %v1640, 0.5
    %v1643 = vmul.f32 %v1619, %v1641
    %v1644 = vmul.f32 %v1624, %v1642
    %v1645 = vld [vmem:[%s29] sm:$0xff]
    %v1646 = vld [vmem:[%s29 + $0x8] sm:$0xff]
    %v1647 = vld [vmem:[%s29 + $0x10] sm:$0xff]
    %v1648 = vld [vmem:[%s29 + $0x18] sm:$0xff]
    %v1649 = vld [vmem:[%s29 + $0x20] sm:$0xff]
    %v1650 = vld [vmem:[%s29 + $0x28] sm:$0xff]
    %v1651 = vld [vmem:[%s31] sm:$0x1]
    %v1653 = vlaneseq
    %v1654 = vshrl.u32 %v1653, 7
    %v1655 = vsub.s32 0, %v1654
    %v1656 = vrot.slane %v1651, %v1655
    %vm1658 = vcmask 392192
    %v1660 = vsel %vm1658, %v1643, 0
    %v1663 = vsel %vm1658, %v1644, 0
    %1665 = vmatprep.subr.mxu0 0.0
    %1666 = vmatpush1.msra.mxu0 %v1645
    %1667 = vmatprep.subr.mxu0 0.0
    %1668 = vmatpush1.msra.mxu0 %v1646
    %1669 = vmatprep.subr.mxu0 0.0
    %1670 = vmatpush1.msra.mxu0 %v1647
    %1671 = vmatprep.subr.mxu0 0.0
    %1672 = vmatpush1.msra.mxu0 %v1648
    %1673 = vmatprep.subr.mxu0 0.0
    %1674 = vmatpush1.msra.mxu0 %v1649
    %1675 = vmatprep.subr.mxu0 0.0
    %1676 = vmatpush1.msra.mxu0 %v1650
    %1677 = vmatprep.subr.mxu0 0.0
    %1678 = vmatpush1.msra.mxu0 0.0
    %1679 = vmatprep.subr.mxu0 0.0
    %1680 = vmatpush1.msra.mxu0 0.0
    %1681 = vmatprep.subr.mxu0 0.0
    %1682 = vmatpush1.msra.mxu0 0.0
    %1683 = vmatprep.subr.mxu0 0.0
    %1684 = vmatpush1.msra.mxu0 0.0
    %1685 = vmatprep.subr.mxu0 0.0
    %1686 = vmatpush1.msra.mxu0 0.0
    %1687 = vmatprep.subr.mxu0 0.0
    %1688 = vmatpush1.msra.mxu0 0.0
    %1689 = vmatprep.subr.mxu0 0.0
    %1690 = vmatpush1.msra.mxu0 0.0
    %1691 = vmatprep.subr.mxu0 0.0
    %1692 = vmatpush1.msra.mxu0 0.0
    %1693 = vmatprep.subr.mxu0 0.0
    %1694 = vmatpush1.msra.mxu0 0.0
    %1695 = vmatprep.subr.mxu0 0.0
    %1696 = vmatpush1.msra.mxu0 0.0
    %1697 = vmatprep.subr.mxu0 0.0
    %1698 = vmatpush1.msra.mxu0 0.0
    %1699 = vmatprep.subr.mxu0 0.0
    %1700 = vmatpush1.msra.mxu0 0.0
    %1701 = vmatprep.subr.mxu0 0.0
    %1702 = vmatpush1.msra.mxu0 0.0
    %1703 = vmatprep.subr.mxu0 0.0
    %1704 = vmatpush1.msra.mxu0 0.0
    %1705 = vmatprep.subr.mxu0 0.0
    %1706 = vmatpush1.msra.mxu0 0.0
    %1707 = vmatprep.subr.mxu0 0.0
    %1708 = vmatpush1.msra.mxu0 0.0
    %1709 = vmatprep.subr.mxu0 0.0
    %1710 = vmatpush1.msra.mxu0 0.0
    %1711 = vmatprep.subr.mxu0 0.0
    %1712 = vmatpush1.msra.mxu0 0.0
    %1713 = vmatprep.subr.mxu0 0.0
    %1714 = vmatpush1.msra.mxu0 0.0
    %1715 = vmatprep.subr.mxu0 0.0
    %1716 = vmatpush1.msra.mxu0 0.0
    %1717 = vmatprep.subr.mxu0 0.0
    %1718 = vmatpush1.msra.mxu0 0.0
    %1719 = vmatprep.subr.mxu0 0.0
    %1720 = vmatpush1.msra.mxu0 0.0
    %1721 = vmatprep.subr.mxu0 0.0
    %1722 = vmatpush1.msra.mxu0 0.0
    %1723 = vmatprep.subr.mxu0 0.0
    %1724 = vmatpush1.msra.mxu0 0.0
    %1725 = vmatprep.subr.mxu0 0.0
    %1726 = vmatpush1.msra.mxu0 0.0
    %1727 = vmatprep.subr.mxu0 0.0
    %1728 = vmatpush1.msra.mxu0 0.0
    %1729 = vmatprep.mubr.f32.mxu0 0.0
    %1730 = vmatmul.mubr.f32.gmra.mrb[0].mxu0 %v1660
    %v1731 = vpop.f32.mrb[0].mxu0
    %v1732 = vadd.f32 %v1656, %v1731
    %v1733 = vpop.f32.mrb[0].mxu0
    %1734 = vmatprep.mubr.f32.mxu0 0.0
    %1735 = vmatmul.mubr.f32.gmra.mrb[0].mxu0 %v1663
    %v1736 = vpop.f32.mrb[0].mxu0
    %v1737 = vadd.f32 %v1656, %v1736
    %v1738 = vpop.f32.mrb[0].mxu0
    %1739 = vdwg.mxu0
    %v1740 = vadd.f32 %v1485, %v1732
    %v1741 = vadd.f32 %v1486, %v1737
    %1742 = vst.msk [vmem:[#allocation2] sm:$0xff] %vm353, %v1740
    %1743 = vst.msk [vmem:[#allocation2 + $0x8] sm:$0x3] %vm357, %v1741
    %v1744 = vld [vmem:[#allocation2] sm:$0xff]
    %v1745 = vld [vmem:[#allocation2 + $0x8] sm:$0x3]
    %v1746 = vsel %vm353, %v1744, 0.0
    %1747 = vadd.xlane.f32.xlu0 %v1746
    %v1748 = vpop.xlane.xlu0 %1747
    %v1749 = vsel %vm357, %v1745, 0.0
    %1750 = vadd.xlane.f32.xlu0 %v1749
    %v1751 = vpop.xlane.xlu0 %1750
    %v1752 = vmul.f32 %v1748, %v361
    %v1753 = vmul.f32 %v1751, %v361
    %v1754 = vsub.f32 %v1744, %v1752
    %v1755 = vsub.f32 %v1745, %v1753
    %v1756 = vmul.f32 %v1754, %v1754
    %v1757 = vmul.f32 %v1755, %v1755
    %v1758 = vsel %vm353, %v1756, 0.0
    %1759 = vadd.xlane.f32.xlu0 %v1758
    %v1760 = vpop.xlane.xlu0 %1759
    %v1761 = vsel %vm357, %v1757, 0.0
    %1762 = vadd.xlane.f32.xlu0 %v1761
    %v1763 = vpop.xlane.xlu0 %1762
    %v1764 = vmul.f32 %v1760, %v361
    %v1765 = vmul.f32 %v1763, %v361
    %v1766 = vadd.f32 %v1764, 1e-05
    %v1767 = vadd.f32 %v1765, 1e-05
    %v1768 = vrsqrt.pop %v1766
    %v1769 = vrsqrt.pop %v1767
    %v1770 = vmul.f32 %v1754, %v1768
    %v1771 = vmul.f32 %v1755, %v1769
    %v1772 = vld [vmem:[%s33] sm:$0x1]
    %v1774 = vlaneseq
    %v1775 = vshrl.u32 %v1774, 7
    %v1776 = vsub.s32 0, %v1775
    %v1777 = vrot.slane %v1772, %v1776
    %v1779 = vmul.f32 %v1770, %v1777
    %v1780 = vmul.f32 %v1771, %v1777
    %v1781 = vld [vmem:[%s35] sm:$0x1]
    %v1783 = vlaneseq
    %v1784 = vshrl.u32 %v1783, 7
    %v1785 = vsub.s32 0, %v1784
    %v1786 = vrot.slane %v1781, %v1785
    %v1788 = vadd.f32 %v1779, %v1786
    %v1789 = vadd.f32 %v1780, %v1786
    %v1790 = vld [vmem:[%s37] sm:$0xff]
    %v1791 = vld [vmem:[%s37 + $0x8] sm:$0xff]
    %v1792 = vld [vmem:[%s37 + $0x10] sm:$0xff]
    %v1793 = vld [vmem:[%s37 + $0x18] sm:$0xff]
    %v1794 = vld [vmem:[%s37 + $0x20] sm:$0xff]
    %v1795 = vld [vmem:[%s37 + $0x28] sm:$0xff]
    %v1796 = vld [vmem:[%s37 + $0x30] sm:$0xff]
    %v1797 = vld [vmem:[%s37 + $0x38] sm:$0xff]
    %v1798 = vld [vmem:[%s39] sm:$0x1]
    %v1800 = vlaneseq
    %v1801 = vshrl.u32 %v1800, 7
    %v1802 = vsub.s32 0, %v1801
    %v1803 = vrot.slane %v1798, %v1802
    %v1806 = vsel %vm353, %v1788, 0
    %v1809 = vsel %vm353, %v1789, 0
    %1811 = vmatprep.subr.mxu0 0.0
    %1812 = vmatpush1.msra.mxu0 %v1790
    %1813 = vmatprep.subr.mxu0 0.0
    %1814 = vmatpush1.msra.mxu0 %v1791
    %1815 = vmatprep.subr.mxu0 0.0
    %1816 = vmatpush1.msra.mxu0 %v1792
    %1817 = vmatprep.subr.mxu0 0.0
    %1818 = vmatpush1.msra.mxu0 %v1793
    %1819 = vmatprep.subr.mxu0 0.0
    %1820 = vmatpush1.msra.mxu0 %v1794
    %1821 = vmatprep.subr.mxu0 0.0
    %1822 = vmatpush1.msra.mxu0 %v1795
    %1823 = vmatprep.subr.mxu0 0.0
    %1824 = vmatpush1.msra.mxu0 %v1796
    %1825 = vmatprep.subr.mxu0 0.0
    %1826 = vmatpush1.msra.mxu0 %v1797
    %1827 = vmatprep.subr.mxu0 0.0
    %1828 = vmatpush1.msra.mxu0 0.0
    %1829 = vmatprep.subr.mxu0 0.0
    %1830 = vmatpush1.msra.mxu0 0.0
    %1831 = vmatprep.subr.mxu0 0.0
    %1832 = vmatpush1.msra.mxu0 0.0
    %1833 = vmatprep.subr.mxu0 0.0
    %1834 = vmatpush1.msra.mxu0 0.0
    %1835 = vmatprep.subr.mxu0 0.0
    %1836 = vmatpush1.msra.mxu0 0.0
    %1837 = vmatprep.subr.mxu0 0.0
    %1838 = vmatpush1.msra.mxu0 0.0
    %1839 = vmatprep.subr.mxu0 0.0
    %1840 = vmatpush1.msra.mxu0 0.0
    %1841 = vmatprep.subr.mxu0 0.0
    %1842 = vmatpush1.msra.mxu0 0.0
    %1843 = vmatprep.subr.mxu0 0.0
    %1844 = vmatpush1.msra.mxu0 0.0
    %1845 = vmatprep.subr.mxu0 0.0
    %1846 = vmatpush1.msra.mxu0 0.0
    %1847 = vmatprep.subr.mxu0 0.0
    %1848 = vmatpush1.msra.mxu0 0.0
    %1849 = vmatprep.subr.mxu0 0.0
    %1850 = vmatpush1.msra.mxu0 0.0
    %1851 = vmatprep.subr.mxu0 0.0
    %1852 = vmatpush1.msra.mxu0 0.0
    %1853 = vmatprep.subr.mxu0 0.0
    %1854 = vmatpush1.msra.mxu0 0.0
    %1855 = vmatprep.subr.mxu0 0.0
    %1856 = vmatpush1.msra.mxu0 0.0
    %1857 = vmatprep.subr.mxu0 0.0
    %1858 = vmatpush1.msra.mxu0 0.0
    %1859 = vmatprep.subr.mxu0 0.0
    %1860 = vmatpush1.msra.mxu0 0.0
    %1861 = vmatprep.subr.mxu0 0.0
    %1862 = vmatpush1.msra.mxu0 0.0
    %1863 = vmatprep.subr.mxu0 0.0
    %1864 = vmatpush1.msra.mxu0 0.0
    %1865 = vmatprep.subr.mxu0 0.0
    %1866 = vmatpush1.msra.mxu0 0.0
    %1867 = vmatprep.subr.mxu0 0.0
    %1868 = vmatpush1.msra.mxu0 0.0
    %1869 = vmatprep.subr.mxu0 0.0
    %1870 = vmatpush1.msra.mxu0 0.0
    %1871 = vmatprep.subr.mxu0 0.0
    %1872 = vmatpush1.msra.mxu0 0.0
    %1873 = vmatprep.subr.mxu0 0.0
    %1874 = vmatpush1.msra.mxu0 0.0
    %1875 = vmatprep.mubr.f32.mxu0 0.0
    %1876 = vmatmul.mubr.f32.gmra.mrb[0].mxu0 %v1806
    %v1877 = vpop.f32.mrb[0].mxu0
    %v1878 = vadd.f32 %v1803, %v1877
    %v1879 = vpop.f32.mrb[0].mxu0
    %1880 = vmatprep.mubr.f32.mxu0 0.0
    %1881 = vmatmul.mubr.f32.gmra.mrb[0].mxu0 %v1809
    %v1882 = vpop.f32.mrb[0].mxu0
    %v1883 = vadd.f32 %v1803, %v1882
    %v1884 = vpop.f32.mrb[0].mxu0
    %1885 = vdwg.mxu0
    %1886 = vst [vmem:[#allocation3] sm:$0xff] %v1878
    %1887 = vst [vmem:[#allocation3 + $0x8] sm:$0x3] %v1883
    %v1888 = vld [vmem:[#allocation3] sm:$0x1f]
    %1890 = vrot.lane.b32.xlu0 %v1888, 64
    %v1891 = vpop.permute.xlu0 %1890
    %v1892 = vsel %vm502, %v1888, 0
    %v1894 = vsel %vm502, %v1891, 0
    %1896 = vmatprep.subr.mxu0 0.0
    %1897 = vmatpush1.xpose.msra.mxu0 %v1894
    %1898 = vmatprep.subr.mxu0 0.0
    %1899 = vmatpush1.xpose.msra.mxu0 0.0
    %1900 = vmatprep.subr.mxu0 0.0
    %1901 = vmatpush1.xpose.msra.mxu0 0.0
    %1902 = vmatprep.subr.mxu0 0.0
    %1903 = vmatpush1.xpose.msra.mxu0 0.0
    %1904 = vmatprep.subr.mxu0 0.0
    %1905 = vmatpush1.xpose.msra.mxu0 0.0
    %1906 = vmatprep.subr.mxu0 0.0
    %1907 = vmatpush1.xpose.msra.mxu0 0.0
    %1908 = vmatprep.subr.mxu0 0.0
    %1909 = vmatpush1.xpose.msra.mxu0 0.0
    %1910 = vmatprep.subr.mxu0 0.0
    %1911 = vmatpush1.xpose.msra.mxu0 0.0
    %1912 = vmatprep.subr.mxu0 0.0
    %1913 = vmatpush1.xpose.msra.mxu0 0.0
    %1914 = vmatprep.subr.mxu0 0.0
    %1915 = vmatpush1.xpose.msra.mxu0 0.0
    %1916 = vmatprep.subr.mxu0 0.0
    %1917 = vmatpush1.xpose.msra.mxu0 0.0
    %1918 = vmatprep.subr.mxu0 0.0
    %1919 = vmatpush1.xpose.msra.mxu0 0.0
    %1920 = vmatprep.subr.mxu0 0.0
    %1921 = vmatpush1.xpose.msra.mxu0 0.0
    %1922 = vmatprep.subr.mxu0 0.0
    %1923 = vmatpush1.xpose.msra.mxu0 0.0
    %1924 = vmatprep.subr.mxu0 0.0
    %1925 = vmatpush1.xpose.msra.mxu0 0.0
    %1926 = vmatprep.subr.mxu0 0.0
    %1927 = vmatpush1.xpose.msra.mxu0 0.0
    %1928 = vmatprep.subr.mxu0 0.0
    %1929 = vmatpush1.xpose.msra.mxu0 0.0
    %1930 = vmatprep.subr.mxu0 0.0
    %1931 = vmatpush1.xpose.msra.mxu0 0.0
    %1932 = vmatprep.subr.mxu0 0.0
    %1933 = vmatpush1.xpose.msra.mxu0 0.0
    %1934 = vmatprep.subr.mxu0 0.0
    %1935 = vmatpush1.xpose.msra.mxu0 0.0
    %1936 = vmatprep.subr.mxu0 0.0
    %1937 = vmatpush1.xpose.msra.mxu0 0.0
    %1938 = vmatprep.subr.mxu0 0.0
    %1939 = vmatpush1.xpose.msra.mxu0 0.0
    %1940 = vmatprep.subr.mxu0 0.0
    %1941 = vmatpush1.xpose.msra.mxu0 0.0
    %1942 = vmatprep.subr.mxu0 0.0
    %1943 = vmatpush1.xpose.msra.mxu0 0.0
    %1944 = vmatprep.subr.mxu0 0.0
    %1945 = vmatpush1.xpose.msra.mxu0 0.0
    %1946 = vmatprep.subr.mxu0 0.0
    %1947 = vmatpush1.xpose.msra.mxu0 0.0
    %1948 = vmatprep.subr.mxu0 0.0
    %1949 = vmatpush1.xpose.msra.mxu0 0.0
    %1950 = vmatprep.subr.mxu0 0.0
    %1951 = vmatpush1.xpose.msra.mxu0 0.0
    %1952 = vmatprep.subr.mxu0 0.0
    %1953 = vmatpush1.xpose.msra.mxu0 0.0
    %1954 = vmatprep.subr.mxu0 0.0
    %1955 = vmatpush1.xpose.msra.mxu0 0.0
    %1956 = vmatprep.subr.mxu0 0.0
    %1957 = vmatpush1.xpose.msra.mxu0 0.0
    %1958 = vmatprep.subr.mxu0 0.0
    %1959 = vmatpush1.xpose.msra.mxu0 0.0
    %1960 = vmatprep.mubr.f32.mxu0 0.0
    %1961 = vmatmul.mubr.f32.gmra.mrb[0].mxu0 %v1892
    %v1962 = vpop.f32.mrb[0].mxu0
    %v1963 = vadd.f32 0.0, %v1962
    %v1964 = vpop.f32.mrb[0].mxu0
    %1965 = vdwg.mxu0
    %v1966 = vmul.f32 %v1963, 0.17677669
    %v1967 = vsel %vm578, %v1966, -inf
    %1968 = vmax.xlane.f32.xlu0 %v1967
    %v1969 = vpop.xlane.xlu0 %1968
    %v1970 = vsub.f32 %v1966, %v1969
    %v1971 = vmul.f32 %v1970, 1.442695
    %v1972 = vpow.pop %v1971
    %v1973 = vsel %vm578, %v1972, 0.0
    %1974 = vadd.xlane.f32.xlu0 %v1973
    %v1975 = vpop.xlane.xlu0 %1974
    %v1976 = vrcp.pop %v1975
    %v1977 = vmul.f32 %v1972, %v1976
    %1978 = vrot.lane.b32.xlu0 %v1888, 32
    %v1979 = vpop.permute.xlu0 %1978
    %v1981 = vsel %vm592, %v1977, 0
    %v1983 = vsel %vm596, %v1979, 0
    %1985 = vmatprep.subr.mxu0 0.0
    %1986 = vmatpush1.msra.mxu0 %v1983
    %1987 = vmatprep.subr.mxu0 0.0
    %1988 = vmatpush1.msra.mxu0 0.0
    %1989 = vmatprep.subr.mxu0 0.0
    %1990 = vmatpush1.msra.mxu0 0.0
    %1991 = vmatprep.subr.mxu0 0.0
    %1992 = vmatpush1.msra.mxu0 0.0
    %1993 = vmatprep.subr.mxu0 0.0
    %1994 = vmatpush1.msra.mxu0 0.0
    %1995 = vmatprep.subr.mxu0 0.0
    %1996 = vmatpush1.msra.mxu0 0.0
    %1997 = vmatprep.subr.mxu0 0.0
    %1998 = vmatpush1.msra.mxu0 0.0
    %1999 = vmatprep.subr.mxu0 0.0
    %2000 = vmatpush1.msra.mxu0 0.0
    %2001 = vmatprep.subr.mxu0 0.0
    %2002 = vmatpush1.msra.mxu0 0.0
    %2003 = vmatprep.subr.mxu0 0.0
    %2004 = vmatpush1.msra.mxu0 0.0
    %2005 = vmatprep.subr.mxu0 0.0
    %2006 = vmatpush1.msra.mxu0 0.0
    %2007 = vmatprep.subr.mxu0 0.0
    %2008 = vmatpush1.msra.mxu0 0.0
    %2009 = vmatprep.subr.mxu0 0.0
    %2010 = vmatpush1.msra.mxu0 0.0
    %2011 = vmatprep.subr.mxu0 0.0
    %2012 = vmatpush1.msra.mxu0 0.0
    %2013 = vmatprep.subr.mxu0 0.0
    %2014 = vmatpush1.msra.mxu0 0.0
    %2015 = vmatprep.subr.mxu0 0.0
    %2016 = vmatpush1.msra.mxu0 0.0
    %2017 = vmatprep.subr.mxu0 0.0
    %2018 = vmatpush1.msra.mxu0 0.0
    %2019 = vmatprep.subr.mxu0 0.0
    %2020 = vmatpush1.msra.mxu0 0.0
    %2021 = vmatprep.subr.mxu0 0.0
    %2022 = vmatpush1.msra.mxu0 0.0
    %2023 = vmatprep.subr.mxu0 0.0
    %2024 = vmatpush1.msra.mxu0 0.0
    %2025 = vmatprep.subr.mxu0 0.0
    %2026 = vmatpush1.msra.mxu0 0.0
    %2027 = vmatprep.subr.mxu0 0.0
    %2028 = vmatpush1.msra.mxu0 0.0
    %2029 = vmatprep.subr.mxu0 0.0
    %2030 = vmatpush1.msra.mxu0 0.0
    %2031 = vmatprep.subr.mxu0 0.0
    %2032 = vmatpush1.msra.mxu0 0.0
    %2033 = vmatprep.subr.mxu0 0.0
    %2034 = vmatpush1.msra.mxu0 0.0
    %2035 = vmatprep.subr.mxu0 0.0
    %2036 = vmatpush1.msra.mxu0 0.0
    %2037 = vmatprep.subr.mxu0 0.0
    %2038 = vmatpush1.msra.mxu0 0.0
    %2039 = vmatprep.subr.mxu0 0.0
    %2040 = vmatpush1.msra.mxu0 0.0
    %2041 = vmatprep.subr.mxu0 0.0
    %2042 = vmatpush1.msra.mxu0 0.0
    %2043 = vmatprep.subr.mxu0 0.0
    %2044 = vmatpush1.msra.mxu0 0.0
    %2045 = vmatprep.subr.mxu0 0.0
    %2046 = vmatpush1.msra.mxu0 0.0
    %2047 = vmatprep.subr.mxu0 0.0
    %2048 = vmatpush1.msra.mxu0 0.0
    %2049 = vmatprep.mubr.f32.mxu0 0.0
    %2050 = vmatmul.mubr.f32.gmra.mrb[0].mxu0 %v1981
    %v2051 = vpop.f32.mrb[0].mxu0
    %v2052 = vadd.f32 0.0, %v2051
    %v2053 = vpop.f32.mrb[0].mxu0
    %2054 = vdwg.mxu0
    %v2055 = vld [vmem:[%s41] sm:$0xff]
    %v2056 = vld [vmem:[%s41 + $0x8] sm:$0xff]
    %v2057 = vld [vmem:[%s41 + $0x10] sm:$0xff]
    %v2058 = vld [vmem:[%s41 + $0x18] sm:$0xff]
    %2059 = vrot.lane.b32.xlu0 %v1888, 96
    %v2060 = vpop.permute.xlu0 %2059
    %v2061 = vsel %vm502, %v2060, 0
    %2063 = vmatprep.subr.mxu0 0.0
    %2064 = vmatpush1.xpose.msra.mxu0 %v1894
    %2065 = vmatprep.subr.mxu0 0.0
    %2066 = vmatpush1.xpose.msra.mxu0 0.0
    %2067 = vmatprep.subr.mxu0 0.0
    %2068 = vmatpush1.xpose.msra.mxu0 0.0
    %2069 = vmatprep.subr.mxu0 0.0
    %2070 = vmatpush1.xpose.msra.mxu0 0.0
    %2071 = vmatprep.subr.mxu0 0.0
    %2072 = vmatpush1.xpose.msra.mxu0 0.0
    %2073 = vmatprep.subr.mxu0 0.0
    %2074 = vmatpush1.xpose.msra.mxu0 0.0
    %2075 = vmatprep.subr.mxu0 0.0
    %2076 = vmatpush1.xpose.msra.mxu0 0.0
    %2077 = vmatprep.subr.mxu0 0.0
    %2078 = vmatpush1.xpose.msra.mxu0 0.0
    %2079 = vmatprep.subr.mxu0 0.0
    %2080 = vmatpush1.xpose.msra.mxu0 0.0
    %2081 = vmatprep.subr.mxu0 0.0
    %2082 = vmatpush1.xpose.msra.mxu0 0.0
    %2083 = vmatprep.subr.mxu0 0.0
    %2084 = vmatpush1.xpose.msra.mxu0 0.0
    %2085 = vmatprep.subr.mxu0 0.0
    %2086 = vmatpush1.xpose.msra.mxu0 0.0
    %2087 = vmatprep.subr.mxu0 0.0
    %2088 = vmatpush1.xpose.msra.mxu0 0.0
    %2089 = vmatprep.subr.mxu0 0.0
    %2090 = vmatpush1.xpose.msra.mxu0 0.0
    %2091 = vmatprep.subr.mxu0 0.0
    %2092 = vmatpush1.xpose.msra.mxu0 0.0
    %2093 = vmatprep.subr.mxu0 0.0
    %2094 = vmatpush1.xpose.msra.mxu0 0.0
    %2095 = vmatprep.subr.mxu0 0.0
    %2096 = vmatpush1.xpose.msra.mxu0 0.0
    %2097 = vmatprep.subr.mxu0 0.0
    %2098 = vmatpush1.xpose.msra.mxu0 0.0
    %2099 = vmatprep.subr.mxu0 0.0
    %2100 = vmatpush1.xpose.msra.mxu0 0.0
    %2101 = vmatprep.subr.mxu0 0.0
    %2102 = vmatpush1.xpose.msra.mxu0 0.0
    %2103 = vmatprep.subr.mxu0 0.0
    %2104 = vmatpush1.xpose.msra.mxu0 0.0
    %2105 = vmatprep.subr.mxu0 0.0
    %2106 = vmatpush1.xpose.msra.mxu0 0.0
    %2107 = vmatprep.subr.mxu0 0.0
    %2108 = vmatpush1.xpose.msra.mxu0 0.0
    %2109 = vmatprep.subr.mxu0 0.0
    %2110 = vmatpush1.xpose.msra.mxu0 0.0
    %2111 = vmatprep.subr.mxu0 0.0
    %2112 = vmatpush1.xpose.msra.mxu0 0.0
    %2113 = vmatprep.subr.mxu0 0.0
    %2114 = vmatpush1.xpose.msra.mxu0 0.0
    %2115 = vmatprep.subr.mxu0 0.0
    %2116 = vmatpush1.xpose.msra.mxu0 0.0
    %2117 = vmatprep.subr.mxu0 0.0
    %2118 = vmatpush1.xpose.msra.mxu0 0.0
    %2119 = vmatprep.subr.mxu0 0.0
    %2120 = vmatpush1.xpose.msra.mxu0 0.0
    %2121 = vmatprep.subr.mxu0 0.0
    %2122 = vmatpush1.xpose.msra.mxu0 0.0
    %2123 = vmatprep.subr.mxu0 0.0
    %2124 = vmatpush1.xpose.msra.mxu0 0.0
    %2125 = vmatprep.subr.mxu0 0.0
    %2126 = vmatpush1.xpose.msra.mxu0 0.0
    %2127 = vmatprep.mubr.f32.mxu0 0.0
    %2128 = vmatmul.mubr.f32.gmra.mrb[0].mxu0 %v2061
    %v2129 = vpop.f32.mrb[0].mxu0
    %v2130 = vadd.f32 0.0, %v2129
    %v2131 = vpop.f32.mrb[0].mxu0
    %2132 = vdwg.mxu0
    %v2133 = vmul.f32 %v2130, 0.17677669
    %v2134 = vsel %vm578, %v2133, -inf
    %2135 = vmax.xlane.f32.xlu0 %v2134
    %v2136 = vpop.xlane.xlu0 %2135
    %v2137 = vsub.f32 %v2133, %v2136
    %v2138 = vmul.f32 %v2137, 1.442695
    %v2139 = vpow.pop %v2138
    %v2140 = vsel %vm578, %v2139, 0.0
    %2141 = vadd.xlane.f32.xlu0 %v2140
    %v2142 = vpop.xlane.xlu0 %2141
    %v2143 = vrcp.pop %v2142
    %v2144 = vmul.f32 %v2139, %v2143
    %v2146 = vsel %vm592, %v2144, 0
    %2148 = vmatprep.subr.mxu0 0.0
    %2149 = vmatpush1.msra.mxu0 %v1983
    %2150 = vmatprep.subr.mxu0 0.0
    %2151 = vmatpush1.msra.mxu0 0.0
    %2152 = vmatprep.subr.mxu0 0.0
    %2153 = vmatpush1.msra.mxu0 0.0
    %2154 = vmatprep.subr.mxu0 0.0
    %2155 = vmatpush1.msra.mxu0 0.0
    %2156 = vmatprep.subr.mxu0 0.0
    %2157 = vmatpush1.msra.mxu0 0.0
    %2158 = vmatprep.subr.mxu0 0.0
    %2159 = vmatpush1.msra.mxu0 0.0
    %2160 = vmatprep.subr.mxu0 0.0
    %2161 = vmatpush1.msra.mxu0 0.0
    %2162 = vmatprep.subr.mxu0 0.0
    %2163 = vmatpush1.msra.mxu0 0.0
    %2164 = vmatprep.subr.mxu0 0.0
    %2165 = vmatpush1.msra.mxu0 0.0
    %2166 = vmatprep.subr.mxu0 0.0
    %2167 = vmatpush1.msra.mxu0 0.0
    %2168 = vmatprep.subr.mxu0 0.0
    %2169 = vmatpush1.msra.mxu0 0.0
    %2170 = vmatprep.subr.mxu0 0.0
    %2171 = vmatpush1.msra.mxu0 0.0
    %2172 = vmatprep.subr.mxu0 0.0
    %2173 = vmatpush1.msra.mxu0 0.0
    %2174 = vmatprep.subr.mxu0 0.0
    %2175 = vmatpush1.msra.mxu0 0.0
    %2176 = vmatprep.subr.mxu0 0.0
    %2177 = vmatpush1.msra.mxu0 0.0
    %2178 = vmatprep.subr.mxu0 0.0
    %2179 = vmatpush1.msra.mxu0 0.0
    %2180 = vmatprep.subr.mxu0 0.0
    %2181 = vmatpush1.msra.mxu0 0.0
    %2182 = vmatprep.subr.mxu0 0.0
    %2183 = vmatpush1.msra.mxu0 0.0
    %2184 = vmatprep.subr.mxu0 0.0
    %2185 = vmatpush1.msra.mxu0 0.0
    %2186 = vmatprep.subr.mxu0 0.0
    %2187 = vmatpush1.msra.mxu0 0.0
    %2188 = vmatprep.subr.mxu0 0.0
    %2189 = vmatpush1.msra.mxu0 0.0
    %2190 = vmatprep.subr.mxu0 0.0
    %2191 = vmatpush1.msra.mxu0 0.0
    %2192 = vmatprep.subr.mxu0 0.0
    %2193 = vmatpush1.msra.mxu0 0.0
    %2194 = vmatprep.subr.mxu0 0.0
    %2195 = vmatpush1.msra.mxu0 0.0
    %2196 = vmatprep.subr.mxu0 0.0
    %2197 = vmatpush1.msra.mxu0 0.0
    %2198 = vmatprep.subr.mxu0 0.0
    %2199 = vmatpush1.msra.mxu0 0.0
    %2200 = vmatprep.subr.mxu0 0.0
    %2201 = vmatpush1.msra.mxu0 0.0
    %2202 = vmatprep.subr.mxu0 0.0
    %2203 = vmatpush1.msra.mxu0 0.0
    %2204 = vmatprep.subr.mxu0 0.0
    %2205 = vmatpush1.msra.mxu0 0.0
    %2206 = vmatprep.subr.mxu0 0.0
    %2207 = vmatpush1.msra.mxu0 0.0
    %2208 = vmatprep.subr.mxu0 0.0
    %2209 = vmatpush1.msra.mxu0 0.0
    %2210 = vmatprep.subr.mxu0 0.0
    %2211 = vmatpush1.msra.mxu0 0.0
    %2212 = vmatprep.mubr.f32.mxu0 0.0
    %2213 = vmatmul.mubr.f32.gmra.mrb[0].mxu0 %v2146
    %v2214 = vpop.f32.mrb[0].mxu0
    %v2215 = vadd.f32 0.0, %v2214
    %v2216 = vpop.f32.mrb[0].mxu0
    %2217 = vdwg.mxu0
    %v2218 = vld [vmem:[%s41 + $0x20] sm:$0xff]
    %v2219 = vld [vmem:[%s41 + $0x28] sm:$0xff]
    %v2220 = vld [vmem:[%s41 + $0x30] sm:$0xff]
    %v2221 = vld [vmem:[%s41 + $0x38] sm:$0xff]
    %v2223 = vsel %vm502, %v2215, 0
    %2225 = vmatprep.subr.mxu0 0.0
    %2226 = vmatpush1.msra.mxu0 %v2218
    %2227 = vmatprep.subr.mxu0 0.0
    %2228 = vmatpush1.msra.mxu0 %v2219
    %2229 = vmatprep.subr.mxu0 0.0
    %2230 = vmatpush1.msra.mxu0 %v2220
    %2231 = vmatprep.subr.mxu0 0.0
    %2232 = vmatpush1.msra.mxu0 %v2221
    %2233 = vmatprep.subr.mxu0 0.0
    %2234 = vmatpush1.msra.mxu0 0.0
    %2235 = vmatprep.subr.mxu0 0.0
    %2236 = vmatpush1.msra.mxu0 0.0
    %2237 = vmatprep.subr.mxu0 0.0
    %2238 = vmatpush1.msra.mxu0 0.0
    %2239 = vmatprep.subr.mxu0 0.0
    %2240 = vmatpush1.msra.mxu0 0.0
    %2241 = vmatprep.subr.mxu0 0.0
    %2242 = vmatpush1.msra.mxu0 0.0
    %2243 = vmatprep.subr.mxu0 0.0
    %2244 = vmatpush1.msra.mxu0 0.0
    %2245 = vmatprep.subr.mxu0 0.0
    %2246 = vmatpush1.msra.mxu0 0.0
    %2247 = vmatprep.subr.mxu0 0.0
    %2248 = vmatpush1.msra.mxu0 0.0
    %2249 = vmatprep.subr.mxu0 0.0
    %2250 = vmatpush1.msra.mxu0 0.0
    %2251 = vmatprep.subr.mxu0 0.0
    %2252 = vmatpush1.msra.mxu0 0.0
    %2253 = vmatprep.subr.mxu0 0.0
    %2254 = vmatpush1.msra.mxu0 0.0
    %2255 = vmatprep.subr.mxu0 0.0
    %2256 = vmatpush1.msra.mxu0 0.0
    %2257 = vmatprep.subr.mxu0 0.0
    %2258 = vmatpush1.msra.mxu0 0.0
    %2259 = vmatprep.subr.mxu0 0.0
    %2260 = vmatpush1.msra.mxu0 0.0
    %2261 = vmatprep.subr.mxu0 0.0
    %2262 = vmatpush1.msra.mxu0 0.0
    %2263 = vmatprep.subr.mxu0 0.0
    %2264 = vmatpush1.msra.mxu0 0.0
    %2265 = vmatprep.subr.mxu0 0.0
    %2266 = vmatpush1.msra.mxu0 0.0
    %2267 = vmatprep.subr.mxu0 0.0
    %2268 = vmatpush1.msra.mxu0 0.0
    %2269 = vmatprep.subr.mxu0 0.0
    %2270 = vmatpush1.msra.mxu0 0.0
    %2271 = vmatprep.subr.mxu0 0.0
    %2272 = vmatpush1.msra.mxu0 0.0
    %2273 = vmatprep.subr.mxu0 0.0
    %2274 = vmatpush1.msra.mxu0 0.0
    %2275 = vmatprep.subr.mxu0 0.0
    %2276 = vmatpush1.msra.mxu0 0.0
    %2277 = vmatprep.subr.mxu0 0.0
    %2278 = vmatpush1.msra.mxu0 0.0
    %2279 = vmatprep.subr.mxu0 0.0
    %2280 = vmatpush1.msra.mxu0 0.0
    %2281 = vmatprep.subr.mxu0 0.0
    %2282 = vmatpush1.msra.mxu0 0.0
    %2283 = vmatprep.subr.mxu0 0.0
    %2284 = vmatpush1.msra.mxu0 0.0
    %2285 = vmatprep.subr.mxu0 0.0
    %2286 = vmatpush1.msra.mxu0 0.0
    %2287 = vmatprep.subr.mxu0 0.0
    %2288 = vmatpush1.msra.mxu0 0.0
    %2289 = vmatprep.mubr.f32.mxu0 0.0
    %2290 = vmatmul.mubr.f32.gmra.mrb[0].mxu0 %v2223
    %v2291 = vpop.f32.mrb[0].mxu0
    %v2292 = vadd.f32 0.0, %v2291
    %v2293 = vpop.f32.mrb[0].mxu0
    %2294 = vdwg.mxu0
    %v2296 = vsel %vm502, %v2052, 0
    %2298 = vmatprep.subr.mxu0 0.0
    %2299 = vmatpush1.msra.mxu0 %v2055
    %2300 = vmatprep.subr.mxu0 0.0
    %2301 = vmatpush1.msra.mxu0 %v2056
    %2302 = vmatprep.subr.mxu0 0.0
    %2303 = vmatpush1.msra.mxu0 %v2057
    %2304 = vmatprep.subr.mxu0 0.0
    %2305 = vmatpush1.msra.mxu0 %v2058
    %2306 = vmatprep.subr.mxu0 0.0
    %2307 = vmatpush1.msra.mxu0 0.0
    %2308 = vmatprep.subr.mxu0 0.0
    %2309 = vmatpush1.msra.mxu0 0.0
    %2310 = vmatprep.subr.mxu0 0.0
    %2311 = vmatpush1.msra.mxu0 0.0
    %2312 = vmatprep.subr.mxu0 0.0
    %2313 = vmatpush1.msra.mxu0 0.0
    %2314 = vmatprep.subr.mxu0 0.0
    %2315 = vmatpush1.msra.mxu0 0.0
    %2316 = vmatprep.subr.mxu0 0.0
    %2317 = vmatpush1.msra.mxu0 0.0
    %2318 = vmatprep.subr.mxu0 0.0
    %2319 = vmatpush1.msra.mxu0 0.0
    %2320 = vmatprep.subr.mxu0 0.0
    %2321 = vmatpush1.msra.mxu0 0.0
    %2322 = vmatprep.subr.mxu0 0.0
    %2323 = vmatpush1.msra.mxu0 0.0
    %2324 = vmatprep.subr.mxu0 0.0
    %2325 = vmatpush1.msra.mxu0 0.0
    %2326 = vmatprep.subr.mxu0 0.0
    %2327 = vmatpush1.msra.mxu0 0.0
    %2328 = vmatprep.subr.mxu0 0.0
    %2329 = vmatpush1.msra.mxu0 0.0
    %2330 = vmatprep.subr.mxu0 0.0
    %2331 = vmatpush1.msra.mxu0 0.0
    %2332 = vmatprep.subr.mxu0 0.0
    %2333 = vmatpush1.msra.mxu0 0.0
    %2334 = vmatprep.subr.mxu0 0.0
    %2335 = vmatpush1.msra.mxu0 0.0
    %2336 = vmatprep.subr.mxu0 0.0
    %2337 = vmatpush1.msra.mxu0 0.0
    %2338 = vmatprep.subr.mxu0 0.0
    %2339 = vmatpush1.msra.mxu0 0.0
    %2340 = vmatprep.subr.mxu0 0.0
    %2341 = vmatpush1.msra.mxu0 0.0
    %2342 = vmatprep.subr.mxu0 0.0
    %2343 = vmatpush1.msra.mxu0 0.0
    %2344 = vmatprep.subr.mxu0 0.0
    %2345 = vmatpush1.msra.mxu0 0.0
    %2346 = vmatprep.subr.mxu0 0.0
    %2347 = vmatpush1.msra.mxu0 0.0
    %2348 = vmatprep.subr.mxu0 0.0
    %2349 = vmatpush1.msra.mxu0 0.0
    %2350 = vmatprep.subr.mxu0 0.0
    %2351 = vmatpush1.msra.mxu0 0.0
    %2352 = vmatprep.subr.mxu0 0.0
    %2353 = vmatpush1.msra.mxu0 0.0
    %2354 = vmatprep.subr.mxu0 0.0
    %2355 = vmatpush1.msra.mxu0 0.0
    %2356 = vmatprep.subr.mxu0 0.0
    %2357 = vmatpush1.msra.mxu0 0.0
    %2358 = vmatprep.subr.mxu0 0.0
    %2359 = vmatpush1.msra.mxu0 0.0
    %2360 = vmatprep.subr.mxu0 0.0
    %2361 = vmatpush1.msra.mxu0 0.0
    %2362 = vmatprep.mubr.f32.mxu0 0.0
    %2363 = vmatmul.mubr.f32.gmra.mrb[0].mxu0 %v2296
    %v2364 = vpop.f32.mrb[0].mxu0
    %v2365 = vadd.f32 %v2292, %v2364
    %v2366 = vpop.f32.mrb[0].mxu0
    %2367 = vdwg.mxu0
    %v2368 = vld [vmem:[#allocation2] sm:$0x1f]
    %v2369 = vadd.f32 %v2368, %v2365
    %v2370 = vld [vmem:[%s43] sm:$0x1]
    %v2372 = vlaneseq
    %v2373 = vshrl.u32 %v2372, 7
    %v2374 = vsub.s32 0, %v2373
    %v2375 = vrot.slane %v2370, %v2374
    %v2377 = vadd.f32 %v2369, %v2375
    %2378 = vst.msk [vmem:[#allocation2] sm:$0x1f] %vm992, %v2377
    %v2379 = vld [vmem:[#allocation3 + $0x5] sm:$0x1f]
    %2381 = vrot.lane.b32.xlu0 %v2379, 64
    %v2382 = vpop.permute.xlu0 %2381
    %v2383 = vsel %vm502, %v2379, 0
    %v2385 = vsel %vm502, %v2382, 0
    %2387 = vmatprep.subr.mxu0 0.0
    %2388 = vmatpush1.xpose.msra.mxu0 %v2385
    %2389 = vmatprep.subr.mxu0 0.0
    %2390 = vmatpush1.xpose.msra.mxu0 0.0
    %2391 = vmatprep.subr.mxu0 0.0
    %2392 = vmatpush1.xpose.msra.mxu0 0.0
    %2393 = vmatprep.subr.mxu0 0.0
    %2394 = vmatpush1.xpose.msra.mxu0 0.0
    %2395 = vmatprep.subr.mxu0 0.0
    %2396 = vmatpush1.xpose.msra.mxu0 0.0
    %2397 = vmatprep.subr.mxu0 0.0
    %2398 = vmatpush1.xpose.msra.mxu0 0.0
    %2399 = vmatprep.subr.mxu0 0.0
    %2400 = vmatpush1.xpose.msra.mxu0 0.0
    %2401 = vmatprep.subr.mxu0 0.0
    %2402 = vmatpush1.xpose.msra.mxu0 0.0
    %2403 = vmatprep.subr.mxu0 0.0
    %2404 = vmatpush1.xpose.msra.mxu0 0.0
    %2405 = vmatprep.subr.mxu0 0.0
    %2406 = vmatpush1.xpose.msra.mxu0 0.0
    %2407 = vmatprep.subr.mxu0 0.0
    %2408 = vmatpush1.xpose.msra.mxu0 0.0
    %2409 = vmatprep.subr.mxu0 0.0
    %2410 = vmatpush1.xpose.msra.mxu0 0.0
    %2411 = vmatprep.subr.mxu0 0.0
    %2412 = vmatpush1.xpose.msra.mxu0 0.0
    %2413 = vmatprep.subr.mxu0 0.0
    %2414 = vmatpush1.xpose.msra.mxu0 0.0
    %2415 = vmatprep.subr.mxu0 0.0
    %2416 = vmatpush1.xpose.msra.mxu0 0.0
    %2417 = vmatprep.subr.mxu0 0.0
    %2418 = vmatpush1.xpose.msra.mxu0 0.0
    %2419 = vmatprep.subr.mxu0 0.0
    %2420 = vmatpush1.xpose.msra.mxu0 0.0
    %2421 = vmatprep.subr.mxu0 0.0
    %2422 = vmatpush1.xpose.msra.mxu0 0.0
    %2423 = vmatprep.subr.mxu0 0.0
    %2424 = vmatpush1.xpose.msra.mxu0 0.0
    %2425 = vmatprep.subr.mxu0 0.0
    %2426 = vmatpush1.xpose.msra.mxu0 0.0
    %2427 = vmatprep.subr.mxu0 0.0
    %2428 = vmatpush1.xpose.msra.mxu0 0.0
    %2429 = vmatprep.subr.mxu0 0.0
    %2430 = vmatpush1.xpose.msra.mxu0 0.0
    %2431 = vmatprep.subr.mxu0 0.0
    %2432 = vmatpush1.xpose.msra.mxu0 0.0
    %2433 = vmatprep.subr.mxu0 0.0
    %2434 = vmatpush1.xpose.msra.mxu0 0.0
    %2435 = vmatprep.subr.mxu0 0.0
    %2436 = vmatpush1.xpose.msra.mxu0 0.0
    %2437 = vmatprep.subr.mxu0 0.0
    %2438 = vmatpush1.xpose.msra.mxu0 0.0
    %2439 = vmatprep.subr.mxu0 0.0
    %2440 = vmatpush1.xpose.msra.mxu0 0.0
    %2441 = vmatprep.subr.mxu0 0.0
    %2442 = vmatpush1.xpose.msra.mxu0 0.0
    %2443 = vmatprep.subr.mxu0 0.0
    %2444 = vmatpush1.xpose.msra.mxu0 0.0
    %2445 = vmatprep.subr.mxu0 0.0
    %2446 = vmatpush1.xpose.msra.mxu0 0.0
    %2447 = vmatprep.subr.mxu0 0.0
    %2448 = vmatpush1.xpose.msra.mxu0 0.0
    %2449 = vmatprep.subr.mxu0 0.0
    %2450 = vmatpush1.xpose.msra.mxu0 0.0
    %2451 = vmatprep.mubr.f32.mxu0 0.0
    %2452 = vmatmul.mubr.f32.gmra.mrb[0].mxu0 %v2383
    %v2453 = vpop.f32.mrb[0].mxu0
    %v2454 = vadd.f32 0.0, %v2453
    %v2455 = vpop.f32.mrb[0].mxu0
    %2456 = vdwg.mxu0
    %v2457 = vmul.f32 %v2454, 0.17677669
    %v2458 = vsel %vm578, %v2457, -inf
    %2459 = vmax.xlane.f32.xlu0 %v2458
    %v2460 = vpop.xlane.xlu0 %2459
    %v2461 = vsub.f32 %v2457, %v2460
    %v2462 = vmul.f32 %v2461, 1.442695
    %v2463 = vpow.pop %v2462
    %v2464 = vsel %vm578, %v2463, 0.0
    %2465 = vadd.xlane.f32.xlu0 %v2464
    %v2466 = vpop.xlane.xlu0 %2465
    %v2467 = vrcp.pop %v2466
    %v2468 = vmul.f32 %v2463, %v2467
    %2469 = vrot.lane.b32.xlu0 %v2379, 32
    %v2470 = vpop.permute.xlu0 %2469
    %v2472 = vsel %vm592, %v2468, 0
    %v2474 = vsel %vm596, %v2470, 0
    %2476 = vmatprep.subr.mxu0 0.0
    %2477 = vmatpush1.msra.mxu0 %v2474
    %2478 = vmatprep.subr.mxu0 0.0
    %2479 = vmatpush1.msra.mxu0 0.0
    %2480 = vmatprep.subr.mxu0 0.0
    %2481 = vmatpush1.msra.mxu0 0.0
    %2482 = vmatprep.subr.mxu0 0.0
    %2483 = vmatpush1.msra.mxu0 0.0
    %2484 = vmatprep.subr.mxu0 0.0
    %2485 = vmatpush1.msra.mxu0 0.0
    %2486 = vmatprep.subr.mxu0 0.0
    %2487 = vmatpush1.msra.mxu0 0.0
    %2488 = vmatprep.subr.mxu0 0.0
    %2489 = vmatpush1.msra.mxu0 0.0
    %2490 = vmatprep.subr.mxu0 0.0
    %2491 = vmatpush1.msra.mxu0 0.0
    %2492 = vmatprep.subr.mxu0 0.0
    %2493 = vmatpush1.msra.mxu0 0.0
    %2494 = vmatprep.subr.mxu0 0.0
    %2495 = vmatpush1.msra.mxu0 0.0
    %2496 = vmatprep.subr.mxu0 0.0
    %2497 = vmatpush1.msra.mxu0 0.0
    %2498 = vmatprep.subr.mxu0 0.0
    %2499 = vmatpush1.msra.mxu0 0.0
    %2500 = vmatprep.subr.mxu0 0.0
    %2501 = vmatpush1.msra.mxu0 0.0
    %2502 = vmatprep.subr.mxu0 0.0
    %2503 = vmatpush1.msra.mxu0 0.0
    %2504 = vmatprep.subr.mxu0 0.0
    %2505 = vmatpush1.msra.mxu0 0.0
    %2506 = vmatprep.subr.mxu0 0.0
    %2507 = vmatpush1.msra.mxu0 0.0
    %2508 = vmatprep.subr.mxu0 0.0
    %2509 = vmatpush1.msra.mxu0 0.0
    %2510 = vmatprep.subr.mxu0 0.0
    %2511 = vmatpush1.msra.mxu0 0.0
    %2512 = vmatprep.subr.mxu0 0.0
    %2513 = vmatpush1.msra.mxu0 0.0
    %2514 = vmatprep.subr.mxu0 0.0
    %2515 = vmatpush1.msra.mxu0 0.0
    %2516 = vmatprep.subr.mxu0 0.0
    %2517 = vmatpush1.msra.mxu0 0.0
    %2518 = vmatprep.subr.mxu0 0.0
    %2519 = vmatpush1.msra.mxu0 0.0
    %2520 = vmatprep.subr.mxu0 0.0
    %2521 = vmatpush1.msra.mxu0 0.0
    %2522 = vmatprep.subr.mxu0 0.0
    %2523 = vmatpush1.msra.mxu0 0.0
    %2524 = vmatprep.subr.mxu0 0.0
    %2525 = vmatpush1.msra.mxu0 0.0
    %2526 = vmatprep.subr.mxu0 0.0
    %2527 = vmatpush1.msra.mxu0 0.0
    %2528 = vmatprep.subr.mxu0 0.0
    %2529 = vmatpush1.msra.mxu0 0.0
    %2530 = vmatprep.subr.mxu0 0.0
    %2531 = vmatpush1.msra.mxu0 0.0
    %2532 = vmatprep.subr.mxu0 0.0
    %2533 = vmatpush1.msra.mxu0 0.0
    %2534 = vmatprep.subr.mxu0 0.0
    %2535 = vmatpush1.msra.mxu0 0.0
    %2536 = vmatprep.subr.mxu0 0.0
    %2537 = vmatpush1.msra.mxu0 0.0
    %2538 = vmatprep.subr.mxu0 0.0
    %2539 = vmatpush1.msra.mxu0 0.0
    %2540 = vmatprep.mubr.f32.mxu0 0.0
    %2541 = vmatmul.mubr.f32.gmra.mrb[0].mxu0 %v2472
    %v2542 = vpop.f32.mrb[0].mxu0
    %v2543 = vadd.f32 0.0, %v2542
    %v2544 = vpop.f32.mrb[0].mxu0
    %2545 = vdwg.mxu0
    %v2546 = vld [vmem:[%s41] sm:$0xff]
    %v2547 = vld [vmem:[%s41 + $0x8] sm:$0xff]
    %v2548 = vld [vmem:[%s41 + $0x10] sm:$0xff]
    %v2549 = vld [vmem:[%s41 + $0x18] sm:$0xff]
    %2550 = vrot.lane.b32.xlu0 %v2379, 96
    %v2551 = vpop.permute.xlu0 %2550
    %v2552 = vsel %vm502, %v2551, 0
    %2554 = vmatprep.subr.mxu0 0.0
    %2555 = vmatpush1.xpose.msra.mxu0 %v2385
    %2556 = vmatprep.subr.mxu0 0.0
    %2557 = vmatpush1.xpose.msra.mxu0 0.0
    %2558 = vmatprep.subr.mxu0 0.0
    %2559 = vmatpush1.xpose.msra.mxu0 0.0
    %2560 = vmatprep.subr.mxu0 0.0
    %2561 = vmatpush1.xpose.msra.mxu0 0.0
    %2562 = vmatprep.subr.mxu0 0.0
    %2563 = vmatpush1.xpose.msra.mxu0 0.0
    %2564 = vmatprep.subr.mxu0 0.0
    %2565 = vmatpush1.xpose.msra.mxu0 0.0
    %2566 = vmatprep.subr.mxu0 0.0
    %2567 = vmatpush1.xpose.msra.mxu0 0.0
    %2568 = vmatprep.subr.mxu0 0.0
    %2569 = vmatpush1.xpose.msra.mxu0 0.0
    %2570 = vmatprep.subr.mxu0 0.0
    %2571 = vmatpush1.xpose.msra.mxu0 0.0
    %2572 = vmatprep.subr.mxu0 0.0
    %2573 = vmatpush1.xpose.msra.mxu0 0.0
    %2574 = vmatprep.subr.mxu0 0.0
    %2575 = vmatpush1.xpose.msra.mxu0 0.0
    %2576 = vmatprep.subr.mxu0 0.0
    %2577 = vmatpush1.xpose.msra.mxu0 0.0
    %2578 = vmatprep.subr.mxu0 0.0
    %2579 = vmatpush1.xpose.msra.mxu0 0.0
    %2580 = vmatprep.subr.mxu0 0.0
    %2581 = vmatpush1.xpose.msra.mxu0 0.0
    %2582 = vmatprep.subr.mxu0 0.0
    %2583 = vmatpush1.xpose.msra.mxu0 0.0
    %2584 = vmatprep.subr.mxu0 0.0
    %2585 = vmatpush1.xpose.msra.mxu0 0.0
    %2586 = vmatprep.subr.mxu0 0.0
    %2587 = vmatpush1.xpose.msra.mxu0 0.0
    %2588 = vmatprep.subr.mxu0 0.0
    %2589 = vmatpush1.xpose.msra.mxu0 0.0
    %2590 = vmatprep.subr.mxu0 0.0
    %2591 = vmatpush1.xpose.msra.mxu0 0.0
    %2592 = vmatprep.subr.mxu0 0.0
    %2593 = vmatpush1.xpose.msra.mxu0 0.0
    %2594 = vmatprep.subr.mxu0 0.0
    %2595 = vmatpush1.xpose.msra.mxu0 0.0
    %2596 = vmatprep.subr.mxu0 0.0
    %2597 = vmatpush1.xpose.msra.mxu0 0.0
    %2598 = vmatprep.subr.mxu0 0.0
    %2599 = vmatpush1.xpose.msra.mxu0 0.0
    %2600 = vmatprep.subr.mxu0 0.0
    %2601 = vmatpush1.xpose.msra.mxu0 0.0
    %2602 = vmatprep.subr.mxu0 0.0
    %2603 = vmatpush1.xpose.msra.mxu0 0.0
    %2604 = vmatprep.subr.mxu0 0.0
    %2605 = vmatpush1.xpose.msra.mxu0 0.0
    %2606 = vmatprep.subr.mxu0 0.0
    %2607 = vmatpush1.xpose.msra.mxu0 0.0
    %2608 = vmatprep.subr.mxu0 0.0
    %2609 = vmatpush1.xpose.msra.mxu0 0.0
    %2610 = vmatprep.subr.mxu0 0.0
    %2611 = vmatpush1.xpose.msra.mxu0 0.0
    %2612 = vmatprep.subr.mxu0 0.0
    %2613 = vmatpush1.xpose.msra.mxu0 0.0
    %2614 = vmatprep.subr.mxu0 0.0
    %2615 = vmatpush1.xpose.msra.mxu0 0.0
    %2616 = vmatprep.subr.mxu0 0.0
    %2617 = vmatpush1.xpose.msra.mxu0 0.0
    %2618 = vmatprep.mubr.f32.mxu0 0.0
    %2619 = vmatmul.mubr.f32.gmra.mrb[0].mxu0 %v2552
    %v2620 = vpop.f32.mrb[0].mxu0
    %v2621 = vadd.f32 0.0, %v2620
    %v2622 = vpop.f32.mrb[0].mxu0
    %2623 = vdwg.mxu0
    %v2624 = vmul.f32 %v2621, 0.17677669
    %v2625 = vsel %vm578, %v2624, -inf
    %2626 = vmax.xlane.f32.xlu0 %v2625
    %v2627 = vpop.xlane.xlu0 %2626
    %v2628 = vsub.f32 %v2624, %v2627
    %v2629 = vmul.f32 %v2628, 1.442695
    %v2630 = vpow.pop %v2629
    %v2631 = vsel %vm578, %v2630, 0.0
    %2632 = vadd.xlane.f32.xlu0 %v2631
    %v2633 = vpop.xlane.xlu0 %2632
    %v2634 = vrcp.pop %v2633
    %v2635 = vmul.f32 %v2630, %v2634
    %v2637 = vsel %vm592, %v2635, 0
    %2639 = vmatprep.subr.mxu0 0.0
    %2640 = vmatpush1.msra.mxu0 %v2474
    %2641 = vmatprep.subr.mxu0 0.0
    %2642 = vmatpush1.msra.mxu0 0.0
    %2643 = vmatprep.subr.mxu0 0.0
    %2644 = vmatpush1.msra.mxu0 0.0
    %2645 = vmatprep.subr.mxu0 0.0
    %2646 = vmatpush1.msra.mxu0 0.0
    %2647 = vmatprep.subr.mxu0 0.0
    %2648 = vmatpush1.msra.mxu0 0.0
    %2649 = vmatprep.subr.mxu0 0.0
    %2650 = vmatpush1.msra.mxu0 0.0
    %2651 = vmatprep.subr.mxu0 0.0
    %2652 = vmatpush1.msra.mxu0 0.0
    %2653 = vmatprep.subr.mxu0 0.0
    %2654 = vmatpush1.msra.mxu0 0.0
    %2655 = vmatprep.subr.mxu0 0.0
    %2656 = vmatpush1.msra.mxu0 0.0
    %2657 = vmatprep.subr.mxu0 0.0
    %2658 = vmatpush1.msra.mxu0 0.0
    %2659 = vmatprep.subr.mxu0 0.0
    %2660 = vmatpush1.msra.mxu0 0.0
    %2661 = vmatprep.subr.mxu0 0.0
    %2662 = vmatpush1.msra.mxu0 0.0
    %2663 = vmatprep.subr.mxu0 0.0
    %2664 = vmatpush1.msra.mxu0 0.0
    %2665 = vmatprep.subr.mxu0 0.0
    %2666 = vmatpush1.msra.mxu0 0.0
    %2667 = vmatprep.subr.mxu0 0.0
    %2668 = vmatpush1.msra.mxu0 0.0
    %2669 = vmatprep.subr.mxu0 0.0
    %2670 = vmatpush1.msra.mxu0 0.0
    %2671 = vmatprep.subr.mxu0 0.0
    %2672 = vmatpush1.msra.mxu0 0.0
    %2673 = vmatprep.subr.mxu0 0.0
    %2674 = vmatpush1.msra.mxu0 0.0
    %2675 = vmatprep.subr.mxu0 0.0
    %2676 = vmatpush1.msra.mxu0 0.0
    %2677 = vmatprep.subr.mxu0 0.0
    %2678 = vmatpush1.msra.mxu0 0.0
    %2679 = vmatprep.subr.mxu0 0.0
    %2680 = vmatpush1.msra.mxu0 0.0
    %2681 = vmatprep.subr.mxu0 0.0
    %2682 = vmatpush1.msra.mxu0 0.0
    %2683 = vmatprep.subr.mxu0 0.0
    %2684 = vmatpush1.msra.mxu0 0.0
    %2685 = vmatprep.subr.mxu0 0.0
    %2686 = vmatpush1.msra.mxu0 0.0
    %2687 = vmatprep.subr.mxu0 0.0
    %2688 = vmatpush1.msra.mxu0 0.0
    %2689 = vmatprep.subr.mxu0 0.0
    %2690 = vmatpush1.msra.mxu0 0.0
    %2691 = vmatprep.subr.mxu0 0.0
    %2692 = vmatpush1.msra.mxu0 0.0
    %2693 = vmatprep.subr.mxu0 0.0
    %2694 = vmatpush1.msra.mxu0 0.0
    %2695 = vmatprep.subr.mxu0 0.0
    %2696 = vmatpush1.msra.mxu0 0.0
    %2697 = vmatprep.subr.mxu0 0.0
    %2698 = vmatpush1.msra.mxu0 0.0
    %2699 = vmatprep.subr.mxu0 0.0
    %2700 = vmatpush1.msra.mxu0 0.0
    %2701 = vmatprep.subr.mxu0 0.0
    %2702 = vmatpush1.msra.mxu0 0.0
    %2703 = vmatprep.mubr.f32.mxu0 0.0
    %2704 = vmatmul.mubr.f32.gmra.mrb[0].mxu0 %v2637
    %v2705 = vpop.f32.mrb[0].mxu0
    %v2706 = vadd.f32 0.0, %v2705
    %v2707 = vpop.f32.mrb[0].mxu0
    %2708 = vdwg.mxu0
    %v2709 = vld [vmem:[%s41 + $0x20] sm:$0xff]
    %v2710 = vld [vmem:[%s41 + $0x28] sm:$0xff]
    %v2711 = vld [vmem:[%s41 + $0x30] sm:$0xff]
    %v2712 = vld [vmem:[%s41 + $0x38] sm:$0xff]
    %v2714 = vsel %vm502, %v2706, 0
    %2716 = vmatprep.subr.mxu0 0.0
    %2717 = vmatpush1.msra.mxu0 %v2709
    %2718 = vmatprep.subr.mxu0 0.0
    %2719 = vmatpush1.msra.mxu0 %v2710
    %2720 = vmatprep.subr.mxu0 0.0
    %2721 = vmatpush1.msra.mxu0 %v2711
    %2722 = vmatprep.subr.mxu0 0.0
    %2723 = vmatpush1.msra.mxu0 %v2712
    %2724 = vmatprep.subr.mxu0 0.0
    %2725 = vmatpush1.msra.mxu0 0.0
    %2726 = vmatprep.subr.mxu0 0.0
    %2727 = vmatpush1.msra.mxu0 0.0
    %2728 = vmatprep.subr.mxu0 0.0
    %2729 = vmatpush1.msra.mxu0 0.0
    %2730 = vmatprep.subr.mxu0 0.0
    %2731 = vmatpush1.msra.mxu0 0.0
    %2732 = vmatprep.subr.mxu0 0.0
    %2733 = vmatpush1.msra.mxu0 0.0
    %2734 = vmatprep.subr.mxu0 0.0
    %2735 = vmatpush1.msra.mxu0 0.0
    %2736 = vmatprep.subr.mxu0 0.0
    %2737 = vmatpush1.msra.mxu0 0.0
    %2738 = vmatprep.subr.mxu0 0.0
    %2739 = vmatpush1.msra.mxu0 0.0
    %2740 = vmatprep.subr.mxu0 0.0
    %2741 = vmatpush1.msra.mxu0 0.0
    %2742 = vmatprep.subr.mxu0 0.0
    %2743 = vmatpush1.msra.mxu0 0.0
    %2744 = vmatprep.subr.mxu0 0.0
    %2745 = vmatpush1.msra.mxu0 0.0
    %2746 = vmatprep.subr.mxu0 0.0
    %2747 = vmatpush1.msra.mxu0 0.0
    %2748 = vmatprep.subr.mxu0 0.0
    %2749 = vmatpush1.msra.mxu0 0.0
    %2750 = vmatprep.subr.mxu0 0.0
    %2751 = vmatpush1.msra.mxu0 0.0
    %2752 = vmatprep.subr.mxu0 0.0
    %2753 = vmatpush1.msra.mxu0 0.0
    %2754 = vmatprep.subr.mxu0 0.0
    %2755 = vmatpush1.msra.mxu0 0.0
    %2756 = vmatprep.subr.mxu0 0.0
    %2757 = vmatpush1.msra.mxu0 0.0
    %2758 = vmatprep.subr.mxu0 0.0
    %2759 = vmatpush1.msra.mxu0 0.0
    %2760 = vmatprep.subr.mxu0 0.0
    %2761 = vmatpush1.msra.mxu0 0.0
    %2762 = vmatprep.subr.mxu0 0.0
    %2763 = vmatpush1.msra.mxu0 0.0
    %2764 = vmatprep.subr.mxu0 0.0
    %2765 = vmatpush1.msra.mxu0 0.0
    %2766 = vmatprep.subr.mxu0 0.0
    %2767 = vmatpush1.msra.mxu0 0.0
    %2768 = vmatprep.subr.mxu0 0.0
    %2769 = vmatpush1.msra.mxu0 0.0
    %2770 = vmatprep.subr.mxu0 0.0
    %2771 = vmatpush1.msra.mxu0 0.0
    %2772 = vmatprep.subr.mxu0 0.0
    %2773 = vmatpush1.msra.mxu0 0.0
    %2774 = vmatprep.subr.mxu0 0.0
    %2775 = vmatpush1.msra.mxu0 0.0
    %2776 = vmatprep.subr.mxu0 0.0
    %2777 = vmatpush1.msra.mxu0 0.0
    %2778 = vmatprep.subr.mxu0 0.0
    %2779 = vmatpush1.msra.mxu0 0.0
    %2780 = vmatprep.mubr.f32.mxu0 0.0
    %2781 = vmatmul.mubr.f32.gmra.mrb[0].mxu0 %v2714
    %v2782 = vpop.f32.mrb[0].mxu0
    %v2783 = vadd.f32 0.0, %v2782
    %v2784 = vpop.f32.mrb[0].mxu0
    %2785 = vdwg.mxu0
    %v2787 = vsel %vm502, %v2543, 0
    %2789 = vmatprep.subr.mxu0 0.0
    %2790 = vmatpush1.msra.mxu0 %v2546
    %2791 = vmatprep.subr.mxu0 0.0
    %2792 = vmatpush1.msra.mxu0 %v2547
    %2793 = vmatprep.subr.mxu0 0.0
    %2794 = vmatpush1.msra.mxu0 %v2548
    %2795 = vmatprep.subr.mxu0 0.0
    %2796 = vmatpush1.msra.mxu0 %v2549
    %2797 = vmatprep.subr.mxu0 0.0
    %2798 = vmatpush1.msra.mxu0 0.0
    %2799 = vmatprep.subr.mxu0 0.0
    %2800 = vmatpush1.msra.mxu0 0.0
    %2801 = vmatprep.subr.mxu0 0.0
    %2802 = vmatpush1.msra.mxu0 0.0
    %2803 = vmatprep.subr.mxu0 0.0
    %2804 = vmatpush1.msra.mxu0 0.0
    %2805 = vmatprep.subr.mxu0 0.0
    %2806 = vmatpush1.msra.mxu0 0.0
    %2807 = vmatprep.subr.mxu0 0.0
    %2808 = vmatpush1.msra.mxu0 0.0
    %2809 = vmatprep.subr.mxu0 0.0
    %2810 = vmatpush1.msra.mxu0 0.0
    %2811 = vmatprep.subr.mxu0 0.0
    %2812 = vmatpush1.msra.mxu0 0.0
    %2813 = vmatprep.subr.mxu0 0.0
    %2814 = vmatpush1.msra.mxu0 0.0
    %2815 = vmatprep.subr.mxu0 0.0
    %2816 = vmatpush1.msra.mxu0 0.0
    %2817 = vmatprep.subr.mxu0 0.0
    %2818 = vmatpush1.msra.mxu0 0.0
    %2819 = vmatprep.subr.mxu0 0.0
    %2820 = vmatpush1.msra.mxu0 0.0
    %2821 = vmatprep.subr.mxu0 0.0
    %2822 = vmatpush1.msra.mxu0 0.0
    %2823 = vmatprep.subr.mxu0 0.0
    %2824 = vmatpush1.msra.mxu0 0.0
    %2825 = vmatprep.subr.mxu0 0.0
    %2826 = vmatpush1.msra.mxu0 0.0
    %2827 = vmatprep.subr.mxu0 0.0
    %2828 = vmatpush1.msra.mxu0 0.0
    %2829 = vmatprep.subr.mxu0 0.0
    %2830 = vmatpush1.msra.mxu0 0.0
    %2831 = vmatprep.subr.mxu0 0.0
    %2832 = vmatpush1.msra.mxu0 0.0
    %2833 = vmatprep.subr.mxu0 0.0
    %2834 = vmatpush1.msra.mxu0 0.0
    %2835 = vmatprep.subr.mxu0 0.0
    %2836 = vmatpush1.msra.mxu0 0.0
    %2837 = vmatprep.subr.mxu0 0.0
    %2838 = vmatpush1.msra.mxu0 0.0
    %2839 = vmatprep.subr.mxu0 0.0
    %2840 = vmatpush1.msra.mxu0 0.0
    %2841 = vmatprep.subr.mxu0 0.0
    %2842 = vmatpush1.msra.mxu0 0.0
    %2843 = vmatprep.subr.mxu0 0.0
    %2844 = vmatpush1.msra.mxu0 0.0
    %2845 = vmatprep.subr.mxu0 0.0
    %2846 = vmatpush1.msra.mxu0 0.0
    %2847 = vmatprep.subr.mxu0 0.0
    %2848 = vmatpush1.msra.mxu0 0.0
    %2849 = vmatprep.subr.mxu0 0.0
    %2850 = vmatpush1.msra.mxu0 0.0
    %2851 = vmatprep.subr.mxu0 0.0
    %2852 = vmatpush1.msra.mxu0 0.0
    %2853 = vmatprep.mubr.f32.mxu0 0.0
    %2854 = vmatmul.mubr.f32.gmra.mrb[0].mxu0 %v2787
    %v2855 = vpop.f32.mrb[0].mxu0
    %v2856 = vadd.f32 %v2783, %v2855
    %v2857 = vpop.f32.mrb[0].mxu0
    %2858 = vdwg.mxu0
    %v2859 = vld [vmem:[#allocation2 + $0x5] sm:$0x1f]
    %v2860 = vadd.f32 %v2859, %v2856
    %v2861 = vld [vmem:[%s43] sm:$0x1]
    %v2863 = vlaneseq
    %v2864 = vshrl.u32 %v2863, 7
    %v2865 = vsub.s32 0, %v2864
    %v2866 = vrot.slane %v2861, %v2865
    %v2868 = vadd.f32 %v2860, %v2866
    %2869 = vst.msk [vmem:[#allocation2 + $0x5] sm:$0x1f] %vm992, %v2868
    %v2870 = vld [vmem:[#allocation2] sm:$0xff]
    %v2871 = vld [vmem:[#allocation2 + $0x8] sm:$0x3]
    %v2872 = vsel %vm353, %v2870, 0.0
    %2873 = vadd.xlane.f32.xlu0 %v2872
    %v2874 = vpop.xlane.xlu0 %2873
    %v2875 = vsel %vm357, %v2871, 0.0
    %2876 = vadd.xlane.f32.xlu0 %v2875
    %v2877 = vpop.xlane.xlu0 %2876
    %v2878 = vmul.f32 %v2874, %v361
    %v2879 = vmul.f32 %v2877, %v361
    %v2880 = vsub.f32 %v2870, %v2878
    %v2881 = vsub.f32 %v2871, %v2879
    %v2882 = vmul.f32 %v2880, %v2880
    %v2883 = vmul.f32 %v2881, %v2881
    %v2884 = vsel %vm353, %v2882, 0.0
    %2885 = vadd.xlane.f32.xlu0 %v2884
    %v2886 = vpop.xlane.xlu0 %2885
    %v2887 = vsel %vm357, %v2883, 0.0
    %2888 = vadd.xlane.f32.xlu0 %v2887
    %v2889 = vpop.xlane.xlu0 %2888
    %v2890 = vmul.f32 %v2886, %v361
    %v2891 = vmul.f32 %v2889, %v361
    %v2892 = vadd.f32 %v2890, 1e-05
    %v2893 = vadd.f32 %v2891, 1e-05
    %v2894 = vrsqrt.pop %v2892
    %v2895 = vrsqrt.pop %v2893
    %v2896 = vmul.f32 %v2880, %v2894
    %v2897 = vmul.f32 %v2881, %v2895
    %v2898 = vld [vmem:[%s45] sm:$0x1]
    %v2900 = vlaneseq
    %v2901 = vshrl.u32 %v2900, 7
    %v2902 = vsub.s32 0, %v2901
    %v2903 = vrot.slane %v2898, %v2902
    %v2905 = vmul.f32 %v2896, %v2903
    %v2906 = vmul.f32 %v2897, %v2903
    %v2907 = vld [vmem:[%s47] sm:$0x1]
    %v2909 = vlaneseq
    %v2910 = vshrl.u32 %v2909, 7
    %v2911 = vsub.s32 0, %v2910
    %v2912 = vrot.slane %v2907, %v2911
    %v2914 = vadd.f32 %v2905, %v2912
    %v2915 = vadd.f32 %v2906, %v2912
    %v2916 = vld [vmem:[%s49] sm:$0xff]
    %v2917 = vld [vmem:[%s49 + $0x8] sm:$0xff]
    %v2918 = vld [vmem:[%s49 + $0x10] sm:$0xff]
    %v2919 = vld [vmem:[%s49 + $0x18] sm:$0xff]
    %v2920 = vld [vmem:[%s49 + $0x20] sm:$0xff]
    %v2921 = vld [vmem:[%s49 + $0x28] sm:$0xff]
    %v2922 = vld [vmem:[%s49 + $0x30] sm:$0xff]
    %v2923 = vld [vmem:[%s49 + $0x38] sm:$0xff]
    %v2924 = vld [vmem:[%s51] sm:$0x1]
    %v2926 = vlaneseq
    %v2927 = vshrl.u32 %v2926, 7
    %v2928 = vsub.s32 0, %v2927
    %v2929 = vrot.slane %v2924, %v2928
    %v2932 = vsel %vm353, %v2914, 0
    %v2935 = vsel %vm353, %v2915, 0
    %2937 = vmatprep.subr.mxu0 0.0
    %2938 = vmatpush1.msra.mxu0 %v2916
    %2939 = vmatprep.subr.mxu0 0.0
    %2940 = vmatpush1.msra.mxu0 %v2917
    %2941 = vmatprep.subr.mxu0 0.0
    %2942 = vmatpush1.msra.mxu0 %v2918
    %2943 = vmatprep.subr.mxu0 0.0
    %2944 = vmatpush1.msra.mxu0 %v2919
    %2945 = vmatprep.subr.mxu0 0.0
    %2946 = vmatpush1.msra.mxu0 %v2920
    %2947 = vmatprep.subr.mxu0 0.0
    %2948 = vmatpush1.msra.mxu0 %v2921
    %2949 = vmatprep.subr.mxu0 0.0
    %2950 = vmatpush1.msra.mxu0 %v2922
    %2951 = vmatprep.subr.mxu0 0.0
    %2952 = vmatpush1.msra.mxu0 %v2923
    %2953 = vmatprep.subr.mxu0 0.0
    %2954 = vmatpush1.msra.mxu0 0.0
    %2955 = vmatprep.subr.mxu0 0.0
    %2956 = vmatpush1.msra.mxu0 0.0
    %2957 = vmatprep.subr.mxu0 0.0
    %2958 = vmatpush1.msra.mxu0 0.0
    %2959 = vmatprep.subr.mxu0 0.0
    %2960 = vmatpush1.msra.mxu0 0.0
    %2961 = vmatprep.subr.mxu0 0.0
    %2962 = vmatpush1.msra.mxu0 0.0
    %2963 = vmatprep.subr.mxu0 0.0
    %2964 = vmatpush1.msra.mxu0 0.0
    %2965 = vmatprep.subr.mxu0 0.0
    %2966 = vmatpush1.msra.mxu0 0.0
    %2967 = vmatprep.subr.mxu0 0.0
    %2968 = vmatpush1.msra.mxu0 0.0
    %2969 = vmatprep.subr.mxu0 0.0
    %2970 = vmatpush1.msra.mxu0 0.0
    %2971 = vmatprep.subr.mxu0 0.0
    %2972 = vmatpush1.msra.mxu0 0.0
    %2973 = vmatprep.subr.mxu0 0.0
    %2974 = vmatpush1.msra.mxu0 0.0
    %2975 = vmatprep.subr.mxu0 0.0
    %2976 = vmatpush1.msra.mxu0 0.0
    %2977 = vmatprep.subr.mxu0 0.0
    %2978 = vmatpush1.msra.mxu0 0.0
    %2979 = vmatprep.subr.mxu0 0.0
    %2980 = vmatpush1.msra.mxu0 0.0
    %2981 = vmatprep.subr.mxu0 0.0
    %2982 = vmatpush1.msra.mxu0 0.0
    %2983 = vmatprep.subr.mxu0 0.0
    %2984 = vmatpush1.msra.mxu0 0.0
    %2985 = vmatprep.subr.mxu0 0.0
    %2986 = vmatpush1.msra.mxu0 0.0
    %2987 = vmatprep.subr.mxu0 0.0
    %2988 = vmatpush1.msra.mxu0 0.0
    %2989 = vmatprep.subr.mxu0 0.0
    %2990 = vmatpush1.msra.mxu0 0.0
    %2991 = vmatprep.subr.mxu0 0.0
    %2992 = vmatpush1.msra.mxu0 0.0
    %2993 = vmatprep.subr.mxu0 0.0
    %2994 = vmatpush1.msra.mxu0 0.0
    %2995 = vmatprep.subr.mxu0 0.0
    %2996 = vmatpush1.msra.mxu0 0.0
    %2997 = vmatprep.subr.mxu0 0.0
    %2998 = vmatpush1.msra.mxu0 0.0
    %2999 = vmatprep.subr.mxu0 0.0
    %3000 = vmatpush1.msra.mxu0 0.0
    %3001 = vmatprep.mubr.f32.mxu0 0.0
    %3002 = vmatmul.mubr.f32.gmra.mrb[0].mxu0 %v2932
    %v3003 = vpop.f32.mrb[0].mxu0
    %v3004 = vadd.f32 %v2929, %v3003
    %v3005 = vpop.f32.mrb[0].mxu0
    %3006 = vmatprep.mubr.f32.mxu0 0.0
    %3007 = vmatmul.mubr.f32.gmra.mrb[0].mxu0 %v2935
    %v3008 = vpop.f32.mrb[0].mxu0
    %v3009 = vadd.f32 %v2929, %v3008
    %v3010 = vpop.f32.mrb[0].mxu0
    %3011 = vdwg.mxu0
    %v3012 = vmul.f32 %v3004, %v3004
    %v3013 = vmul.f32 %v3009, %v3009
    %v3014 = vmul.f32 %v3004, %v3012
    %v3015 = vmul.f32 %v3009, %v3013
    %v3016 = vmul.f32 %v3014, 0.044715
    %v3017 = vmul.f32 %v3015, 0.044715
    %v3018 = vadd.f32 %v3004, %v3016
    %v3019 = vadd.f32 %v3009, %v3017
    %v3020 = vmul.f32 %v3018, 0.7978846
    %v3021 = vmul.f32 %v3019, 0.7978846
    %v3022 = vtanh.pop %v3020
    %v3023 = vtanh.pop %v3021
    %v3024 = vadd.f32 %v3022, 1.0
    %v3025 = vadd.f32 %v3023, 1.0
    %v3026 = vmul.f32 %v3024, 0.5
    %v3027 = vmul.f32 %v3025, 0.5
    %v3028 = vmul.f32 %v3004, %v3026
    %v3029 = vmul.f32 %v3009, %v3027
    %v3030 = vld [vmem:[%s53] sm:$0xff]
    %v3031 = vld [vmem:[%s53 + $0x8] sm:$0xff]
    %v3032 = vld [vmem:[%s53 + $0x10] sm:$0xff]
    %v3033 = vld [vmem:[%s53 + $0x18] sm:$0xff]
    %v3034 = vld [vmem:[%s53 + $0x20] sm:$0xff]
    %v3035 = vld [vmem:[%s53 + $0x28] sm:$0xff]
    %v3036 = vld [vmem:[%s55] sm:$0x1]
    %v3038 = vlaneseq
    %v3039 = vshrl.u32 %v3038, 7
    %v3040 = vsub.s32 0, %v3039
    %v3041 = vrot.slane %v3036, %v3040
    %v3044 = vsel %vm1658, %v3028, 0
    %v3047 = vsel %vm1658, %v3029, 0
    %3049 = vmatprep.subr.mxu0 0.0
    %3050 = vmatpush1.msra.mxu0 %v3030
    %3051 = vmatprep.subr.mxu0 0.0
    %3052 = vmatpush1.msra.mxu0 %v3031
    %3053 = vmatprep.subr.mxu0 0.0
    %3054 = vmatpush1.msra.mxu0 %v3032
    %3055 = vmatprep.subr.mxu0 0.0
    %3056 = vmatpush1.msra.mxu0 %v3033
    %3057 = vmatprep.subr.mxu0 0.0
    %3058 = vmatpush1.msra.mxu0 %v3034
    %3059 = vmatprep.subr.mxu0 0.0
    %3060 = vmatpush1.msra.mxu0 %v3035
    %3061 = vmatprep.subr.mxu0 0.0
    %3062 = vmatpush1.msra.mxu0 0.0
    %3063 = vmatprep.subr.mxu0 0.0
    %3064 = vmatpush1.msra.mxu0 0.0
    %3065 = vmatprep.subr.mxu0 0.0
    %3066 = vmatpush1.msra.mxu0 0.0
    %3067 = vmatprep.subr.mxu0 0.0
    %3068 = vmatpush1.msra.mxu0 0.0
    %3069 = vmatprep.subr.mxu0 0.0
    %3070 = vmatpush1.msra.mxu0 0.0
    %3071 = vmatprep.subr.mxu0 0.0
    %3072 = vmatpush1.msra.mxu0 0.0
    %3073 = vmatprep.subr.mxu0 0.0
    %3074 = vmatpush1.msra.mxu0 0.0
    %3075 = vmatprep.subr.mxu0 0.0
    %3076 = vmatpush1.msra.mxu0 0.0
    %3077 = vmatprep.subr.mxu0 0.0
    %3078 = vmatpush1.msra.mxu0 0.0
    %3079 = vmatprep.subr.mxu0 0.0
    %3080 = vmatpush1.msra.mxu0 0.0
    %3081 = vmatprep.subr.mxu0 0.0
    %3082 = vmatpush1.msra.mxu0 0.0
    %3083 = vmatprep.subr.mxu0 0.0
    %3084 = vmatpush1.msra.mxu0 0.0
    %3085 = vmatprep.subr.mxu0 0.0
    %3086 = vmatpush1.msra.mxu0 0.0
    %3087 = vmatprep.subr.mxu0 0.0
    %3088 = vmatpush1.msra.mxu0 0.0
    %3089 = vmatprep.subr.mxu0 0.0
    %3090 = vmatpush1.msra.mxu0 0.0
    %3091 = vmatprep.subr.mxu0 0.0
    %3092 = vmatpush1.msra.mxu0 0.0
    %3093 = vmatprep.subr.mxu0 0.0
    %3094 = vmatpush1.msra.mxu0 0.0
    %3095 = vmatprep.subr.mxu0 0.0
    %3096 = vmatpush1.msra.mxu0 0.0
    %3097 = vmatprep.subr.mxu0 0.0
    %3098 = vmatpush1.msra.mxu0 0.0
    %3099 = vmatprep.subr.mxu0 0.0
    %3100 = vmatpush1.msra.mxu0 0.0
    %3101 = vmatprep.subr.mxu0 0.0
    %3102 = vmatpush1.msra.mxu0 0.0
    %3103 = vmatprep.subr.mxu0 0.0
    %3104 = vmatpush1.msra.mxu0 0.0
    %3105 = vmatprep.subr.mxu0 0.0
    %3106 = vmatpush1.msra.mxu0 0.0
    %3107 = vmatprep.subr.mxu0 0.0
    %3108 = vmatpush1.msra.mxu0 0.0
    %3109 = vmatprep.subr.mxu0 0.0
    %3110 = vmatpush1.msra.mxu0 0.0
    %3111 = vmatprep.subr.mxu0 0.0
    %3112 = vmatpush1.msra.mxu0 0.0
    %3113 = vmatprep.mubr.f32.mxu0 0.0
    %3114 = vmatmul.mubr.f32.gmra.mrb[0].mxu0 %v3044
    %v3115 = vpop.f32.mrb[0].mxu0
    %v3116 = vadd.f32 %v3041, %v3115
    %v3117 = vpop.f32.mrb[0].mxu0
    %3118 = vmatprep.mubr.f32.mxu0 0.0
    %3119 = vmatmul.mubr.f32.gmra.mrb[0].mxu0 %v3047
    %v3120 = vpop.f32.mrb[0].mxu0
    %v3121 = vadd.f32 %v3041, %v3120
    %v3122 = vpop.f32.mrb[0].mxu0
    %3123 = vdwg.mxu0
    %v3124 = vadd.f32 %v2870, %v3116
    %v3125 = vadd.f32 %v2871, %v3121
    %3126 = vst.msk [vmem:[#allocation2] sm:$0xff] %vm353, %v3124
    %3127 = vst.msk [vmem:[#allocation2 + $0x8] sm:$0x3] %vm357, %v3125
    %v3128 = vld [vmem:[#allocation2] sm:$0x1]
    %v3129 = vld [vmem:[%s57] sm:$0xff]
    %v3130 = vld [vmem:[%s57 + $0x8] sm:$0xff]
    %v3131 = vld [vmem:[%s57 + $0x10] sm:$0xff]
    %v3132 = vld [vmem:[%s57 + $0x18] sm:$0xff]
    %v3133 = vld [vmem:[%s57 + $0x20] sm:$0xff]
    %v3134 = vld [vmem:[%s57 + $0x28] sm:$0xff]
    %v3135 = vld [vmem:[%s57 + $0x30] sm:$0xff]
    %v3136 = vld [vmem:[%s57 + $0x38] sm:$0xff]
    %v3138 = vsel %vm353, %v3128, 0
    %3140 = vmatprep.subr.mxu0 0.0
    %3141 = vmatpush1.msra.mxu0 %v3129
    %3142 = vmatprep.subr.mxu0 0.0
    %3143 = vmatpush1.msra.mxu0 %v3130
    %3144 = vmatprep.subr.mxu0 0.0
    %3145 = vmatpush1.msra.mxu0 %v3131
    %3146 = vmatprep.subr.mxu0 0.0
    %3147 = vmatpush1.msra.mxu0 %v3132
    %3148 = vmatprep.subr.mxu0 0.0
    %3149 = vmatpush1.msra.mxu0 %v3133
    %3150 = vmatprep.subr.mxu0 0.0
    %3151 = vmatpush1.msra.mxu0 %v3134
    %3152 = vmatprep.subr.mxu0 0.0
    %3153 = vmatpush1.msra.mxu0 %v3135
    %3154 = vmatprep.subr.mxu0 0.0
    %3155 = vmatpush1.msra.mxu0 %v3136
    %3156 = vmatprep.subr.mxu0 0.0
    %3157 = vmatpush1.msra.mxu0 0.0
    %3158 = vmatprep.subr.mxu0 0.0
    %3159 = vmatpush1.msra.mxu0 0.0
    %3160 = vmatprep.subr.mxu0 0.0
    %3161 = vmatpush1.msra.mxu0 0.0
    %3162 = vmatprep.subr.mxu0 0.0
    %3163 = vmatpush1.msra.mxu0 0.0
    %3164 = vmatprep.subr.mxu0 0.0
    %3165 = vmatpush1.msra.mxu0 0.0
    %3166 = vmatprep.subr.mxu0 0.0
    %3167 = vmatpush1.msra.mxu0 0.0
    %3168 = vmatprep.subr.mxu0 0.0
    %3169 = vmatpush1.msra.mxu0 0.0
    %3170 = vmatprep.subr.mxu0 0.0
    %3171 = vmatpush1.msra.mxu0 0.0
    %3172 = vmatprep.subr.mxu0 0.0
    %3173 = vmatpush1.msra.mxu0 0.0
    %3174 = vmatprep.subr.mxu0 0.0
    %3175 = vmatpush1.msra.mxu0 0.0
    %3176 = vmatprep.subr.mxu0 0.0
    %3177 = vmatpush1.msra.mxu0 0.0
    %3178 = vmatprep.subr.mxu0 0.0
    %3179 = vmatpush1.msra.mxu0 0.0
    %3180 = vmatprep.subr.mxu0 0.0
    %3181 = vmatpush1.msra.mxu0 0.0
    %3182 = vmatprep.subr.mxu0 0.0
    %3183 = vmatpush1.msra.mxu0 0.0
    %3184 = vmatprep.subr.mxu0 0.0
    %3185 = vmatpush1.msra.mxu0 0.0
    %3186 = vmatprep.subr.mxu0 0.0
    %3187 = vmatpush1.msra.mxu0 0.0
    %3188 = vmatprep.subr.mxu0 0.0
    %3189 = vmatpush1.msra.mxu0 0.0
    %3190 = vmatprep.subr.mxu0 0.0
    %3191 = vmatpush1.msra.mxu0 0.0
    %3192 = vmatprep.subr.mxu0 0.0
    %3193 = vmatpush1.msra.mxu0 0.0
    %3194 = vmatprep.subr.mxu0 0.0
    %3195 = vmatpush1.msra.mxu0 0.0
    %3196 = vmatprep.subr.mxu0 0.0
    %3197 = vmatpush1.msra.mxu0 0.0
    %3198 = vmatprep.subr.mxu0 0.0
    %3199 = vmatpush1.msra.mxu0 0.0
    %3200 = vmatprep.subr.mxu0 0.0
    %3201 = vmatpush1.msra.mxu0 0.0
    %3202 = vmatprep.subr.mxu0 0.0
    %3203 = vmatpush1.msra.mxu0 0.0
    %3204 = vmatprep.mubr.f32.mxu0 0.0
    %3205 = vmatmul.mubr.f32.gmra.mrb[0].mxu0 %v3138
    %v3206 = vpop.f32.mrb[0].mxu0
    %v3207 = vadd.f32 0.0, %v3206
    %v3208 = vpop.f32.mrb[0].mxu0
    %3209 = vdwg.mxu0
    %3210 = vst [vmem:[#allocation4] sm:$0x1] %v3207
    %v3211 = vld [vmem:[#allocation2 + $0x5] sm:$0x1]
    %v3212 = vld [vmem:[%s57] sm:$0xff]
    %v3213 = vld [vmem:[%s57 + $0x8] sm:$0xff]
    %v3214 = vld [vmem:[%s57 + $0x10] sm:$0xff]
    %v3215 = vld [vmem:[%s57 + $0x18] sm:$0xff]
    %v3216 = vld [vmem:[%s57 + $0x20] sm:$0xff]
    %v3217 = vld [vmem:[%s57 + $0x28] sm:$0xff]
    %v3218 = vld [vmem:[%s57 + $0x30] sm:$0xff]
    %v3219 = vld [vmem:[%s57 + $0x38] sm:$0xff]
    %v3221 = vsel %vm353, %v3211, 0
    %3223 = vmatprep.subr.mxu0 0.0
    %3224 = vmatpush1.msra.mxu0 %v3212
    %3225 = vmatprep.subr.mxu0 0.0
    %3226 = vmatpush1.msra.mxu0 %v3213
    %3227 = vmatprep.subr.mxu0 0.0
    %3228 = vmatpush1.msra.mxu0 %v3214
    %3229 = vmatprep.subr.mxu0 0.0
    %3230 = vmatpush1.msra.mxu0 %v3215
    %3231 = vmatprep.subr.mxu0 0.0
    %3232 = vmatpush1.msra.mxu0 %v3216
    %3233 = vmatprep.subr.mxu0 0.0
    %3234 = vmatpush1.msra.mxu0 %v3217
    %3235 = vmatprep.subr.mxu0 0.0
    %3236 = vmatpush1.msra.mxu0 %v3218
    %3237 = vmatprep.subr.mxu0 0.0
    %3238 = vmatpush1.msra.mxu0 %v3219
    %3239 = vmatprep.subr.mxu0 0.0
    %3240 = vmatpush1.msra.mxu0 0.0
    %3241 = vmatprep.subr.mxu0 0.0
    %3242 = vmatpush1.msra.mxu0 0.0
    %3243 = vmatprep.subr.mxu0 0.0
    %3244 = vmatpush1.msra.mxu0 0.0
    %3245 = vmatprep.subr.mxu0 0.0
    %3246 = vmatpush1.msra.mxu0 0.0
    %3247 = vmatprep.subr.mxu0 0.0
    %3248 = vmatpush1.msra.mxu0 0.0
    %3249 = vmatprep.subr.mxu0 0.0
    %3250 = vmatpush1.msra.mxu0 0.0
    %3251 = vmatprep.subr.mxu0 0.0
    %3252 = vmatpush1.msra.mxu0 0.0
    %3253 = vmatprep.subr.mxu0 0.0
    %3254 = vmatpush1.msra.mxu0 0.0
    %3255 = vmatprep.subr.mxu0 0.0
    %3256 = vmatpush1.msra.mxu0 0.0
    %3257 = vmatprep.subr.mxu0 0.0
    %3258 = vmatpush1.msra.mxu0 0.0
    %3259 = vmatprep.subr.mxu0 0.0
    %3260 = vmatpush1.msra.mxu0 0.0
    %3261 = vmatprep.subr.mxu0 0.0
    %3262 = vmatpush1.msra.mxu0 0.0
    %3263 = vmatprep.subr.mxu0 0.0
    %3264 = vmatpush1.msra.mxu0 0.0
    %3265 = vmatprep.subr.mxu0 0.0
    %3266 = vmatpush1.msra.mxu0 0.0
    %3267 = vmatprep.subr.mxu0 0.0
    %3268 = vmatpush1.msra.mxu0 0.0
    %3269 = vmatprep.subr.mxu0 0.0
    %3270 = vmatpush1.msra.mxu0 0.0
    %3271 = vmatprep.subr.mxu0 0.0
    %3272 = vmatpush1.msra.mxu0 0.0
    %3273 = vmatprep.subr.mxu0 0.0
    %3274 = vmatpush1.msra.mxu0 0.0
    %3275 = vmatprep.subr.mxu0 0.0
    %3276 = vmatpush1.msra.mxu0 0.0
    %3277 = vmatprep.subr.mxu0 0.0
    %3278 = vmatpush1.msra.mxu0 0.0
    %3279 = vmatprep.subr.mxu0 0.0
    %3280 = vmatpush1.msra.mxu0 0.0
    %3281 = vmatprep.subr.mxu0 0.0
    %3282 = vmatpush1.msra.mxu0 0.0
    %3283 = vmatprep.subr.mxu0 0.0
    %3284 = vmatpush1.msra.mxu0 0.0
    %3285 = vmatprep.subr.mxu0 0.0
    %3286 = vmatpush1.msra.mxu0 0.0
    %3287 = vmatprep.mubr.f32.mxu0 0.0
    %3288 = vmatmul.mubr.f32.gmra.mrb[0].mxu0 %v3221
    %v3289 = vpop.f32.mrb[0].mxu0
    %v3290 = vadd.f32 0.0, %v3289
    %v3291 = vpop.f32.mrb[0].mxu0
    %3292 = vdwg.mxu0
    %3293 = vst [vmem:[#allocation4 + $0x1] sm:$0x1] %v3290
    // Predicated region
    $region118: #{vit_forward.1} parent=1 // pred_check
      _
    $region119: #{vit_forward.1} parent=1 // pred_check_branch
      %3295 = sbr.rel (0) target = $region121
    $region120: #{vit_forward.1} parent=1 // pred_region
      %s3297 = ssub.s32 32, 32
      %3298 = vsyncadd [#allocation5], %s3297
      %s3300 = sshll.u32 [#allocation4], 4
      %s3301 = int_to_ptr.vmem [resolvable:$true] %s3300
      %3303 = dma.vmem_to_hbm [thread:$0]  %s3301, 32, %s59, [#allocation5]
    $region121: #{vit_forward.1} parent=1 // pred_fallthru
      _
    // Predicated region
    $region122: #{vit_forward.1} parent=1 // pred_check
      _
    $region123: #{vit_forward.1} parent=1 // pred_check_branch
      %3305 = sbr.rel (0) target = $region125
    $region124: #{vit_forward.1} parent=1 // pred_region
      %3306 = dma.done [#allocation5], 32
    $region125: #{vit_forward.1} parent=1 // pred_fallthru
      _
    %3307 = vsyncpa [#allocation5], 1

</llo_original>
